<compile_context>
chip_gen: v5e
topology: v5e:2x2
jax: 0.10.0
libtpu: 0.0.40
codegen_flags: <defaults>
</compile_context>

<pallas_src>
import functools
import math

import jax
import jax.numpy as jnp
from jax.experimental import pallas as pl
from jax.experimental.pallas import tpu as pltpu


# ---------------------------------------------------------------------------
# Packed-weight row / slab indices (order fixed by prepare_params)
# ---------------------------------------------------------------------------
(ENC_BQ, ENC_BK, ENC_BV, ENC_BO,
 ENC_N1G, ENC_N1B, ENC_L2B, ENC_N2G, ENC_N2B,
 DSA_BQ, DSA_BK, DSA_BV, DSA_BO,
 DEC_N1G, DEC_N1B,
 DCA_BQ, DCA_BK, DCA_BV, DCA_BO,
 DEC_N2G, DEC_N2B, DEC_L2B, DEC_N3G, DEC_N3B,
 FIN_G, FIN_B, QW_ROW) = range(27)
_NUM_VEC_E = 27

# projection-stack offsets: [enc self | dec self | dec cross], each [WqT*s, WkT, WvT, WoT]
_ENC_P, _DSA_P, _DCA_P = 0, 4, 8


# ---------------------------------------------------------------------------
# Fused transformer kernel (one invocation, whole batch)
# ---------------------------------------------------------------------------
def _transdqn_kernel(feat_ref, pos_ref, query_ref, proj_ref, ffn1_ref, ffn2_ref,
                     vece_ref, vecf_ref, qb_ref, q_ref, *, nheads, eps, batch):
    f32 = jnp.float32
    pos = pos_ref[...]          # (S, E)
    query = query_ref[...]      # (A, E) action queries (act_list is identity)
    vece = vece_ref[...]        # (27, E) packed E-length vectors (biases / LN params)
    vecf = vecf_ref[...]        # (2, dff) FFN first-layer biases

    def row(i):                 # (1, E) slab of the packed vector table
        return vece[i:i + 1, :]

    def layernorm(x, gi, bi):
        mu = jnp.mean(x, axis=-1, keepdims=True)
        var = jnp.mean(jnp.square(x - mu), axis=-1, keepdims=True)
        return (x - mu) * jax.lax.rsqrt(var + eps) * row(gi) + row(bi)

    def mha(x_q, x_kv, p0, b0):
        # Full-width projections (3 MXU matmuls); 1/sqrt(dh) pre-folded into Wq/bq.
        q = jnp.dot(x_q, proj_ref[p0], preferred_element_type=f32) + row(b0)
        k = jnp.dot(x_kv, proj_ref[p0 + 1], preferred_element_type=f32) + row(b0 + 1)
        v = jnp.dot(x_kv, proj_ref[p0 + 2], preferred_element_type=f32) + row(b0 + 2)
        kt = jnp.transpose(k)                       # ONE transpose per MHA
        dh = q.shape[-1] // nheads
        heads = []
        for h in range(nheads):
            lo, hi = h * dh, (h + 1) * dh
            s = jnp.dot(q[:, lo:hi], kt[lo:hi, :], preferred_element_type=f32)  # (Lq, Lk)
            p = jnp.exp(s - jnp.max(s, axis=-1, keepdims=True))
            p = p * pl.reciprocal(jnp.sum(p, axis=-1, keepdims=True), approx=True)
            heads.append(jnp.dot(p, v[:, lo:hi], preferred_element_type=f32))   # (Lq, dh)
        cat = jnp.concatenate(heads, axis=-1)       # (Lq, E)
        # single full-width output projection on concatenated heads
        return jnp.dot(cat, proj_ref[p0 + 3], preferred_element_type=f32) + row(b0 + 3)

    def ffn(x, l, lin2_b_row):
        hid = jnp.maximum(
            jnp.dot(x, ffn1_ref[l], preferred_element_type=f32) + vecf[l:l + 1, :], 0.0)
        return jnp.dot(hid, ffn2_ref[l], preferred_element_type=f32) + row(lin2_b_row)

    q_rows = []
    for b in range(batch):      # B is tiny: static unroll (no grid / launch overhead)
        src = pos + 0.1 * feat_ref[b]                       # (S, E)

        # ----- encoder layer (post-norm) -----
        a1 = mha(src, src, _ENC_P, ENC_BQ)
        x2 = layernorm(src + a1, ENC_N1G, ENC_N1B)
        x3 = ffn(x2, 0, ENC_L2B)
        mem = layernorm(x2 + x3, ENC_N2G, ENC_N2B)          # memory stays on-core

        # ----- decoder layer (post-norm) + TransformerDecoder final norm -----
        tgt = query                                         # (A, E)
        y1 = mha(tgt, tgt, _DSA_P, DSA_BQ)
        y2 = layernorm(tgt + y1, DEC_N1G, DEC_N1B)
        y3 = mha(y2, mem, _DCA_P, DCA_BQ)
        y4 = layernorm(y2 + y3, DEC_N2G, DEC_N2B)
        y5 = ffn(y4, 1, DEC_L2B)
        out = layernorm(y4 + y5, DEC_N3G, DEC_N3B)
        out = layernorm(out, FIN_G, FIN_B)                  # decoder.norm

        # Q head: qw (1,E) contracted with out (A,E) -> lane-dense (1, A) row
        q_rows.append(
            jax.lax.dot_general(row(QW_ROW), out, (((1,), (1,)), ((), ())),
                                preferred_element_type=f32) + qb_ref[...])

    q_ref[...] = jnp.concatenate(q_rows, axis=0)            # single (B, A) store


def pallas_transformer_qhead(feat, pos, query, packed, nheads, eps=1e-5):
    """feat: (B, S, E) conv features; returns Q-values (B, A)."""
    B, S, E = feat.shape
    A = query.shape[0]
    args = (feat, pos, query, packed['proj'], packed['ffn1'], packed['ffn2'],
            packed['vece'], packed['vecf'], packed['qb'])

    def full_spec(a):
        nd = a.ndim
        return pl.BlockSpec(a.shape, lambda i, _nd=nd: (0,) * _nd)

    return pl.pallas_call(
        functools.partial(_transdqn_kernel, nheads=nheads, eps=eps, batch=B),
        out_shape=jax.ShapeDtypeStruct((B, A), jnp.float32),
        grid=(1,),
        in_specs=[full_spec(a) for a in args],
        out_specs=pl.BlockSpec((B, A), lambda i: (0, 0)),
        compiler_params=pltpu.CompilerParams(dimension_semantics=("arbitrary",)),
    )(*args)


# ---------------------------------------------------------------------------
# Conv backbone: XLA native conv + fused bias/ReLU (perf review option (a))
# ---------------------------------------------------------------------------
def _conv_relu(x, w, b, stride, dn):
    y = jax.lax.conv_general_dilated(x, w, (stride, stride), 'VALID',
                                     dimension_numbers=dn)
    return jnp.maximum(y + b.reshape(1, 1, 1, -1), 0.0)


# ---------------------------------------------------------------------------
# Full TransDQN forward
# ---------------------------------------------------------------------------
def trans_dqn_forward(kp, x, nheads=4):
    # TODO(synk): conv stages left to XLA's native conv per perf review; a hand
    # written Pallas conv would need strided-DMA im2col and is not worth it here.
    h = _conv_relu(x, kp['conv1_w'], kp['conv1_b'], 4, ('NCHW', 'OIHW', 'NHWC'))
    h = _conv_relu(h, kp['conv2_w'], kp['conv2_b'], 2, ('NHWC', 'OIHW', 'NHWC'))
    h = _conv_relu(h, kp['conv3_w'], kp['conv3_b'], 1, ('NHWC', 'OIHW', 'NHWC'))
    B, hh, ww, E = h.shape
    S = hh * ww
    half = E // 2

    # DETR-style positional embedding (tiny XLA glue; the add itself is in-kernel)
    pos = jnp.concatenate([
        jnp.broadcast_to(kp['col_embed'][None, :ww, :], (hh, ww, half)),
        jnp.broadcast_to(kp['row_embed'][:hh, None, :], (hh, ww, half)),
    ], axis=-1).reshape(S, E)

    feat = h.reshape(B, S, E)
    qs = pallas_transformer_qhead(feat, pos, kp['query'], kp['packed'], nheads)
    # TODO(synk): pfrl DiscreteActionValueHead only wraps Q-values; raw Q-values returned.
    return qs


# ---------------------------------------------------------------------------
# One-time parameter preparation (transposes / packing, off the hot path)
# ---------------------------------------------------------------------------
def prepare_params(params, nheads):
    E = params['dec_norm_g'].shape[0]
    dh = E // nheads
    scale = 1.0 / math.sqrt(dh)

    def attn_mats(p):   # (out,in) -> (in,out); softmax scale folded into Wq
        return [jnp.transpose(p['wq']) * scale, jnp.transpose(p['wk']),
                jnp.transpose(p['wv']), jnp.transpose(p['wo'])]

    def attn_vecs(p):
        return [p['bq'] * scale, p['bk'], p['bv'], p['bo']]

    e, d = params['enc'], params['dec']
    proj = jnp.stack(attn_mats(e['self_attn']) + attn_mats(d['self_attn'])
                     + attn_mats(d['cross_attn']), axis=0)              # (12, E, E)
    ffn1 = jnp.stack([jnp.transpose(e['lin1_w']), jnp.transpose(d['lin1_w'])])  # (2, E, dff)
    ffn2 = jnp.stack([jnp.transpose(e['lin2_w']), jnp.transpose(d['lin2_w'])])  # (2, dff, E)

    vece_rows = (attn_vecs(e['self_attn'])
                 + [e['norm1_g'], e['norm1_b'], e['lin2_b'], e['norm2_g'], e['norm2_b']]
                 + attn_vecs(d['self_attn'])
                 + [d['norm1_g'], d['norm1_b']]
                 + attn_vecs(d['cross_attn'])
                 + [d['norm2_g'], d['norm2_b'], d['lin2_b'], d['norm3_g'], d['norm3_b'],
                    params['dec_norm_g'], params['dec_norm_b'],
                    params['q_w'].reshape(E)])
    assert len(vece_rows) == _NUM_VEC_E
    vece = jnp.stack(vece_rows, axis=0)                                  # (27, E)
    vecf = jnp.stack([e['lin1_b'], d['lin1_b']], axis=0)                 # (2, dff)
    qb = params['q_b'].reshape(1, 1)

    return dict(
        conv1_w=params['conv1_w'], conv1_b=params['conv1_b'],
        conv2_w=params['conv2_w'], conv2_b=params['conv2_b'],
        conv3_w=params['conv3_w'], conv3_b=params['conv3_b'],
        # act_list is the identity, so the action encoder reduces to W^T + b
        query=jnp.transpose(params['ae_w']) + params['ae_b'][None, :],   # (A, E)
        row_embed=params['row_embed'], col_embed=params['col_embed'],
        packed=dict(proj=proj, ffn1=ffn1, ffn2=ffn2, vece=vece, vecf=vecf, qb=qb),
    )


# ---------------------------------------------------------------------------
# Deterministic synthetic parameter init (PyTorch layouts; no checkpoint)
# ---------------------------------------------------------------------------
def _xavier(key, shape):
    if len(shape) == 4:
        rf = shape[2] * shape[3]
        fan_in, fan_out = shape[1] * rf, shape[0] * rf
    else:
        fan_out, fan_in = shape
    bound = math.sqrt(6.0 / (fan_in + fan_out))
    return jax.random.uniform(key, shape, jnp.float32, -bound, bound)


def init_params(key, n_actions, head_dim, dff=64):
    E = n_actions * head_dim
    keys = iter(jax.random.split(key, 128))
    nxt = lambda: next(keys)

    def attn():
        return dict(wq=_xavier(nxt(), (E, E)), bq=jnp.zeros((E,), jnp.float32),
                    wk=_xavier(nxt(), (E, E)), bk=jnp.zeros((E,), jnp.float32),
                    wv=_xavier(nxt(), (E, E)), bv=jnp.zeros((E,), jnp.float32),
                    wo=_xavier(nxt(), (E, E)), bo=jnp.zeros((E,), jnp.float32))

    def layer(n_norms, cross):
        d = dict(self_attn=attn(),
                 lin1_w=_xavier(nxt(), (dff, E)), lin1_b=jnp.zeros((dff,), jnp.float32),
                 lin2_w=_xavier(nxt(), (E, dff)), lin2_b=jnp.zeros((E,), jnp.float32))
        if cross:
            d['cross_attn'] = attn()
        for i in range(1, n_norms + 1):
            d[f'norm{i}_g'] = jnp.ones((E,), jnp.float32)
            d[f'norm{i}_b'] = jnp.zeros((E,), jnp.float32)
        return d

    return dict(
        conv1_w=_xavier(nxt(), (32, 3, 8, 8)),
        conv1_b=0.01 * jax.random.normal(nxt(), (32,), jnp.float32),
        conv2_w=_xavier(nxt(), (64, 32, 4, 4)),
        conv2_b=0.01 * jax.random.normal(nxt(), (64,), jnp.float32),
        conv3_w=_xavier(nxt(), (E, 64, 3, 3)),
        conv3_b=0.01 * jax.random.normal(nxt(), (E,), jnp.float32),
        enc=layer(2, False),
        dec=layer(3, True),
        dec_norm_g=jnp.ones((E,), jnp.float32),
        dec_norm_b=jnp.zeros((E,), jnp.float32),
        ae_w=_xavier(nxt(), (E, n_actions)), ae_b=jnp.zeros((E,), jnp.float32),
        row_embed=_xavier(nxt(), (12, E // 2)),
        col_embed=_xavier(nxt(), (12, E // 2)),
        q_w=_xavier(nxt(), (1, E)), q_b=jnp.zeros((1,), jnp.float32),
    )


if __name__ == "__main__":
    n_actions, head_dim, nheads = 4, 8, 4        # hidden_dim = 32
    batch, spatial = 2, 64                       # conv: 64 -> 15 -> 6 -> 4 (h=w=4 <= 12)

    key = jax.random.PRNGKey(0)
    pkey, xkey = jax.random.split(key)
    params = init_params(pkey, n_actions, head_dim)
    kparams = prepare_params(params, nheads)     # one-time packing / layout prep
    x = jax.random.uniform(xkey, (batch, 3, spatial, spatial), jnp.float32)

    fwd = jax.jit(functools.partial(trans_dqn_forward, nheads=nheads))
    qs = jax.block_until_ready(fwd(kparams, x))
    assert qs.shape == (batch, n_actions)
    assert jnp.all(jnp.isfinite(qs))
    print("KERNEL_OK")
</pallas_src>

<mosaic_0001>
module attributes {stable_mosaic.version = 11 : i64} {
  func.func @_transdqn_kernel(%arg0: i32, %arg1: memref<2x16x32xf32, #tpu.memory_space<vmem>>, %arg2: memref<16x32xf32, #tpu.memory_space<vmem>>, %arg3: memref<4x32xf32, #tpu.memory_space<vmem>>, %arg4: memref<12x32x32xf32, #tpu.memory_space<vmem>>, %arg5: memref<2x32x64xf32, #tpu.memory_space<vmem>>, %arg6: memref<2x64x32xf32, #tpu.memory_space<vmem>>, %arg7: memref<27x32xf32, #tpu.memory_space<vmem>>, %arg8: memref<2x64xf32, #tpu.memory_space<vmem>>, %arg9: memref<1x1xf32, #tpu.memory_space<vmem>>, %arg10: memref<2x4xf32, #tpu.memory_space<vmem>>) attributes {dimension_semantics = [#tpu.dimension_semantics<arbitrary>], iteration_bounds = array<i64: 1>, scalar_prefetch = 0 : i64, scratch_operands = 0 : i64, tpu.core_type = #tpu.core_type<tc>, window_params = [{pipeline_mode = #tpu.pipeline_mode<synchronous>, transform_indices = @transform_0, window_bounds = array<i64: 2, 16, 32>}, {pipeline_mode = #tpu.pipeline_mode<synchronous>, transform_indices = @transform_1, window_bounds = array<i64: 16, 32>}, {pipeline_mode = #tpu.pipeline_mode<synchronous>, transform_indices = @transform_2, window_bounds = array<i64: 4, 32>}, {pipeline_mode = #tpu.pipeline_mode<synchronous>, transform_indices = @transform_3, window_bounds = array<i64: 12, 32, 32>}, {pipeline_mode = #tpu.pipeline_mode<synchronous>, transform_indices = @transform_4, window_bounds = array<i64: 2, 32, 64>}, {pipeline_mode = #tpu.pipeline_mode<synchronous>, transform_indices = @transform_5, window_bounds = array<i64: 2, 64, 32>}, {pipeline_mode = #tpu.pipeline_mode<synchronous>, transform_indices = @transform_6, window_bounds = array<i64: 27, 32>}, {pipeline_mode = #tpu.pipeline_mode<synchronous>, transform_indices = @transform_7, window_bounds = array<i64: 2, 64>}, {pipeline_mode = #tpu.pipeline_mode<synchronous>, transform_indices = @transform_8, window_bounds = array<i64: 1, 1>}, {pipeline_mode = #tpu.pipeline_mode<synchronous>, transform_indices = @transform_9, window_bounds = array<i64: 2, 4>}]} {
    %c0 = arith.constant 0 : index
    %c0_0 = arith.constant 0 : index
    %0 = vector.load %arg2[%c0, %c0_0] : memref<16x32xf32, #tpu.memory_space<vmem>>, vector<16x32xf32>
    %c0_1 = arith.constant 0 : index
    %c0_2 = arith.constant 0 : index
    %1 = vector.load %arg3[%c0_1, %c0_2] : memref<4x32xf32, #tpu.memory_space<vmem>>, vector<4x32xf32>
    %c0_3 = arith.constant 0 : index
    %c0_4 = arith.constant 0 : index
    %2 = vector.load %arg7[%c0_3, %c0_4] : memref<27x32xf32, #tpu.memory_space<vmem>>, vector<27x32xf32>
    %c0_5 = arith.constant 0 : index
    %c0_6 = arith.constant 0 : index
    %3 = vector.load %arg8[%c0_5, %c0_6] : memref<2x64xf32, #tpu.memory_space<vmem>>, vector<2x64xf32>
    %c0_7 = arith.constant 0 : index
    %c0_8 = arith.constant 0 : index
    %c0_9 = arith.constant 0 : index
    %4 = vector.load %arg1[%c0_7, %c0_8, %c0_9] : memref<2x16x32xf32, #tpu.memory_space<vmem>>, vector<1x16x32xf32>
    %5 = vector.shape_cast %4 : vector<1x16x32xf32> to vector<16x32xf32>
    %cst = arith.constant 1.000000e-01 : f32
    %6 = vector.broadcast %cst : f32 to vector<16x32xf32>
    %7 = arith.mulf %6, %5 : vector<16x32xf32>
    %8 = arith.addf %0, %7 : vector<16x32xf32>
    %c0_10 = arith.constant 0 : index
    %c0_11 = arith.constant 0 : index
    %c0_12 = arith.constant 0 : index
    %9 = vector.load %arg4[%c0_10, %c0_11, %c0_12] : memref<12x32x32xf32, #tpu.memory_space<vmem>>, vector<1x32x32xf32>
    %10 = vector.shape_cast %9 : vector<1x32x32xf32> to vector<32x32xf32>
    %cst_13 = arith.constant dense<0.000000e+00> : vector<16x32xf32>
    %11 = tpu.matmul %8, %10, %cst_13 {dimension_numbers = #tpu.dot_dimension_numbers<[1], [0], [0], [1], [0, 0, 1, 1], [], []>} : vector<16x32xf32>, vector<32x32xf32>, vector<16x32xf32> -> vector<16x32xf32>
    %12 = vector.extract_strided_slice %2 {offsets = [0, 0], sizes = [1, 32], strides = [1, 1]} : vector<27x32xf32> to vector<1x32xf32>
    %13 = vector.broadcast %12 : vector<1x32xf32> to vector<16x32xf32>
    %14 = arith.addf %11, %13 : vector<16x32xf32>
    %c1 = arith.constant 1 : index
    %c0_14 = arith.constant 0 : index
    %c0_15 = arith.constant 0 : index
    %15 = vector.load %arg4[%c1, %c0_14, %c0_15] : memref<12x32x32xf32, #tpu.memory_space<vmem>>, vector<1x32x32xf32>
    %16 = vector.shape_cast %15 : vector<1x32x32xf32> to vector<32x32xf32>
    %cst_16 = arith.constant dense<0.000000e+00> : vector<16x32xf32>
    %17 = tpu.matmul %8, %16, %cst_16 {dimension_numbers = #tpu.dot_dimension_numbers<[1], [0], [0], [1], [0, 0, 1, 1], [], []>} : vector<16x32xf32>, vector<32x32xf32>, vector<16x32xf32> -> vector<16x32xf32>
    %18 = vector.extract_strided_slice %2 {offsets = [1, 0], sizes = [1, 32], strides = [1, 1]} : vector<27x32xf32> to vector<1x32xf32>
    %19 = vector.broadcast %18 : vector<1x32xf32> to vector<16x32xf32>
    %20 = arith.addf %17, %19 : vector<16x32xf32>
    %c2 = arith.constant 2 : index
    %c0_17 = arith.constant 0 : index
    %c0_18 = arith.constant 0 : index
    %21 = vector.load %arg4[%c2, %c0_17, %c0_18] : memref<12x32x32xf32, #tpu.memory_space<vmem>>, vector<1x32x32xf32>
    %22 = vector.shape_cast %21 : vector<1x32x32xf32> to vector<32x32xf32>
    %cst_19 = arith.constant dense<0.000000e+00> : vector<16x32xf32>
    %23 = tpu.matmul %8, %22, %cst_19 {dimension_numbers = #tpu.dot_dimension_numbers<[1], [0], [0], [1], [0, 0, 1, 1], [], []>} : vector<16x32xf32>, vector<32x32xf32>, vector<16x32xf32> -> vector<16x32xf32>
    %24 = vector.extract_strided_slice %2 {offsets = [2, 0], sizes = [1, 32], strides = [1, 1]} : vector<27x32xf32> to vector<1x32xf32>
    %25 = vector.broadcast %24 : vector<1x32xf32> to vector<16x32xf32>
    %26 = arith.addf %23, %25 : vector<16x32xf32>
    %27 = tpu.transpose %20, [1, 0] : vector<16x32xf32> -> vector<32x16xf32>
    %28 = vector.extract_strided_slice %14 {offsets = [0, 0], sizes = [16, 8], strides = [1, 1]} : vector<16x32xf32> to vector<16x8xf32>
    %29 = vector.extract_strided_slice %27 {offsets = [0, 0], sizes = [8, 16], strides = [1, 1]} : vector<32x16xf32> to vector<8x16xf32>
    %cst_20 = arith.constant dense<0.000000e+00> : vector<16x16xf32>
    %30 = tpu.matmul %28, %29, %cst_20 {dimension_numbers = #tpu.dot_dimension_numbers<[1], [0], [0], [1], [0, 0, 1, 1], [], []>} : vector<16x8xf32>, vector<8x16xf32>, vector<16x16xf32> -> vector<16x16xf32>
    %cst_21 = arith.constant dense<0xFF800000> : vector<16xf32>
    %31 = vector.multi_reduction <maximumf>, %30, %cst_21 [1] : vector<16x16xf32> to vector<16xf32>
    %32 = vector.shape_cast %31 : vector<16xf32> to vector<16x1xf32>
    %33 = vector.broadcast %32 : vector<16x1xf32> to vector<16x16xf32>
    %34 = arith.subf %30, %33 : vector<16x16xf32>
    %35 = math.exp %34 : vector<16x16xf32>
    %cst_22 = arith.constant dense<0.000000e+00> : vector<16xf32>
    %36 = vector.multi_reduction <add>, %35, %cst_22 [1] : vector<16x16xf32> to vector<16xf32>
    %37 = vector.shape_cast %36 : vector<16xf32> to vector<16x1xf32>
    %38 = tpu.reciprocal %37 {approx = true} : vector<16x1xf32> -> vector<16x1xf32>
    %39 = vector.broadcast %38 : vector<16x1xf32> to vector<16x16xf32>
    %40 = arith.mulf %35, %39 : vector<16x16xf32>
    %41 = vector.extract_strided_slice %26 {offsets = [0, 0], sizes = [16, 8], strides = [1, 1]} : vector<16x32xf32> to vector<16x8xf32>
    %cst_23 = arith.constant dense<0.000000e+00> : vector<16x8xf32>
    %42 = tpu.matmul %40, %41, %cst_23 {dimension_numbers = #tpu.dot_dimension_numbers<[1], [0], [0], [1], [0, 0, 1, 1], [], []>} : vector<16x16xf32>, vector<16x8xf32>, vector<16x8xf32> -> vector<16x8xf32>
    %43 = vector.extract_strided_slice %14 {offsets = [0, 8], sizes = [16, 8], strides = [1, 1]} : vector<16x32xf32> to vector<16x8xf32>
    %44 = vector.extract_strided_slice %27 {offsets = [8, 0], sizes = [8, 16], strides = [1, 1]} : vector<32x16xf32> to vector<8x16xf32>
    %cst_24 = arith.constant dense<0.000000e+00> : vector<16x16xf32>
    %45 = tpu.matmul %43, %44, %cst_24 {dimension_numbers = #tpu.dot_dimension_numbers<[1], [0], [0], [1], [0, 0, 1, 1], [], []>} : vector<16x8xf32>, vector<8x16xf32>, vector<16x16xf32> -> vector<16x16xf32>
    %cst_25 = arith.constant dense<0xFF800000> : vector<16xf32>
    %46 = vector.multi_reduction <maximumf>, %45, %cst_25 [1] : vector<16x16xf32> to vector<16xf32>
    %47 = vector.shape_cast %46 : vector<16xf32> to vector<16x1xf32>
    %48 = vector.broadcast %47 : vector<16x1xf32> to vector<16x16xf32>
    %49 = arith.subf %45, %48 : vector<16x16xf32>
    %50 = math.exp %49 : vector<16x16xf32>
    %cst_26 = arith.constant dense<0.000000e+00> : vector<16xf32>
    %51 = vector.multi_reduction <add>, %50, %cst_26 [1] : vector<16x16xf32> to vector<16xf32>
    %52 = vector.shape_cast %51 : vector<16xf32> to vector<16x1xf32>
    %53 = tpu.reciprocal %52 {approx = true} : vector<16x1xf32> -> vector<16x1xf32>
    %54 = vector.broadcast %53 : vector<16x1xf32> to vector<16x16xf32>
    %55 = arith.mulf %50, %54 : vector<16x16xf32>
    %56 = vector.extract_strided_slice %26 {offsets = [0, 8], sizes = [16, 8], strides = [1, 1]} : vector<16x32xf32> to vector<16x8xf32>
    %cst_27 = arith.constant dense<0.000000e+00> : vector<16x8xf32>
    %57 = tpu.matmul %55, %56, %cst_27 {dimension_numbers = #tpu.dot_dimension_numbers<[1], [0], [0], [1], [0, 0, 1, 1], [], []>} : vector<16x16xf32>, vector<16x8xf32>, vector<16x8xf32> -> vector<16x8xf32>
    %58 = vector.extract_strided_slice %14 {offsets = [0, 16], sizes = [16, 8], strides = [1, 1]} : vector<16x32xf32> to vector<16x8xf32>
    %59 = vector.extract_strided_slice %27 {offsets = [16, 0], sizes = [8, 16], strides = [1, 1]} : vector<32x16xf32> to vector<8x16xf32>
    %cst_28 = arith.constant dense<0.000000e+00> : vector<16x16xf32>
    %60 = tpu.matmul %58, %59, %cst_28 {dimension_numbers = #tpu.dot_dimension_numbers<[1], [0], [0], [1], [0, 0, 1, 1], [], []>} : vector<16x8xf32>, vector<8x16xf32>, vector<16x16xf32> -> vector<16x16xf32>
    %cst_29 = arith.constant dense<0xFF800000> : vector<16xf32>
    %61 = vector.multi_reduction <maximumf>, %60, %cst_29 [1] : vector<16x16xf32> to vector<16xf32>
    %62 = vector.shape_cast %61 : vector<16xf32> to vector<16x1xf32>
    %63 = vector.broadcast %62 : vector<16x1xf32> to vector<16x16xf32>
    %64 = arith.subf %60, %63 : vector<16x16xf32>
    %65 = math.exp %64 : vector<16x16xf32>
    %cst_30 = arith.constant dense<0.000000e+00> : vector<16xf32>
    %66 = vector.multi_reduction <add>, %65, %cst_30 [1] : vector<16x16xf32> to vector<16xf32>
    %67 = vector.shape_cast %66 : vector<16xf32> to vector<16x1xf32>
    %68 = tpu.reciprocal %67 {approx = true} : vector<16x1xf32> -> vector<16x1xf32>
    %69 = vector.broadcast %68 : vector<16x1xf32> to vector<16x16xf32>
    %70 = arith.mulf %65, %69 : vector<16x16xf32>
    %71 = vector.extract_strided_slice %26 {offsets = [0, 16], sizes = [16, 8], strides = [1, 1]} : vector<16x32xf32> to vector<16x8xf32>
    %cst_31 = arith.constant dense<0.000000e+00> : vector<16x8xf32>
    %72 = tpu.matmul %70, %71, %cst_31 {dimension_numbers = #tpu.dot_dimension_numbers<[1], [0], [0], [1], [0, 0, 1, 1], [], []>} : vector<16x16xf32>, vector<16x8xf32>, vector<16x8xf32> -> vector<16x8xf32>
    %73 = vector.extract_strided_slice %14 {offsets = [0, 24], sizes = [16, 8], strides = [1, 1]} : vector<16x32xf32> to vector<16x8xf32>
    %74 = vector.extract_strided_slice %27 {offsets = [24, 0], sizes = [8, 16], strides = [1, 1]} : vector<32x16xf32> to vector<8x16xf32>
    %cst_32 = arith.constant dense<0.000000e+00> : vector<16x16xf32>
    %75 = tpu.matmul %73, %74, %cst_32 {dimension_numbers = #tpu.dot_dimension_numbers<[1], [0], [0], [1], [0, 0, 1, 1], [], []>} : vector<16x8xf32>, vector<8x16xf32>, vector<16x16xf32> -> vector<16x16xf32>
    %cst_33 = arith.constant dense<0xFF800000> : vector<16xf32>
    %76 = vector.multi_reduction <maximumf>, %75, %cst_33 [1] : vector<16x16xf32> to vector<16xf32>
    %77 = vector.shape_cast %76 : vector<16xf32> to vector<16x1xf32>
    %78 = vector.broadcast %77 : vector<16x1xf32> to vector<16x16xf32>
    %79 = arith.subf %75, %78 : vector<16x16xf32>
    %80 = math.exp %79 : vector<16x16xf32>
    %cst_34 = arith.constant dense<0.000000e+00> : vector<16xf32>
    %81 = vector.multi_reduction <add>, %80, %cst_34 [1] : vector<16x16xf32> to vector<16xf32>
    %82 = vector.shape_cast %81 : vector<16xf32> to vector<16x1xf32>
    %83 = tpu.reciprocal %82 {approx = true} : vector<16x1xf32> -> vector<16x1xf32>
    %84 = vector.broadcast %83 : vector<16x1xf32> to vector<16x16xf32>
    %85 = arith.mulf %80, %84 : vector<16x16xf32>
    %86 = vector.extract_strided_slice %26 {offsets = [0, 24], sizes = [16, 8], strides = [1, 1]} : vector<16x32xf32> to vector<16x8xf32>
    %cst_35 = arith.constant dense<0.000000e+00> : vector<16x8xf32>
    %87 = tpu.matmul %85, %86, %cst_35 {dimension_numbers = #tpu.dot_dimension_numbers<[1], [0], [0], [1], [0, 0, 1, 1], [], []>} : vector<16x16xf32>, vector<16x8xf32>, vector<16x8xf32> -> vector<16x8xf32>
    %88 = tpu.concatenate %42, %57, %72, %87 in 1 : vector<16x8xf32>, vector<16x8xf32>, vector<16x8xf32>, vector<16x8xf32> -> vector<16x32xf32>
    %c3 = arith.constant 3 : index
    %c0_36 = arith.constant 0 : index
    %c0_37 = arith.constant 0 : index
    %89 = vector.load %arg4[%c3, %c0_36, %c0_37] : memref<12x32x32xf32, #tpu.memory_space<vmem>>, vector<1x32x32xf32>
    %90 = vector.shape_cast %89 : vector<1x32x32xf32> to vector<32x32xf32>
    %cst_38 = arith.constant dense<0.000000e+00> : vector<16x32xf32>
    %91 = tpu.matmul %88, %90, %cst_38 {dimension_numbers = #tpu.dot_dimension_numbers<[1], [0], [0], [1], [0, 0, 1, 1], [], []>} : vector<16x32xf32>, vector<32x32xf32>, vector<16x32xf32> -> vector<16x32xf32>
    %92 = vector.extract_strided_slice %2 {offsets = [3, 0], sizes = [1, 32], strides = [1, 1]} : vector<27x32xf32> to vector<1x32xf32>
    %93 = vector.broadcast %92 : vector<1x32xf32> to vector<16x32xf32>
    %94 = arith.addf %91, %93 : vector<16x32xf32>
    %95 = arith.addf %8, %94 : vector<16x32xf32>
    %cst_39 = arith.constant dense<0.000000e+00> : vector<16xf32>
    %96 = vector.multi_reduction <add>, %95, %cst_39 [1] : vector<16x32xf32> to vector<16xf32>
    %97 = vector.shape_cast %96 : vector<16xf32> to vector<16x1xf32>
    %cst_40 = arith.constant 3.200000e+01 : f32
    %98 = vector.broadcast %cst_40 : f32 to vector<16x1xf32>
    %99 = arith.divf %97, %98 : vector<16x1xf32>
    %100 = vector.broadcast %99 : vector<16x1xf32> to vector<16x32xf32>
    %101 = arith.subf %95, %100 : vector<16x32xf32>
    %102 = arith.mulf %101, %101 : vector<16x32xf32>
    %cst_41 = arith.constant dense<0.000000e+00> : vector<16xf32>
    %103 = vector.multi_reduction <add>, %102, %cst_41 [1] : vector<16x32xf32> to vector<16xf32>
    %104 = vector.shape_cast %103 : vector<16xf32> to vector<16x1xf32>
    %cst_42 = arith.constant 3.200000e+01 : f32
    %105 = vector.broadcast %cst_42 : f32 to vector<16x1xf32>
    %106 = arith.divf %104, %105 : vector<16x1xf32>
    %107 = vector.broadcast %99 : vector<16x1xf32> to vector<16x32xf32>
    %108 = arith.subf %95, %107 : vector<16x32xf32>
    %cst_43 = arith.constant 9.99999974E-6 : f32
    %109 = vector.broadcast %cst_43 : f32 to vector<16x1xf32>
    %110 = arith.addf %106, %109 : vector<16x1xf32>
    %111 = math.rsqrt %110 : vector<16x1xf32>
    %112 = vector.broadcast %111 : vector<16x1xf32> to vector<16x32xf32>
    %113 = arith.mulf %108, %112 : vector<16x32xf32>
    %114 = vector.extract_strided_slice %2 {offsets = [4, 0], sizes = [1, 32], strides = [1, 1]} : vector<27x32xf32> to vector<1x32xf32>
    %115 = vector.broadcast %114 : vector<1x32xf32> to vector<16x32xf32>
    %116 = arith.mulf %113, %115 : vector<16x32xf32>
    %117 = vector.extract_strided_slice %2 {offsets = [5, 0], sizes = [1, 32], strides = [1, 1]} : vector<27x32xf32> to vector<1x32xf32>
    %118 = vector.broadcast %117 : vector<1x32xf32> to vector<16x32xf32>
    %119 = arith.addf %116, %118 : vector<16x32xf32>
    %c0_44 = arith.constant 0 : index
    %c0_45 = arith.constant 0 : index
    %c0_46 = arith.constant 0 : index
    %120 = vector.load %arg5[%c0_44, %c0_45, %c0_46] : memref<2x32x64xf32, #tpu.memory_space<vmem>>, vector<1x32x64xf32>
    %121 = vector.shape_cast %120 : vector<1x32x64xf32> to vector<32x64xf32>
    %cst_47 = arith.constant dense<0.000000e+00> : vector<16x64xf32>
    %122 = tpu.matmul %119, %121, %cst_47 {dimension_numbers = #tpu.dot_dimension_numbers<[1], [0], [0], [1], [0, 0, 1, 1], [], []>} : vector<16x32xf32>, vector<32x64xf32>, vector<16x64xf32> -> vector<16x64xf32>
    %123 = vector.extract_strided_slice %3 {offsets = [0, 0], sizes = [1, 64], strides = [1, 1]} : vector<2x64xf32> to vector<1x64xf32>
    %124 = vector.broadcast %123 : vector<1x64xf32> to vector<16x64xf32>
    %125 = arith.addf %122, %124 : vector<16x64xf32>
    %cst_48 = arith.constant 0.000000e+00 : f32
    %126 = vector.broadcast %cst_48 : f32 to vector<16x64xf32>
    %127 = arith.maximumf %125, %126 : vector<16x64xf32>
    %c0_49 = arith.constant 0 : index
    %c0_50 = arith.constant 0 : index
    %c0_51 = arith.constant 0 : index
    %128 = vector.load %arg6[%c0_49, %c0_50, %c0_51] : memref<2x64x32xf32, #tpu.memory_space<vmem>>, vector<1x64x32xf32>
    %129 = vector.shape_cast %128 : vector<1x64x32xf32> to vector<64x32xf32>
    %cst_52 = arith.constant dense<0.000000e+00> : vector<16x32xf32>
    %130 = tpu.matmul %127, %129, %cst_52 {dimension_numbers = #tpu.dot_dimension_numbers<[1], [0], [0], [1], [0, 0, 1, 1], [], []>} : vector<16x64xf32>, vector<64x32xf32>, vector<16x32xf32> -> vector<16x32xf32>
    %131 = vector.extract_strided_slice %2 {offsets = [6, 0], sizes = [1, 32], strides = [1, 1]} : vector<27x32xf32> to vector<1x32xf32>
    %132 = vector.broadcast %131 : vector<1x32xf32> to vector<16x32xf32>
    %133 = arith.addf %130, %132 : vector<16x32xf32>
    %134 = arith.addf %119, %133 : vector<16x32xf32>
    %cst_53 = arith.constant dense<0.000000e+00> : vector<16xf32>
    %135 = vector.multi_reduction <add>, %134, %cst_53 [1] : vector<16x32xf32> to vector<16xf32>
    %136 = vector.shape_cast %135 : vector<16xf32> to vector<16x1xf32>
    %cst_54 = arith.constant 3.200000e+01 : f32
    %137 = vector.broadcast %cst_54 : f32 to vector<16x1xf32>
    %138 = arith.divf %136, %137 : vector<16x1xf32>
    %139 = vector.broadcast %138 : vector<16x1xf32> to vector<16x32xf32>
    %140 = arith.subf %134, %139 : vector<16x32xf32>
    %141 = arith.mulf %140, %140 : vector<16x32xf32>
    %cst_55 = arith.constant dense<0.000000e+00> : vector<16xf32>
    %142 = vector.multi_reduction <add>, %141, %cst_55 [1] : vector<16x32xf32> to vector<16xf32>
    %143 = vector.shape_cast %142 : vector<16xf32> to vector<16x1xf32>
    %cst_56 = arith.constant 3.200000e+01 : f32
    %144 = vector.broadcast %cst_56 : f32 to vector<16x1xf32>
    %145 = arith.divf %143, %144 : vector<16x1xf32>
    %146 = vector.broadcast %138 : vector<16x1xf32> to vector<16x32xf32>
    %147 = arith.subf %134, %146 : vector<16x32xf32>
    %cst_57 = arith.constant 9.99999974E-6 : f32
    %148 = vector.broadcast %cst_57 : f32 to vector<16x1xf32>
    %149 = arith.addf %145, %148 : vector<16x1xf32>
    %150 = math.rsqrt %149 : vector<16x1xf32>
    %151 = vector.broadcast %150 : vector<16x1xf32> to vector<16x32xf32>
    %152 = arith.mulf %147, %151 : vector<16x32xf32>
    %153 = vector.extract_strided_slice %2 {offsets = [7, 0], sizes = [1, 32], strides = [1, 1]} : vector<27x32xf32> to vector<1x32xf32>
    %154 = vector.broadcast %153 : vector<1x32xf32> to vector<16x32xf32>
    %155 = arith.mulf %152, %154 : vector<16x32xf32>
    %156 = vector.extract_strided_slice %2 {offsets = [8, 0], sizes = [1, 32], strides = [1, 1]} : vector<27x32xf32> to vector<1x32xf32>
    %157 = vector.broadcast %156 : vector<1x32xf32> to vector<16x32xf32>
    %158 = arith.addf %155, %157 : vector<16x32xf32>
    %c4 = arith.constant 4 : index
    %c0_58 = arith.constant 0 : index
    %c0_59 = arith.constant 0 : index
    %159 = vector.load %arg4[%c4, %c0_58, %c0_59] : memref<12x32x32xf32, #tpu.memory_space<vmem>>, vector<1x32x32xf32>
    %160 = vector.shape_cast %159 : vector<1x32x32xf32> to vector<32x32xf32>
    %cst_60 = arith.constant dense<0.000000e+00> : vector<4x32xf32>
    %161 = tpu.matmul %1, %160, %cst_60 {dimension_numbers = #tpu.dot_dimension_numbers<[1], [0], [0], [1], [0, 0, 1, 1], [], []>} : vector<4x32xf32>, vector<32x32xf32>, vector<4x32xf32> -> vector<4x32xf32>
    %162 = vector.extract_strided_slice %2 {offsets = [9, 0], sizes = [1, 32], strides = [1, 1]} : vector<27x32xf32> to vector<1x32xf32>
    %163 = vector.broadcast %162 : vector<1x32xf32> to vector<4x32xf32>
    %164 = arith.addf %161, %163 : vector<4x32xf32>
    %c5 = arith.constant 5 : index
    %c0_61 = arith.constant 0 : index
    %c0_62 = arith.constant 0 : index
    %165 = vector.load %arg4[%c5, %c0_61, %c0_62] : memref<12x32x32xf32, #tpu.memory_space<vmem>>, vector<1x32x32xf32>
    %166 = vector.shape_cast %165 : vector<1x32x32xf32> to vector<32x32xf32>
    %cst_63 = arith.constant dense<0.000000e+00> : vector<4x32xf32>
    %167 = tpu.matmul %1, %166, %cst_63 {dimension_numbers = #tpu.dot_dimension_numbers<[1], [0], [0], [1], [0, 0, 1, 1], [], []>} : vector<4x32xf32>, vector<32x32xf32>, vector<4x32xf32> -> vector<4x32xf32>
    %168 = vector.extract_strided_slice %2 {offsets = [10, 0], sizes = [1, 32], strides = [1, 1]} : vector<27x32xf32> to vector<1x32xf32>
    %169 = vector.broadcast %168 : vector<1x32xf32> to vector<4x32xf32>
    %170 = arith.addf %167, %169 : vector<4x32xf32>
    %c6 = arith.constant 6 : index
    %c0_64 = arith.constant 0 : index
    %c0_65 = arith.constant 0 : index
    %171 = vector.load %arg4[%c6, %c0_64, %c0_65] : memref<12x32x32xf32, #tpu.memory_space<vmem>>, vector<1x32x32xf32>
    %172 = vector.shape_cast %171 : vector<1x32x32xf32> to vector<32x32xf32>
    %cst_66 = arith.constant dense<0.000000e+00> : vector<4x32xf32>
    %173 = tpu.matmul %1, %172, %cst_66 {dimension_numbers = #tpu.dot_dimension_numbers<[1], [0], [0], [1], [0, 0, 1, 1], [], []>} : vector<4x32xf32>, vector<32x32xf32>, vector<4x32xf32> -> vector<4x32xf32>
    %174 = vector.extract_strided_slice %2 {offsets = [11, 0], sizes = [1, 32], strides = [1, 1]} : vector<27x32xf32> to vector<1x32xf32>
    %175 = vector.broadcast %174 : vector<1x32xf32> to vector<4x32xf32>
    %176 = arith.addf %173, %175 : vector<4x32xf32>
    %177 = tpu.transpose %170, [1, 0] : vector<4x32xf32> -> vector<32x4xf32>
    %178 = vector.extract_strided_slice %164 {offsets = [0, 0], sizes = [4, 8], strides = [1, 1]} : vector<4x32xf32> to vector<4x8xf32>
    %179 = vector.extract_strided_slice %177 {offsets = [0, 0], sizes = [8, 4], strides = [1, 1]} : vector<32x4xf32> to vector<8x4xf32>
    %cst_67 = arith.constant dense<0.000000e+00> : vector<4x4xf32>
    %180 = tpu.matmul %178, %179, %cst_67 {dimension_numbers = #tpu.dot_dimension_numbers<[1], [0], [0], [1], [0, 0, 1, 1], [], []>} : vector<4x8xf32>, vector<8x4xf32>, vector<4x4xf32> -> vector<4x4xf32>
    %cst_68 = arith.constant dense<0xFF800000> : vector<4xf32>
    %181 = vector.multi_reduction <maximumf>, %180, %cst_68 [1] : vector<4x4xf32> to vector<4xf32>
    %182 = vector.shape_cast %181 : vector<4xf32> to vector<4x1xf32>
    %183 = vector.broadcast %182 : vector<4x1xf32> to vector<4x4xf32>
    %184 = arith.subf %180, %183 : vector<4x4xf32>
    %185 = math.exp %184 : vector<4x4xf32>
    %cst_69 = arith.constant dense<0.000000e+00> : vector<4xf32>
    %186 = vector.multi_reduction <add>, %185, %cst_69 [1] : vector<4x4xf32> to vector<4xf32>
    %187 = vector.shape_cast %186 : vector<4xf32> to vector<4x1xf32>
    %188 = tpu.reciprocal %187 {approx = true} : vector<4x1xf32> -> vector<4x1xf32>
    %189 = vector.broadcast %188 : vector<4x1xf32> to vector<4x4xf32>
    %190 = arith.mulf %185, %189 : vector<4x4xf32>
    %191 = vector.extract_strided_slice %176 {offsets = [0, 0], sizes = [4, 8], strides = [1, 1]} : vector<4x32xf32> to vector<4x8xf32>
    %cst_70 = arith.constant dense<0.000000e+00> : vector<4x8xf32>
    %192 = tpu.matmul %190, %191, %cst_70 {dimension_numbers = #tpu.dot_dimension_numbers<[1], [0], [0], [1], [0, 0, 1, 1], [], []>} : vector<4x4xf32>, vector<4x8xf32>, vector<4x8xf32> -> vector<4x8xf32>
    %193 = vector.extract_strided_slice %164 {offsets = [0, 8], sizes = [4, 8], strides = [1, 1]} : vector<4x32xf32> to vector<4x8xf32>
    %194 = vector.extract_strided_slice %177 {offsets = [8, 0], sizes = [8, 4], strides = [1, 1]} : vector<32x4xf32> to vector<8x4xf32>
    %cst_71 = arith.constant dense<0.000000e+00> : vector<4x4xf32>
    %195 = tpu.matmul %193, %194, %cst_71 {dimension_numbers = #tpu.dot_dimension_numbers<[1], [0], [0], [1], [0, 0, 1, 1], [], []>} : vector<4x8xf32>, vector<8x4xf32>, vector<4x4xf32> -> vector<4x4xf32>
    %cst_72 = arith.constant dense<0xFF800000> : vector<4xf32>
    %196 = vector.multi_reduction <maximumf>, %195, %cst_72 [1] : vector<4x4xf32> to vector<4xf32>
    %197 = vector.shape_cast %196 : vector<4xf32> to vector<4x1xf32>
    %198 = vector.broadcast %197 : vector<4x1xf32> to vector<4x4xf32>
    %199 = arith.subf %195, %198 : vector<4x4xf32>
    %200 = math.exp %199 : vector<4x4xf32>
    %cst_73 = arith.constant dense<0.000000e+00> : vector<4xf32>
    %201 = vector.multi_reduction <add>, %200, %cst_73 [1] : vector<4x4xf32> to vector<4xf32>
    %202 = vector.shape_cast %201 : vector<4xf32> to vector<4x1xf32>
    %203 = tpu.reciprocal %202 {approx = true} : vector<4x1xf32> -> vector<4x1xf32>
    %204 = vector.broadcast %203 : vector<4x1xf32> to vector<4x4xf32>
    %205 = arith.mulf %200, %204 : vector<4x4xf32>
    %206 = vector.extract_strided_slice %176 {offsets = [0, 8], sizes = [4, 8], strides = [1, 1]} : vector<4x32xf32> to vector<4x8xf32>
    %cst_74 = arith.constant dense<0.000000e+00> : vector<4x8xf32>
    %207 = tpu.matmul %205, %206, %cst_74 {dimension_numbers = #tpu.dot_dimension_numbers<[1], [0], [0], [1], [0, 0, 1, 1], [], []>} : vector<4x4xf32>, vector<4x8xf32>, vector<4x8xf32> -> vector<4x8xf32>
    %208 = vector.extract_strided_slice %164 {offsets = [0, 16], sizes = [4, 8], strides = [1, 1]} : vector<4x32xf32> to vector<4x8xf32>
    %209 = vector.extract_strided_slice %177 {offsets = [16, 0], sizes = [8, 4], strides = [1, 1]} : vector<32x4xf32> to vector<8x4xf32>
    %cst_75 = arith.constant dense<0.000000e+00> : vector<4x4xf32>
    %210 = tpu.matmul %208, %209, %cst_75 {dimension_numbers = #tpu.dot_dimension_numbers<[1], [0], [0], [1], [0, 0, 1, 1], [], []>} : vector<4x8xf32>, vector<8x4xf32>, vector<4x4xf32> -> vector<4x4xf32>
    %cst_76 = arith.constant dense<0xFF800000> : vector<4xf32>
    %211 = vector.multi_reduction <maximumf>, %210, %cst_76 [1] : vector<4x4xf32> to vector<4xf32>
    %212 = vector.shape_cast %211 : vector<4xf32> to vector<4x1xf32>
    %213 = vector.broadcast %212 : vector<4x1xf32> to vector<4x4xf32>
    %214 = arith.subf %210, %213 : vector<4x4xf32>
    %215 = math.exp %214 : vector<4x4xf32>
    %cst_77 = arith.constant dense<0.000000e+00> : vector<4xf32>
    %216 = vector.multi_reduction <add>, %215, %cst_77 [1] : vector<4x4xf32> to vector<4xf32>
    %217 = vector.shape_cast %216 : vector<4xf32> to vector<4x1xf32>
    %218 = tpu.reciprocal %217 {approx = true} : vector<4x1xf32> -> vector<4x1xf32>
    %219 = vector.broadcast %218 : vector<4x1xf32> to vector<4x4xf32>
    %220 = arith.mulf %215, %219 : vector<4x4xf32>
    %221 = vector.extract_strided_slice %176 {offsets = [0, 16], sizes = [4, 8], strides = [1, 1]} : vector<4x32xf32> to vector<4x8xf32>
    %cst_78 = arith.constant dense<0.000000e+00> : vector<4x8xf32>
    %222 = tpu.matmul %220, %221, %cst_78 {dimension_numbers = #tpu.dot_dimension_numbers<[1], [0], [0], [1], [0, 0, 1, 1], [], []>} : vector<4x4xf32>, vector<4x8xf32>, vector<4x8xf32> -> vector<4x8xf32>
    %223 = vector.extract_strided_slice %164 {offsets = [0, 24], sizes = [4, 8], strides = [1, 1]} : vector<4x32xf32> to vector<4x8xf32>
    %224 = vector.extract_strided_slice %177 {offsets = [24, 0], sizes = [8, 4], strides = [1, 1]} : vector<32x4xf32> to vector<8x4xf32>
    %cst_79 = arith.constant dense<0.000000e+00> : vector<4x4xf32>
    %225 = tpu.matmul %223, %224, %cst_79 {dimension_numbers = #tpu.dot_dimension_numbers<[1], [0], [0], [1], [0, 0, 1, 1], [], []>} : vector<4x8xf32>, vector<8x4xf32>, vector<4x4xf32> -> vector<4x4xf32>
    %cst_80 = arith.constant dense<0xFF800000> : vector<4xf32>
    %226 = vector.multi_reduction <maximumf>, %225, %cst_80 [1] : vector<4x4xf32> to vector<4xf32>
    %227 = vector.shape_cast %226 : vector<4xf32> to vector<4x1xf32>
    %228 = vector.broadcast %227 : vector<4x1xf32> to vector<4x4xf32>
    %229 = arith.subf %225, %228 : vector<4x4xf32>
    %230 = math.exp %229 : vector<4x4xf32>
    %cst_81 = arith.constant dense<0.000000e+00> : vector<4xf32>
    %231 = vector.multi_reduction <add>, %230, %cst_81 [1] : vector<4x4xf32> to vector<4xf32>
    %232 = vector.shape_cast %231 : vector<4xf32> to vector<4x1xf32>
    %233 = tpu.reciprocal %232 {approx = true} : vector<4x1xf32> -> vector<4x1xf32>
    %234 = vector.broadcast %233 : vector<4x1xf32> to vector<4x4xf32>
    %235 = arith.mulf %230, %234 : vector<4x4xf32>
    %236 = vector.extract_strided_slice %176 {offsets = [0, 24], sizes = [4, 8], strides = [1, 1]} : vector<4x32xf32> to vector<4x8xf32>
    %cst_82 = arith.constant dense<0.000000e+00> : vector<4x8xf32>
    %237 = tpu.matmul %235, %236, %cst_82 {dimension_numbers = #tpu.dot_dimension_numbers<[1], [0], [0], [1], [0, 0, 1, 1], [], []>} : vector<4x4xf32>, vector<4x8xf32>, vector<4x8xf32> -> vector<4x8xf32>
    %238 = tpu.concatenate %192, %207, %222, %237 in 1 : vector<4x8xf32>, vector<4x8xf32>, vector<4x8xf32>, vector<4x8xf32> -> vector<4x32xf32>
    %c7 = arith.constant 7 : index
    %c0_83 = arith.constant 0 : index
    %c0_84 = arith.constant 0 : index
    %239 = vector.load %arg4[%c7, %c0_83, %c0_84] : memref<12x32x32xf32, #tpu.memory_space<vmem>>, vector<1x32x32xf32>
    %240 = vector.shape_cast %239 : vector<1x32x32xf32> to vector<32x32xf32>
    %cst_85 = arith.constant dense<0.000000e+00> : vector<4x32xf32>
    %241 = tpu.matmul %238, %240, %cst_85 {dimension_numbers = #tpu.dot_dimension_numbers<[1], [0], [0], [1], [0, 0, 1, 1], [], []>} : vector<4x32xf32>, vector<32x32xf32>, vector<4x32xf32> -> vector<4x32xf32>
    %242 = vector.extract_strided_slice %2 {offsets = [12, 0], sizes = [1, 32], strides = [1, 1]} : vector<27x32xf32> to vector<1x32xf32>
    %243 = vector.broadcast %242 : vector<1x32xf32> to vector<4x32xf32>
    %244 = arith.addf %241, %243 : vector<4x32xf32>
    %245 = arith.addf %1, %244 : vector<4x32xf32>
    %cst_86 = arith.constant dense<0.000000e+00> : vector<4xf32>
    %246 = vector.multi_reduction <add>, %245, %cst_86 [1] : vector<4x32xf32> to vector<4xf32>
    %247 = vector.shape_cast %246 : vector<4xf32> to vector<4x1xf32>
    %cst_87 = arith.constant 3.200000e+01 : f32
    %248 = vector.broadcast %cst_87 : f32 to vector<4x1xf32>
    %249 = arith.divf %247, %248 : vector<4x1xf32>
    %250 = vector.broadcast %249 : vector<4x1xf32> to vector<4x32xf32>
    %251 = arith.subf %245, %250 : vector<4x32xf32>
    %252 = arith.mulf %251, %251 : vector<4x32xf32>
    %cst_88 = arith.constant dense<0.000000e+00> : vector<4xf32>
    %253 = vector.multi_reduction <add>, %252, %cst_88 [1] : vector<4x32xf32> to vector<4xf32>
    %254 = vector.shape_cast %253 : vector<4xf32> to vector<4x1xf32>
    %cst_89 = arith.constant 3.200000e+01 : f32
    %255 = vector.broadcast %cst_89 : f32 to vector<4x1xf32>
    %256 = arith.divf %254, %255 : vector<4x1xf32>
    %257 = vector.broadcast %249 : vector<4x1xf32> to vector<4x32xf32>
    %258 = arith.subf %245, %257 : vector<4x32xf32>
    %cst_90 = arith.constant 9.99999974E-6 : f32
    %259 = vector.broadcast %cst_90 : f32 to vector<4x1xf32>
    %260 = arith.addf %256, %259 : vector<4x1xf32>
    %261 = math.rsqrt %260 : vector<4x1xf32>
    %262 = vector.broadcast %261 : vector<4x1xf32> to vector<4x32xf32>
    %263 = arith.mulf %258, %262 : vector<4x32xf32>
    %264 = vector.extract_strided_slice %2 {offsets = [13, 0], sizes = [1, 32], strides = [1, 1]} : vector<27x32xf32> to vector<1x32xf32>
    %265 = vector.broadcast %264 : vector<1x32xf32> to vector<4x32xf32>
    %266 = arith.mulf %263, %265 : vector<4x32xf32>
    %267 = vector.extract_strided_slice %2 {offsets = [14, 0], sizes = [1, 32], strides = [1, 1]} : vector<27x32xf32> to vector<1x32xf32>
    %268 = vector.broadcast %267 : vector<1x32xf32> to vector<4x32xf32>
    %269 = arith.addf %266, %268 : vector<4x32xf32>
    %c8 = arith.constant 8 : index
    %c0_91 = arith.constant 0 : index
    %c0_92 = arith.constant 0 : index
    %270 = vector.load %arg4[%c8, %c0_91, %c0_92] : memref<12x32x32xf32, #tpu.memory_space<vmem>>, vector<1x32x32xf32>
    %271 = vector.shape_cast %270 : vector<1x32x32xf32> to vector<32x32xf32>
    %cst_93 = arith.constant dense<0.000000e+00> : vector<4x32xf32>
    %272 = tpu.matmul %269, %271, %cst_93 {dimension_numbers = #tpu.dot_dimension_numbers<[1], [0], [0], [1], [0, 0, 1, 1], [], []>} : vector<4x32xf32>, vector<32x32xf32>, vector<4x32xf32> -> vector<4x32xf32>
    %273 = vector.extract_strided_slice %2 {offsets = [15, 0], sizes = [1, 32], strides = [1, 1]} : vector<27x32xf32> to vector<1x32xf32>
    %274 = vector.broadcast %273 : vector<1x32xf32> to vector<4x32xf32>
    %275 = arith.addf %272, %274 : vector<4x32xf32>
    %c9 = arith.constant 9 : index
    %c0_94 = arith.constant 0 : index
    %c0_95 = arith.constant 0 : index
    %276 = vector.load %arg4[%c9, %c0_94, %c0_95] : memref<12x32x32xf32, #tpu.memory_space<vmem>>, vector<1x32x32xf32>
    %277 = vector.shape_cast %276 : vector<1x32x32xf32> to vector<32x32xf32>
    %cst_96 = arith.constant dense<0.000000e+00> : vector<16x32xf32>
    %278 = tpu.matmul %158, %277, %cst_96 {dimension_numbers = #tpu.dot_dimension_numbers<[1], [0], [0], [1], [0, 0, 1, 1], [], []>} : vector<16x32xf32>, vector<32x32xf32>, vector<16x32xf32> -> vector<16x32xf32>
    %279 = vector.extract_strided_slice %2 {offsets = [16, 0], sizes = [1, 32], strides = [1, 1]} : vector<27x32xf32> to vector<1x32xf32>
    %280 = vector.broadcast %279 : vector<1x32xf32> to vector<16x32xf32>
    %281 = arith.addf %278, %280 : vector<16x32xf32>
    %c10 = arith.constant 10 : index
    %c0_97 = arith.constant 0 : index
    %c0_98 = arith.constant 0 : index
    %282 = vector.load %arg4[%c10, %c0_97, %c0_98] : memref<12x32x32xf32, #tpu.memory_space<vmem>>, vector<1x32x32xf32>
    %283 = vector.shape_cast %282 : vector<1x32x32xf32> to vector<32x32xf32>
    %cst_99 = arith.constant dense<0.000000e+00> : vector<16x32xf32>
    %284 = tpu.matmul %158, %283, %cst_99 {dimension_numbers = #tpu.dot_dimension_numbers<[1], [0], [0], [1], [0, 0, 1, 1], [], []>} : vector<16x32xf32>, vector<32x32xf32>, vector<16x32xf32> -> vector<16x32xf32>
    %285 = vector.extract_strided_slice %2 {offsets = [17, 0], sizes = [1, 32], strides = [1, 1]} : vector<27x32xf32> to vector<1x32xf32>
    %286 = vector.broadcast %285 : vector<1x32xf32> to vector<16x32xf32>
    %287 = arith.addf %284, %286 : vector<16x32xf32>
    %288 = tpu.transpose %281, [1, 0] : vector<16x32xf32> -> vector<32x16xf32>
    %289 = vector.extract_strided_slice %275 {offsets = [0, 0], sizes = [4, 8], strides = [1, 1]} : vector<4x32xf32> to vector<4x8xf32>
    %290 = vector.extract_strided_slice %288 {offsets = [0, 0], sizes = [8, 16], strides = [1, 1]} : vector<32x16xf32> to vector<8x16xf32>
    %cst_100 = arith.constant dense<0.000000e+00> : vector<4x16xf32>
    %291 = tpu.matmul %289, %290, %cst_100 {dimension_numbers = #tpu.dot_dimension_numbers<[1], [0], [0], [1], [0, 0, 1, 1], [], []>} : vector<4x8xf32>, vector<8x16xf32>, vector<4x16xf32> -> vector<4x16xf32>
    %cst_101 = arith.constant dense<0xFF800000> : vector<4xf32>
    %292 = vector.multi_reduction <maximumf>, %291, %cst_101 [1] : vector<4x16xf32> to vector<4xf32>
    %293 = vector.shape_cast %292 : vector<4xf32> to vector<4x1xf32>
    %294 = vector.broadcast %293 : vector<4x1xf32> to vector<4x16xf32>
    %295 = arith.subf %291, %294 : vector<4x16xf32>
    %296 = math.exp %295 : vector<4x16xf32>
    %cst_102 = arith.constant dense<0.000000e+00> : vector<4xf32>
    %297 = vector.multi_reduction <add>, %296, %cst_102 [1] : vector<4x16xf32> to vector<4xf32>
    %298 = vector.shape_cast %297 : vector<4xf32> to vector<4x1xf32>
    %299 = tpu.reciprocal %298 {approx = true} : vector<4x1xf32> -> vector<4x1xf32>
    %300 = vector.broadcast %299 : vector<4x1xf32> to vector<4x16xf32>
    %301 = arith.mulf %296, %300 : vector<4x16xf32>
    %302 = vector.extract_strided_slice %287 {offsets = [0, 0], sizes = [16, 8], strides = [1, 1]} : vector<16x32xf32> to vector<16x8xf32>
    %cst_103 = arith.constant dense<0.000000e+00> : vector<4x8xf32>
    %303 = tpu.matmul %301, %302, %cst_103 {dimension_numbers = #tpu.dot_dimension_numbers<[1], [0], [0], [1], [0, 0, 1, 1], [], []>} : vector<4x16xf32>, vector<16x8xf32>, vector<4x8xf32> -> vector<4x8xf32>
    %304 = vector.extract_strided_slice %275 {offsets = [0, 8], sizes = [4, 8], strides = [1, 1]} : vector<4x32xf32> to vector<4x8xf32>
    %305 = vector.extract_strided_slice %288 {offsets = [8, 0], sizes = [8, 16], strides = [1, 1]} : vector<32x16xf32> to vector<8x16xf32>
    %cst_104 = arith.constant dense<0.000000e+00> : vector<4x16xf32>
    %306 = tpu.matmul %304, %305, %cst_104 {dimension_numbers = #tpu.dot_dimension_numbers<[1], [0], [0], [1], [0, 0, 1, 1], [], []>} : vector<4x8xf32>, vector<8x16xf32>, vector<4x16xf32> -> vector<4x16xf32>
    %cst_105 = arith.constant dense<0xFF800000> : vector<4xf32>
    %307 = vector.multi_reduction <maximumf>, %306, %cst_105 [1] : vector<4x16xf32> to vector<4xf32>
    %308 = vector.shape_cast %307 : vector<4xf32> to vector<4x1xf32>
    %309 = vector.broadcast %308 : vector<4x1xf32> to vector<4x16xf32>
    %310 = arith.subf %306, %309 : vector<4x16xf32>
    %311 = math.exp %310 : vector<4x16xf32>
    %cst_106 = arith.constant dense<0.000000e+00> : vector<4xf32>
    %312 = vector.multi_reduction <add>, %311, %cst_106 [1] : vector<4x16xf32> to vector<4xf32>
    %313 = vector.shape_cast %312 : vector<4xf32> to vector<4x1xf32>
    %314 = tpu.reciprocal %313 {approx = true} : vector<4x1xf32> -> vector<4x1xf32>
    %315 = vector.broadcast %314 : vector<4x1xf32> to vector<4x16xf32>
    %316 = arith.mulf %311, %315 : vector<4x16xf32>
    %317 = vector.extract_strided_slice %287 {offsets = [0, 8], sizes = [16, 8], strides = [1, 1]} : vector<16x32xf32> to vector<16x8xf32>
    %cst_107 = arith.constant dense<0.000000e+00> : vector<4x8xf32>
    %318 = tpu.matmul %316, %317, %cst_107 {dimension_numbers = #tpu.dot_dimension_numbers<[1], [0], [0], [1], [0, 0, 1, 1], [], []>} : vector<4x16xf32>, vector<16x8xf32>, vector<4x8xf32> -> vector<4x8xf32>
    %319 = vector.extract_strided_slice %275 {offsets = [0, 16], sizes = [4, 8], strides = [1, 1]} : vector<4x32xf32> to vector<4x8xf32>
    %320 = vector.extract_strided_slice %288 {offsets = [16, 0], sizes = [8, 16], strides = [1, 1]} : vector<32x16xf32> to vector<8x16xf32>
    %cst_108 = arith.constant dense<0.000000e+00> : vector<4x16xf32>
    %321 = tpu.matmul %319, %320, %cst_108 {dimension_numbers = #tpu.dot_dimension_numbers<[1], [0], [0], [1], [0, 0, 1, 1], [], []>} : vector<4x8xf32>, vector<8x16xf32>, vector<4x16xf32> -> vector<4x16xf32>
    %cst_109 = arith.constant dense<0xFF800000> : vector<4xf32>
    %322 = vector.multi_reduction <maximumf>, %321, %cst_109 [1] : vector<4x16xf32> to vector<4xf32>
    %323 = vector.shape_cast %322 : vector<4xf32> to vector<4x1xf32>
    %324 = vector.broadcast %323 : vector<4x1xf32> to vector<4x16xf32>
    %325 = arith.subf %321, %324 : vector<4x16xf32>
    %326 = math.exp %325 : vector<4x16xf32>
    %cst_110 = arith.constant dense<0.000000e+00> : vector<4xf32>
    %327 = vector.multi_reduction <add>, %326, %cst_110 [1] : vector<4x16xf32> to vector<4xf32>
    %328 = vector.shape_cast %327 : vector<4xf32> to vector<4x1xf32>
    %329 = tpu.reciprocal %328 {approx = true} : vector<4x1xf32> -> vector<4x1xf32>
    %330 = vector.broadcast %329 : vector<4x1xf32> to vector<4x16xf32>
    %331 = arith.mulf %326, %330 : vector<4x16xf32>
    %332 = vector.extract_strided_slice %287 {offsets = [0, 16], sizes = [16, 8], strides = [1, 1]} : vector<16x32xf32> to vector<16x8xf32>
    %cst_111 = arith.constant dense<0.000000e+00> : vector<4x8xf32>
    %333 = tpu.matmul %331, %332, %cst_111 {dimension_numbers = #tpu.dot_dimension_numbers<[1], [0], [0], [1], [0, 0, 1, 1], [], []>} : vector<4x16xf32>, vector<16x8xf32>, vector<4x8xf32> -> vector<4x8xf32>
    %334 = vector.extract_strided_slice %275 {offsets = [0, 24], sizes = [4, 8], strides = [1, 1]} : vector<4x32xf32> to vector<4x8xf32>
    %335 = vector.extract_strided_slice %288 {offsets = [24, 0], sizes = [8, 16], strides = [1, 1]} : vector<32x16xf32> to vector<8x16xf32>
    %cst_112 = arith.constant dense<0.000000e+00> : vector<4x16xf32>
    %336 = tpu.matmul %334, %335, %cst_112 {dimension_numbers = #tpu.dot_dimension_numbers<[1], [0], [0], [1], [0, 0, 1, 1], [], []>} : vector<4x8xf32>, vector<8x16xf32>, vector<4x16xf32> -> vector<4x16xf32>
    %cst_113 = arith.constant dense<0xFF800000> : vector<4xf32>
    %337 = vector.multi_reduction <maximumf>, %336, %cst_113 [1] : vector<4x16xf32> to vector<4xf32>
    %338 = vector.shape_cast %337 : vector<4xf32> to vector<4x1xf32>
    %339 = vector.broadcast %338 : vector<4x1xf32> to vector<4x16xf32>
    %340 = arith.subf %336, %339 : vector<4x16xf32>
    %341 = math.exp %340 : vector<4x16xf32>
    %cst_114 = arith.constant dense<0.000000e+00> : vector<4xf32>
    %342 = vector.multi_reduction <add>, %341, %cst_114 [1] : vector<4x16xf32> to vector<4xf32>
    %343 = vector.shape_cast %342 : vector<4xf32> to vector<4x1xf32>
    %344 = tpu.reciprocal %343 {approx = true} : vector<4x1xf32> -> vector<4x1xf32>
    %345 = vector.broadcast %344 : vector<4x1xf32> to vector<4x16xf32>
    %346 = arith.mulf %341, %345 : vector<4x16xf32>
    %347 = vector.extract_strided_slice %287 {offsets = [0, 24], sizes = [16, 8], strides = [1, 1]} : vector<16x32xf32> to vector<16x8xf32>
    %cst_115 = arith.constant dense<0.000000e+00> : vector<4x8xf32>
    %348 = tpu.matmul %346, %347, %cst_115 {dimension_numbers = #tpu.dot_dimension_numbers<[1], [0], [0], [1], [0, 0, 1, 1], [], []>} : vector<4x16xf32>, vector<16x8xf32>, vector<4x8xf32> -> vector<4x8xf32>
    %349 = tpu.concatenate %303, %318, %333, %348 in 1 : vector<4x8xf32>, vector<4x8xf32>, vector<4x8xf32>, vector<4x8xf32> -> vector<4x32xf32>
    %c11 = arith.constant 11 : index
    %c0_116 = arith.constant 0 : index
    %c0_117 = arith.constant 0 : index
    %350 = vector.load %arg4[%c11, %c0_116, %c0_117] : memref<12x32x32xf32, #tpu.memory_space<vmem>>, vector<1x32x32xf32>
    %351 = vector.shape_cast %350 : vector<1x32x32xf32> to vector<32x32xf32>
    %cst_118 = arith.constant dense<0.000000e+00> : vector<4x32xf32>
    %352 = tpu.matmul %349, %351, %cst_118 {dimension_numbers = #tpu.dot_dimension_numbers<[1], [0], [0], [1], [0, 0, 1, 1], [], []>} : vector<4x32xf32>, vector<32x32xf32>, vector<4x32xf32> -> vector<4x32xf32>
    %353 = vector.extract_strided_slice %2 {offsets = [18, 0], sizes = [1, 32], strides = [1, 1]} : vector<27x32xf32> to vector<1x32xf32>
    %354 = vector.broadcast %353 : vector<1x32xf32> to vector<4x32xf32>
    %355 = arith.addf %352, %354 : vector<4x32xf32>
    %356 = arith.addf %269, %355 : vector<4x32xf32>
    %cst_119 = arith.constant dense<0.000000e+00> : vector<4xf32>
    %357 = vector.multi_reduction <add>, %356, %cst_119 [1] : vector<4x32xf32> to vector<4xf32>
    %358 = vector.shape_cast %357 : vector<4xf32> to vector<4x1xf32>
    %cst_120 = arith.constant 3.200000e+01 : f32
    %359 = vector.broadcast %cst_120 : f32 to vector<4x1xf32>
    %360 = arith.divf %358, %359 : vector<4x1xf32>
    %361 = vector.broadcast %360 : vector<4x1xf32> to vector<4x32xf32>
    %362 = arith.subf %356, %361 : vector<4x32xf32>
    %363 = arith.mulf %362, %362 : vector<4x32xf32>
    %cst_121 = arith.constant dense<0.000000e+00> : vector<4xf32>
    %364 = vector.multi_reduction <add>, %363, %cst_121 [1] : vector<4x32xf32> to vector<4xf32>
    %365 = vector.shape_cast %364 : vector<4xf32> to vector<4x1xf32>
    %cst_122 = arith.constant 3.200000e+01 : f32
    %366 = vector.broadcast %cst_122 : f32 to vector<4x1xf32>
    %367 = arith.divf %365, %366 : vector<4x1xf32>
    %368 = vector.broadcast %360 : vector<4x1xf32> to vector<4x32xf32>
    %369 = arith.subf %356, %368 : vector<4x32xf32>
    %cst_123 = arith.constant 9.99999974E-6 : f32
    %370 = vector.broadcast %cst_123 : f32 to vector<4x1xf32>
    %371 = arith.addf %367, %370 : vector<4x1xf32>
    %372 = math.rsqrt %371 : vector<4x1xf32>
    %373 = vector.broadcast %372 : vector<4x1xf32> to vector<4x32xf32>
    %374 = arith.mulf %369, %373 : vector<4x32xf32>
    %375 = vector.extract_strided_slice %2 {offsets = [19, 0], sizes = [1, 32], strides = [1, 1]} : vector<27x32xf32> to vector<1x32xf32>
    %376 = vector.broadcast %375 : vector<1x32xf32> to vector<4x32xf32>
    %377 = arith.mulf %374, %376 : vector<4x32xf32>
    %378 = vector.extract_strided_slice %2 {offsets = [20, 0], sizes = [1, 32], strides = [1, 1]} : vector<27x32xf32> to vector<1x32xf32>
    %379 = vector.broadcast %378 : vector<1x32xf32> to vector<4x32xf32>
    %380 = arith.addf %377, %379 : vector<4x32xf32>
    %c1_124 = arith.constant 1 : index
    %c0_125 = arith.constant 0 : index
    %c0_126 = arith.constant 0 : index
    %381 = vector.load %arg5[%c1_124, %c0_125, %c0_126] : memref<2x32x64xf32, #tpu.memory_space<vmem>>, vector<1x32x64xf32>
    %382 = vector.shape_cast %381 : vector<1x32x64xf32> to vector<32x64xf32>
    %cst_127 = arith.constant dense<0.000000e+00> : vector<4x64xf32>
    %383 = tpu.matmul %380, %382, %cst_127 {dimension_numbers = #tpu.dot_dimension_numbers<[1], [0], [0], [1], [0, 0, 1, 1], [], []>} : vector<4x32xf32>, vector<32x64xf32>, vector<4x64xf32> -> vector<4x64xf32>
    %384 = vector.extract_strided_slice %3 {offsets = [1, 0], sizes = [1, 64], strides = [1, 1]} : vector<2x64xf32> to vector<1x64xf32>
    %385 = vector.broadcast %384 : vector<1x64xf32> to vector<4x64xf32>
    %386 = arith.addf %383, %385 : vector<4x64xf32>
    %cst_128 = arith.constant 0.000000e+00 : f32
    %387 = vector.broadcast %cst_128 : f32 to vector<4x64xf32>
    %388 = arith.maximumf %386, %387 : vector<4x64xf32>
    %c1_129 = arith.constant 1 : index
    %c0_130 = arith.constant 0 : index
    %c0_131 = arith.constant 0 : index
    %389 = vector.load %arg6[%c1_129, %c0_130, %c0_131] : memref<2x64x32xf32, #tpu.memory_space<vmem>>, vector<1x64x32xf32>
    %390 = vector.shape_cast %389 : vector<1x64x32xf32> to vector<64x32xf32>
    %cst_132 = arith.constant dense<0.000000e+00> : vector<4x32xf32>
    %391 = tpu.matmul %388, %390, %cst_132 {dimension_numbers = #tpu.dot_dimension_numbers<[1], [0], [0], [1], [0, 0, 1, 1], [], []>} : vector<4x64xf32>, vector<64x32xf32>, vector<4x32xf32> -> vector<4x32xf32>
    %392 = vector.extract_strided_slice %2 {offsets = [21, 0], sizes = [1, 32], strides = [1, 1]} : vector<27x32xf32> to vector<1x32xf32>
    %393 = vector.broadcast %392 : vector<1x32xf32> to vector<4x32xf32>
    %394 = arith.addf %391, %393 : vector<4x32xf32>
    %395 = arith.addf %380, %394 : vector<4x32xf32>
    %cst_133 = arith.constant dense<0.000000e+00> : vector<4xf32>
    %396 = vector.multi_reduction <add>, %395, %cst_133 [1] : vector<4x32xf32> to vector<4xf32>
    %397 = vector.shape_cast %396 : vector<4xf32> to vector<4x1xf32>
    %cst_134 = arith.constant 3.200000e+01 : f32
    %398 = vector.broadcast %cst_134 : f32 to vector<4x1xf32>
    %399 = arith.divf %397, %398 : vector<4x1xf32>
    %400 = vector.broadcast %399 : vector<4x1xf32> to vector<4x32xf32>
    %401 = arith.subf %395, %400 : vector<4x32xf32>
    %402 = arith.mulf %401, %401 : vector<4x32xf32>
    %cst_135 = arith.constant dense<0.000000e+00> : vector<4xf32>
    %403 = vector.multi_reduction <add>, %402, %cst_135 [1] : vector<4x32xf32> to vector<4xf32>
    %404 = vector.shape_cast %403 : vector<4xf32> to vector<4x1xf32>
    %cst_136 = arith.constant 3.200000e+01 : f32
    %405 = vector.broadcast %cst_136 : f32 to vector<4x1xf32>
    %406 = arith.divf %404, %405 : vector<4x1xf32>
    %407 = vector.broadcast %399 : vector<4x1xf32> to vector<4x32xf32>
    %408 = arith.subf %395, %407 : vector<4x32xf32>
    %cst_137 = arith.constant 9.99999974E-6 : f32
    %409 = vector.broadcast %cst_137 : f32 to vector<4x1xf32>
    %410 = arith.addf %406, %409 : vector<4x1xf32>
    %411 = math.rsqrt %410 : vector<4x1xf32>
    %412 = vector.broadcast %411 : vector<4x1xf32> to vector<4x32xf32>
    %413 = arith.mulf %408, %412 : vector<4x32xf32>
    %414 = vector.extract_strided_slice %2 {offsets = [22, 0], sizes = [1, 32], strides = [1, 1]} : vector<27x32xf32> to vector<1x32xf32>
    %415 = vector.broadcast %414 : vector<1x32xf32> to vector<4x32xf32>
    %416 = arith.mulf %413, %415 : vector<4x32xf32>
    %417 = vector.extract_strided_slice %2 {offsets = [23, 0], sizes = [1, 32], strides = [1, 1]} : vector<27x32xf32> to vector<1x32xf32>
    %418 = vector.broadcast %417 : vector<1x32xf32> to vector<4x32xf32>
    %419 = arith.addf %416, %418 : vector<4x32xf32>
    %cst_138 = arith.constant dense<0.000000e+00> : vector<4xf32>
    %420 = vector.multi_reduction <add>, %419, %cst_138 [1] : vector<4x32xf32> to vector<4xf32>
    %421 = vector.shape_cast %420 : vector<4xf32> to vector<4x1xf32>
    %cst_139 = arith.constant 3.200000e+01 : f32
    %422 = vector.broadcast %cst_139 : f32 to vector<4x1xf32>
    %423 = arith.divf %421, %422 : vector<4x1xf32>
    %424 = vector.broadcast %423 : vector<4x1xf32> to vector<4x32xf32>
    %425 = arith.subf %419, %424 : vector<4x32xf32>
    %426 = arith.mulf %425, %425 : vector<4x32xf32>
    %cst_140 = arith.constant dense<0.000000e+00> : vector<4xf32>
    %427 = vector.multi_reduction <add>, %426, %cst_140 [1] : vector<4x32xf32> to vector<4xf32>
    %428 = vector.shape_cast %427 : vector<4xf32> to vector<4x1xf32>
    %cst_141 = arith.constant 3.200000e+01 : f32
    %429 = vector.broadcast %cst_141 : f32 to vector<4x1xf32>
    %430 = arith.divf %428, %429 : vector<4x1xf32>
    %431 = vector.broadcast %423 : vector<4x1xf32> to vector<4x32xf32>
    %432 = arith.subf %419, %431 : vector<4x32xf32>
    %cst_142 = arith.constant 9.99999974E-6 : f32
    %433 = vector.broadcast %cst_142 : f32 to vector<4x1xf32>
    %434 = arith.addf %430, %433 : vector<4x1xf32>
    %435 = math.rsqrt %434 : vector<4x1xf32>
    %436 = vector.broadcast %435 : vector<4x1xf32> to vector<4x32xf32>
    %437 = arith.mulf %432, %436 : vector<4x32xf32>
    %438 = vector.extract_strided_slice %2 {offsets = [24, 0], sizes = [1, 32], strides = [1, 1]} : vector<27x32xf32> to vector<1x32xf32>
    %439 = vector.broadcast %438 : vector<1x32xf32> to vector<4x32xf32>
    %440 = arith.mulf %437, %439 : vector<4x32xf32>
    %441 = vector.extract_strided_slice %2 {offsets = [25, 0], sizes = [1, 32], strides = [1, 1]} : vector<27x32xf32> to vector<1x32xf32>
    %442 = vector.broadcast %441 : vector<1x32xf32> to vector<4x32xf32>
    %443 = arith.addf %440, %442 : vector<4x32xf32>
    %444 = vector.extract_strided_slice %2 {offsets = [26, 0], sizes = [1, 32], strides = [1, 1]} : vector<27x32xf32> to vector<1x32xf32>
    %cst_143 = arith.constant dense<0.000000e+00> : vector<1x4xf32>
    %445 = tpu.matmul %444, %443, %cst_143 {dimension_numbers = #tpu.dot_dimension_numbers<[1], [1], [0], [0], [0, 0, 1, 0], [], []>} : vector<1x32xf32>, vector<4x32xf32>, vector<1x4xf32> -> vector<1x4xf32>
    %c0_144 = arith.constant 0 : index
    %c0_145 = arith.constant 0 : index
    %446 = vector.load %arg9[%c0_144, %c0_145] : memref<1x1xf32, #tpu.memory_space<vmem>>, vector<1x1xf32>
    %447 = vector.broadcast %446 : vector<1x1xf32> to vector<1x4xf32>
    %448 = arith.addf %445, %447 : vector<1x4xf32>
    %c1_146 = arith.constant 1 : index
    %c0_147 = arith.constant 0 : index
    %c0_148 = arith.constant 0 : index
    %449 = vector.load %arg1[%c1_146, %c0_147, %c0_148] : memref<2x16x32xf32, #tpu.memory_space<vmem>>, vector<1x16x32xf32>
    %450 = vector.shape_cast %449 : vector<1x16x32xf32> to vector<16x32xf32>
    %cst_149 = arith.constant 1.000000e-01 : f32
    %451 = vector.broadcast %cst_149 : f32 to vector<16x32xf32>
    %452 = arith.mulf %451, %450 : vector<16x32xf32>
    %453 = arith.addf %0, %452 : vector<16x32xf32>
    %c0_150 = arith.constant 0 : index
    %c0_151 = arith.constant 0 : index
    %c0_152 = arith.constant 0 : index
    %454 = vector.load %arg4[%c0_150, %c0_151, %c0_152] : memref<12x32x32xf32, #tpu.memory_space<vmem>>, vector<1x32x32xf32>
    %455 = vector.shape_cast %454 : vector<1x32x32xf32> to vector<32x32xf32>
    %cst_153 = arith.constant dense<0.000000e+00> : vector<16x32xf32>
    %456 = tpu.matmul %453, %455, %cst_153 {dimension_numbers = #tpu.dot_dimension_numbers<[1], [0], [0], [1], [0, 0, 1, 1], [], []>} : vector<16x32xf32>, vector<32x32xf32>, vector<16x32xf32> -> vector<16x32xf32>
    %457 = vector.extract_strided_slice %2 {offsets = [0, 0], sizes = [1, 32], strides = [1, 1]} : vector<27x32xf32> to vector<1x32xf32>
    %458 = vector.broadcast %457 : vector<1x32xf32> to vector<16x32xf32>
    %459 = arith.addf %456, %458 : vector<16x32xf32>
    %c1_154 = arith.constant 1 : index
    %c0_155 = arith.constant 0 : index
    %c0_156 = arith.constant 0 : index
    %460 = vector.load %arg4[%c1_154, %c0_155, %c0_156] : memref<12x32x32xf32, #tpu.memory_space<vmem>>, vector<1x32x32xf32>
    %461 = vector.shape_cast %460 : vector<1x32x32xf32> to vector<32x32xf32>
    %cst_157 = arith.constant dense<0.000000e+00> : vector<16x32xf32>
    %462 = tpu.matmul %453, %461, %cst_157 {dimension_numbers = #tpu.dot_dimension_numbers<[1], [0], [0], [1], [0, 0, 1, 1], [], []>} : vector<16x32xf32>, vector<32x32xf32>, vector<16x32xf32> -> vector<16x32xf32>
    %463 = vector.extract_strided_slice %2 {offsets = [1, 0], sizes = [1, 32], strides = [1, 1]} : vector<27x32xf32> to vector<1x32xf32>
    %464 = vector.broadcast %463 : vector<1x32xf32> to vector<16x32xf32>
    %465 = arith.addf %462, %464 : vector<16x32xf32>
    %c2_158 = arith.constant 2 : index
    %c0_159 = arith.constant 0 : index
    %c0_160 = arith.constant 0 : index
    %466 = vector.load %arg4[%c2_158, %c0_159, %c0_160] : memref<12x32x32xf32, #tpu.memory_space<vmem>>, vector<1x32x32xf32>
    %467 = vector.shape_cast %466 : vector<1x32x32xf32> to vector<32x32xf32>
    %cst_161 = arith.constant dense<0.000000e+00> : vector<16x32xf32>
    %468 = tpu.matmul %453, %467, %cst_161 {dimension_numbers = #tpu.dot_dimension_numbers<[1], [0], [0], [1], [0, 0, 1, 1], [], []>} : vector<16x32xf32>, vector<32x32xf32>, vector<16x32xf32> -> vector<16x32xf32>
    %469 = vector.extract_strided_slice %2 {offsets = [2, 0], sizes = [1, 32], strides = [1, 1]} : vector<27x32xf32> to vector<1x32xf32>
    %470 = vector.broadcast %469 : vector<1x32xf32> to vector<16x32xf32>
    %471 = arith.addf %468, %470 : vector<16x32xf32>
    %472 = tpu.transpose %465, [1, 0] : vector<16x32xf32> -> vector<32x16xf32>
    %473 = vector.extract_strided_slice %459 {offsets = [0, 0], sizes = [16, 8], strides = [1, 1]} : vector<16x32xf32> to vector<16x8xf32>
    %474 = vector.extract_strided_slice %472 {offsets = [0, 0], sizes = [8, 16], strides = [1, 1]} : vector<32x16xf32> to vector<8x16xf32>
    %cst_162 = arith.constant dense<0.000000e+00> : vector<16x16xf32>
    %475 = tpu.matmul %473, %474, %cst_162 {dimension_numbers = #tpu.dot_dimension_numbers<[1], [0], [0], [1], [0, 0, 1, 1], [], []>} : vector<16x8xf32>, vector<8x16xf32>, vector<16x16xf32> -> vector<16x16xf32>
    %cst_163 = arith.constant dense<0xFF800000> : vector<16xf32>
    %476 = vector.multi_reduction <maximumf>, %475, %cst_163 [1] : vector<16x16xf32> to vector<16xf32>
    %477 = vector.shape_cast %476 : vector<16xf32> to vector<16x1xf32>
    %478 = vector.broadcast %477 : vector<16x1xf32> to vector<16x16xf32>
    %479 = arith.subf %475, %478 : vector<16x16xf32>
    %480 = math.exp %479 : vector<16x16xf32>
    %cst_164 = arith.constant dense<0.000000e+00> : vector<16xf32>
    %481 = vector.multi_reduction <add>, %480, %cst_164 [1] : vector<16x16xf32> to vector<16xf32>
    %482 = vector.shape_cast %481 : vector<16xf32> to vector<16x1xf32>
    %483 = tpu.reciprocal %482 {approx = true} : vector<16x1xf32> -> vector<16x1xf32>
    %484 = vector.broadcast %483 : vector<16x1xf32> to vector<16x16xf32>
    %485 = arith.mulf %480, %484 : vector<16x16xf32>
    %486 = vector.extract_strided_slice %471 {offsets = [0, 0], sizes = [16, 8], strides = [1, 1]} : vector<16x32xf32> to vector<16x8xf32>
    %cst_165 = arith.constant dense<0.000000e+00> : vector<16x8xf32>
    %487 = tpu.matmul %485, %486, %cst_165 {dimension_numbers = #tpu.dot_dimension_numbers<[1], [0], [0], [1], [0, 0, 1, 1], [], []>} : vector<16x16xf32>, vector<16x8xf32>, vector<16x8xf32> -> vector<16x8xf32>
    %488 = vector.extract_strided_slice %459 {offsets = [0, 8], sizes = [16, 8], strides = [1, 1]} : vector<16x32xf32> to vector<16x8xf32>
    %489 = vector.extract_strided_slice %472 {offsets = [8, 0], sizes = [8, 16], strides = [1, 1]} : vector<32x16xf32> to vector<8x16xf32>
    %cst_166 = arith.constant dense<0.000000e+00> : vector<16x16xf32>
    %490 = tpu.matmul %488, %489, %cst_166 {dimension_numbers = #tpu.dot_dimension_numbers<[1], [0], [0], [1], [0, 0, 1, 1], [], []>} : vector<16x8xf32>, vector<8x16xf32>, vector<16x16xf32> -> vector<16x16xf32>
    %cst_167 = arith.constant dense<0xFF800000> : vector<16xf32>
    %491 = vector.multi_reduction <maximumf>, %490, %cst_167 [1] : vector<16x16xf32> to vector<16xf32>
    %492 = vector.shape_cast %491 : vector<16xf32> to vector<16x1xf32>
    %493 = vector.broadcast %492 : vector<16x1xf32> to vector<16x16xf32>
    %494 = arith.subf %490, %493 : vector<16x16xf32>
    %495 = math.exp %494 : vector<16x16xf32>
    %cst_168 = arith.constant dense<0.000000e+00> : vector<16xf32>
    %496 = vector.multi_reduction <add>, %495, %cst_168 [1] : vector<16x16xf32> to vector<16xf32>
    %497 = vector.shape_cast %496 : vector<16xf32> to vector<16x1xf32>
    %498 = tpu.reciprocal %497 {approx = true} : vector<16x1xf32> -> vector<16x1xf32>
    %499 = vector.broadcast %498 : vector<16x1xf32> to vector<16x16xf32>
    %500 = arith.mulf %495, %499 : vector<16x16xf32>
    %501 = vector.extract_strided_slice %471 {offsets = [0, 8], sizes = [16, 8], strides = [1, 1]} : vector<16x32xf32> to vector<16x8xf32>
    %cst_169 = arith.constant dense<0.000000e+00> : vector<16x8xf32>
    %502 = tpu.matmul %500, %501, %cst_169 {dimension_numbers = #tpu.dot_dimension_numbers<[1], [0], [0], [1], [0, 0, 1, 1], [], []>} : vector<16x16xf32>, vector<16x8xf32>, vector<16x8xf32> -> vector<16x8xf32>
    %503 = vector.extract_strided_slice %459 {offsets = [0, 16], sizes = [16, 8], strides = [1, 1]} : vector<16x32xf32> to vector<16x8xf32>
    %504 = vector.extract_strided_slice %472 {offsets = [16, 0], sizes = [8, 16], strides = [1, 1]} : vector<32x16xf32> to vector<8x16xf32>
    %cst_170 = arith.constant dense<0.000000e+00> : vector<16x16xf32>
    %505 = tpu.matmul %503, %504, %cst_170 {dimension_numbers = #tpu.dot_dimension_numbers<[1], [0], [0], [1], [0, 0, 1, 1], [], []>} : vector<16x8xf32>, vector<8x16xf32>, vector<16x16xf32> -> vector<16x16xf32>
    %cst_171 = arith.constant dense<0xFF800000> : vector<16xf32>
    %506 = vector.multi_reduction <maximumf>, %505, %cst_171 [1] : vector<16x16xf32> to vector<16xf32>
    %507 = vector.shape_cast %506 : vector<16xf32> to vector<16x1xf32>
    %508 = vector.broadcast %507 : vector<16x1xf32> to vector<16x16xf32>
    %509 = arith.subf %505, %508 : vector<16x16xf32>
    %510 = math.exp %509 : vector<16x16xf32>
    %cst_172 = arith.constant dense<0.000000e+00> : vector<16xf32>
    %511 = vector.multi_reduction <add>, %510, %cst_172 [1] : vector<16x16xf32> to vector<16xf32>
    %512 = vector.shape_cast %511 : vector<16xf32> to vector<16x1xf32>
    %513 = tpu.reciprocal %512 {approx = true} : vector<16x1xf32> -> vector<16x1xf32>
    %514 = vector.broadcast %513 : vector<16x1xf32> to vector<16x16xf32>
    %515 = arith.mulf %510, %514 : vector<16x16xf32>
    %516 = vector.extract_strided_slice %471 {offsets = [0, 16], sizes = [16, 8], strides = [1, 1]} : vector<16x32xf32> to vector<16x8xf32>
    %cst_173 = arith.constant dense<0.000000e+00> : vector<16x8xf32>
    %517 = tpu.matmul %515, %516, %cst_173 {dimension_numbers = #tpu.dot_dimension_numbers<[1], [0], [0], [1], [0, 0, 1, 1], [], []>} : vector<16x16xf32>, vector<16x8xf32>, vector<16x8xf32> -> vector<16x8xf32>
    %518 = vector.extract_strided_slice %459 {offsets = [0, 24], sizes = [16, 8], strides = [1, 1]} : vector<16x32xf32> to vector<16x8xf32>
    %519 = vector.extract_strided_slice %472 {offsets = [24, 0], sizes = [8, 16], strides = [1, 1]} : vector<32x16xf32> to vector<8x16xf32>
    %cst_174 = arith.constant dense<0.000000e+00> : vector<16x16xf32>
    %520 = tpu.matmul %518, %519, %cst_174 {dimension_numbers = #tpu.dot_dimension_numbers<[1], [0], [0], [1], [0, 0, 1, 1], [], []>} : vector<16x8xf32>, vector<8x16xf32>, vector<16x16xf32> -> vector<16x16xf32>
    %cst_175 = arith.constant dense<0xFF800000> : vector<16xf32>
    %521 = vector.multi_reduction <maximumf>, %520, %cst_175 [1] : vector<16x16xf32> to vector<16xf32>
    %522 = vector.shape_cast %521 : vector<16xf32> to vector<16x1xf32>
    %523 = vector.broadcast %522 : vector<16x1xf32> to vector<16x16xf32>
    %524 = arith.subf %520, %523 : vector<16x16xf32>
    %525 = math.exp %524 : vector<16x16xf32>
    %cst_176 = arith.constant dense<0.000000e+00> : vector<16xf32>
    %526 = vector.multi_reduction <add>, %525, %cst_176 [1] : vector<16x16xf32> to vector<16xf32>
    %527 = vector.shape_cast %526 : vector<16xf32> to vector<16x1xf32>
    %528 = tpu.reciprocal %527 {approx = true} : vector<16x1xf32> -> vector<16x1xf32>
    %529 = vector.broadcast %528 : vector<16x1xf32> to vector<16x16xf32>
    %530 = arith.mulf %525, %529 : vector<16x16xf32>
    %531 = vector.extract_strided_slice %471 {offsets = [0, 24], sizes = [16, 8], strides = [1, 1]} : vector<16x32xf32> to vector<16x8xf32>
    %cst_177 = arith.constant dense<0.000000e+00> : vector<16x8xf32>
    %532 = tpu.matmul %530, %531, %cst_177 {dimension_numbers = #tpu.dot_dimension_numbers<[1], [0], [0], [1], [0, 0, 1, 1], [], []>} : vector<16x16xf32>, vector<16x8xf32>, vector<16x8xf32> -> vector<16x8xf32>
    %533 = tpu.concatenate %487, %502, %517, %532 in 1 : vector<16x8xf32>, vector<16x8xf32>, vector<16x8xf32>, vector<16x8xf32> -> vector<16x32xf32>
    %c3_178 = arith.constant 3 : index
    %c0_179 = arith.constant 0 : index
    %c0_180 = arith.constant 0 : index
    %534 = vector.load %arg4[%c3_178, %c0_179, %c0_180] : memref<12x32x32xf32, #tpu.memory_space<vmem>>, vector<1x32x32xf32>
    %535 = vector.shape_cast %534 : vector<1x32x32xf32> to vector<32x32xf32>
    %cst_181 = arith.constant dense<0.000000e+00> : vector<16x32xf32>
    %536 = tpu.matmul %533, %535, %cst_181 {dimension_numbers = #tpu.dot_dimension_numbers<[1], [0], [0], [1], [0, 0, 1, 1], [], []>} : vector<16x32xf32>, vector<32x32xf32>, vector<16x32xf32> -> vector<16x32xf32>
    %537 = vector.extract_strided_slice %2 {offsets = [3, 0], sizes = [1, 32], strides = [1, 1]} : vector<27x32xf32> to vector<1x32xf32>
    %538 = vector.broadcast %537 : vector<1x32xf32> to vector<16x32xf32>
    %539 = arith.addf %536, %538 : vector<16x32xf32>
    %540 = arith.addf %453, %539 : vector<16x32xf32>
    %cst_182 = arith.constant dense<0.000000e+00> : vector<16xf32>
    %541 = vector.multi_reduction <add>, %540, %cst_182 [1] : vector<16x32xf32> to vector<16xf32>
    %542 = vector.shape_cast %541 : vector<16xf32> to vector<16x1xf32>
    %cst_183 = arith.constant 3.200000e+01 : f32
    %543 = vector.broadcast %cst_183 : f32 to vector<16x1xf32>
    %544 = arith.divf %542, %543 : vector<16x1xf32>
    %545 = vector.broadcast %544 : vector<16x1xf32> to vector<16x32xf32>
    %546 = arith.subf %540, %545 : vector<16x32xf32>
    %547 = arith.mulf %546, %546 : vector<16x32xf32>
    %cst_184 = arith.constant dense<0.000000e+00> : vector<16xf32>
    %548 = vector.multi_reduction <add>, %547, %cst_184 [1] : vector<16x32xf32> to vector<16xf32>
    %549 = vector.shape_cast %548 : vector<16xf32> to vector<16x1xf32>
    %cst_185 = arith.constant 3.200000e+01 : f32
    %550 = vector.broadcast %cst_185 : f32 to vector<16x1xf32>
    %551 = arith.divf %549, %550 : vector<16x1xf32>
    %552 = vector.broadcast %544 : vector<16x1xf32> to vector<16x32xf32>
    %553 = arith.subf %540, %552 : vector<16x32xf32>
    %cst_186 = arith.constant 9.99999974E-6 : f32
    %554 = vector.broadcast %cst_186 : f32 to vector<16x1xf32>
    %555 = arith.addf %551, %554 : vector<16x1xf32>
    %556 = math.rsqrt %555 : vector<16x1xf32>
    %557 = vector.broadcast %556 : vector<16x1xf32> to vector<16x32xf32>
    %558 = arith.mulf %553, %557 : vector<16x32xf32>
    %559 = vector.extract_strided_slice %2 {offsets = [4, 0], sizes = [1, 32], strides = [1, 1]} : vector<27x32xf32> to vector<1x32xf32>
    %560 = vector.broadcast %559 : vector<1x32xf32> to vector<16x32xf32>
    %561 = arith.mulf %558, %560 : vector<16x32xf32>
    %562 = vector.extract_strided_slice %2 {offsets = [5, 0], sizes = [1, 32], strides = [1, 1]} : vector<27x32xf32> to vector<1x32xf32>
    %563 = vector.broadcast %562 : vector<1x32xf32> to vector<16x32xf32>
    %564 = arith.addf %561, %563 : vector<16x32xf32>
    %c0_187 = arith.constant 0 : index
    %c0_188 = arith.constant 0 : index
    %c0_189 = arith.constant 0 : index
    %565 = vector.load %arg5[%c0_187, %c0_188, %c0_189] : memref<2x32x64xf32, #tpu.memory_space<vmem>>, vector<1x32x64xf32>
    %566 = vector.shape_cast %565 : vector<1x32x64xf32> to vector<32x64xf32>
    %cst_190 = arith.constant dense<0.000000e+00> : vector<16x64xf32>
    %567 = tpu.matmul %564, %566, %cst_190 {dimension_numbers = #tpu.dot_dimension_numbers<[1], [0], [0], [1], [0, 0, 1, 1], [], []>} : vector<16x32xf32>, vector<32x64xf32>, vector<16x64xf32> -> vector<16x64xf32>
    %568 = vector.extract_strided_slice %3 {offsets = [0, 0], sizes = [1, 64], strides = [1, 1]} : vector<2x64xf32> to vector<1x64xf32>
    %569 = vector.broadcast %568 : vector<1x64xf32> to vector<16x64xf32>
    %570 = arith.addf %567, %569 : vector<16x64xf32>
    %cst_191 = arith.constant 0.000000e+00 : f32
    %571 = vector.broadcast %cst_191 : f32 to vector<16x64xf32>
    %572 = arith.maximumf %570, %571 : vector<16x64xf32>
    %c0_192 = arith.constant 0 : index
    %c0_193 = arith.constant 0 : index
    %c0_194 = arith.constant 0 : index
    %573 = vector.load %arg6[%c0_192, %c0_193, %c0_194] : memref<2x64x32xf32, #tpu.memory_space<vmem>>, vector<1x64x32xf32>
    %574 = vector.shape_cast %573 : vector<1x64x32xf32> to vector<64x32xf32>
    %cst_195 = arith.constant dense<0.000000e+00> : vector<16x32xf32>
    %575 = tpu.matmul %572, %574, %cst_195 {dimension_numbers = #tpu.dot_dimension_numbers<[1], [0], [0], [1], [0, 0, 1, 1], [], []>} : vector<16x64xf32>, vector<64x32xf32>, vector<16x32xf32> -> vector<16x32xf32>
    %576 = vector.extract_strided_slice %2 {offsets = [6, 0], sizes = [1, 32], strides = [1, 1]} : vector<27x32xf32> to vector<1x32xf32>
    %577 = vector.broadcast %576 : vector<1x32xf32> to vector<16x32xf32>
    %578 = arith.addf %575, %577 : vector<16x32xf32>
    %579 = arith.addf %564, %578 : vector<16x32xf32>
    %cst_196 = arith.constant dense<0.000000e+00> : vector<16xf32>
    %580 = vector.multi_reduction <add>, %579, %cst_196 [1] : vector<16x32xf32> to vector<16xf32>
    %581 = vector.shape_cast %580 : vector<16xf32> to vector<16x1xf32>
    %cst_197 = arith.constant 3.200000e+01 : f32
    %582 = vector.broadcast %cst_197 : f32 to vector<16x1xf32>
    %583 = arith.divf %581, %582 : vector<16x1xf32>
    %584 = vector.broadcast %583 : vector<16x1xf32> to vector<16x32xf32>
    %585 = arith.subf %579, %584 : vector<16x32xf32>
    %586 = arith.mulf %585, %585 : vector<16x32xf32>
    %cst_198 = arith.constant dense<0.000000e+00> : vector<16xf32>
    %587 = vector.multi_reduction <add>, %586, %cst_198 [1] : vector<16x32xf32> to vector<16xf32>
    %588 = vector.shape_cast %587 : vector<16xf32> to vector<16x1xf32>
    %cst_199 = arith.constant 3.200000e+01 : f32
    %589 = vector.broadcast %cst_199 : f32 to vector<16x1xf32>
    %590 = arith.divf %588, %589 : vector<16x1xf32>
    %591 = vector.broadcast %583 : vector<16x1xf32> to vector<16x32xf32>
    %592 = arith.subf %579, %591 : vector<16x32xf32>
    %cst_200 = arith.constant 9.99999974E-6 : f32
    %593 = vector.broadcast %cst_200 : f32 to vector<16x1xf32>
    %594 = arith.addf %590, %593 : vector<16x1xf32>
    %595 = math.rsqrt %594 : vector<16x1xf32>
    %596 = vector.broadcast %595 : vector<16x1xf32> to vector<16x32xf32>
    %597 = arith.mulf %592, %596 : vector<16x32xf32>
    %598 = vector.extract_strided_slice %2 {offsets = [7, 0], sizes = [1, 32], strides = [1, 1]} : vector<27x32xf32> to vector<1x32xf32>
    %599 = vector.broadcast %598 : vector<1x32xf32> to vector<16x32xf32>
    %600 = arith.mulf %597, %599 : vector<16x32xf32>
    %601 = vector.extract_strided_slice %2 {offsets = [8, 0], sizes = [1, 32], strides = [1, 1]} : vector<27x32xf32> to vector<1x32xf32>
    %602 = vector.broadcast %601 : vector<1x32xf32> to vector<16x32xf32>
    %603 = arith.addf %600, %602 : vector<16x32xf32>
    %c4_201 = arith.constant 4 : index
    %c0_202 = arith.constant 0 : index
    %c0_203 = arith.constant 0 : index
    %604 = vector.load %arg4[%c4_201, %c0_202, %c0_203] : memref<12x32x32xf32, #tpu.memory_space<vmem>>, vector<1x32x32xf32>
    %605 = vector.shape_cast %604 : vector<1x32x32xf32> to vector<32x32xf32>
    %cst_204 = arith.constant dense<0.000000e+00> : vector<4x32xf32>
    %606 = tpu.matmul %1, %605, %cst_204 {dimension_numbers = #tpu.dot_dimension_numbers<[1], [0], [0], [1], [0, 0, 1, 1], [], []>} : vector<4x32xf32>, vector<32x32xf32>, vector<4x32xf32> -> vector<4x32xf32>
    %607 = vector.extract_strided_slice %2 {offsets = [9, 0], sizes = [1, 32], strides = [1, 1]} : vector<27x32xf32> to vector<1x32xf32>
    %608 = vector.broadcast %607 : vector<1x32xf32> to vector<4x32xf32>
    %609 = arith.addf %606, %608 : vector<4x32xf32>
    %c5_205 = arith.constant 5 : index
    %c0_206 = arith.constant 0 : index
    %c0_207 = arith.constant 0 : index
    %610 = vector.load %arg4[%c5_205, %c0_206, %c0_207] : memref<12x32x32xf32, #tpu.memory_space<vmem>>, vector<1x32x32xf32>
    %611 = vector.shape_cast %610 : vector<1x32x32xf32> to vector<32x32xf32>
    %cst_208 = arith.constant dense<0.000000e+00> : vector<4x32xf32>
    %612 = tpu.matmul %1, %611, %cst_208 {dimension_numbers = #tpu.dot_dimension_numbers<[1], [0], [0], [1], [0, 0, 1, 1], [], []>} : vector<4x32xf32>, vector<32x32xf32>, vector<4x32xf32> -> vector<4x32xf32>
    %613 = vector.extract_strided_slice %2 {offsets = [10, 0], sizes = [1, 32], strides = [1, 1]} : vector<27x32xf32> to vector<1x32xf32>
    %614 = vector.broadcast %613 : vector<1x32xf32> to vector<4x32xf32>
    %615 = arith.addf %612, %614 : vector<4x32xf32>
    %c6_209 = arith.constant 6 : index
    %c0_210 = arith.constant 0 : index
    %c0_211 = arith.constant 0 : index
    %616 = vector.load %arg4[%c6_209, %c0_210, %c0_211] : memref<12x32x32xf32, #tpu.memory_space<vmem>>, vector<1x32x32xf32>
    %617 = vector.shape_cast %616 : vector<1x32x32xf32> to vector<32x32xf32>
    %cst_212 = arith.constant dense<0.000000e+00> : vector<4x32xf32>
    %618 = tpu.matmul %1, %617, %cst_212 {dimension_numbers = #tpu.dot_dimension_numbers<[1], [0], [0], [1], [0, 0, 1, 1], [], []>} : vector<4x32xf32>, vector<32x32xf32>, vector<4x32xf32> -> vector<4x32xf32>
    %619 = vector.extract_strided_slice %2 {offsets = [11, 0], sizes = [1, 32], strides = [1, 1]} : vector<27x32xf32> to vector<1x32xf32>
    %620 = vector.broadcast %619 : vector<1x32xf32> to vector<4x32xf32>
    %621 = arith.addf %618, %620 : vector<4x32xf32>
    %622 = tpu.transpose %615, [1, 0] : vector<4x32xf32> -> vector<32x4xf32>
    %623 = vector.extract_strided_slice %609 {offsets = [0, 0], sizes = [4, 8], strides = [1, 1]} : vector<4x32xf32> to vector<4x8xf32>
    %624 = vector.extract_strided_slice %622 {offsets = [0, 0], sizes = [8, 4], strides = [1, 1]} : vector<32x4xf32> to vector<8x4xf32>
    %cst_213 = arith.constant dense<0.000000e+00> : vector<4x4xf32>
    %625 = tpu.matmul %623, %624, %cst_213 {dimension_numbers = #tpu.dot_dimension_numbers<[1], [0], [0], [1], [0, 0, 1, 1], [], []>} : vector<4x8xf32>, vector<8x4xf32>, vector<4x4xf32> -> vector<4x4xf32>
    %cst_214 = arith.constant dense<0xFF800000> : vector<4xf32>
    %626 = vector.multi_reduction <maximumf>, %625, %cst_214 [1] : vector<4x4xf32> to vector<4xf32>
    %627 = vector.shape_cast %626 : vector<4xf32> to vector<4x1xf32>
    %628 = vector.broadcast %627 : vector<4x1xf32> to vector<4x4xf32>
    %629 = arith.subf %625, %628 : vector<4x4xf32>
    %630 = math.exp %629 : vector<4x4xf32>
    %cst_215 = arith.constant dense<0.000000e+00> : vector<4xf32>
    %631 = vector.multi_reduction <add>, %630, %cst_215 [1] : vector<4x4xf32> to vector<4xf32>
    %632 = vector.shape_cast %631 : vector<4xf32> to vector<4x1xf32>
    %633 = tpu.reciprocal %632 {approx = true} : vector<4x1xf32> -> vector<4x1xf32>
    %634 = vector.broadcast %633 : vector<4x1xf32> to vector<4x4xf32>
    %635 = arith.mulf %630, %634 : vector<4x4xf32>
    %636 = vector.extract_strided_slice %621 {offsets = [0, 0], sizes = [4, 8], strides = [1, 1]} : vector<4x32xf32> to vector<4x8xf32>
    %cst_216 = arith.constant dense<0.000000e+00> : vector<4x8xf32>
    %637 = tpu.matmul %635, %636, %cst_216 {dimension_numbers = #tpu.dot_dimension_numbers<[1], [0], [0], [1], [0, 0, 1, 1], [], []>} : vector<4x4xf32>, vector<4x8xf32>, vector<4x8xf32> -> vector<4x8xf32>
    %638 = vector.extract_strided_slice %609 {offsets = [0, 8], sizes = [4, 8], strides = [1, 1]} : vector<4x32xf32> to vector<4x8xf32>
    %639 = vector.extract_strided_slice %622 {offsets = [8, 0], sizes = [8, 4], strides = [1, 1]} : vector<32x4xf32> to vector<8x4xf32>
    %cst_217 = arith.constant dense<0.000000e+00> : vector<4x4xf32>
    %640 = tpu.matmul %638, %639, %cst_217 {dimension_numbers = #tpu.dot_dimension_numbers<[1], [0], [0], [1], [0, 0, 1, 1], [], []>} : vector<4x8xf32>, vector<8x4xf32>, vector<4x4xf32> -> vector<4x4xf32>
    %cst_218 = arith.constant dense<0xFF800000> : vector<4xf32>
    %641 = vector.multi_reduction <maximumf>, %640, %cst_218 [1] : vector<4x4xf32> to vector<4xf32>
    %642 = vector.shape_cast %641 : vector<4xf32> to vector<4x1xf32>
    %643 = vector.broadcast %642 : vector<4x1xf32> to vector<4x4xf32>
    %644 = arith.subf %640, %643 : vector<4x4xf32>
    %645 = math.exp %644 : vector<4x4xf32>
    %cst_219 = arith.constant dense<0.000000e+00> : vector<4xf32>
    %646 = vector.multi_reduction <add>, %645, %cst_219 [1] : vector<4x4xf32> to vector<4xf32>
    %647 = vector.shape_cast %646 : vector<4xf32> to vector<4x1xf32>
    %648 = tpu.reciprocal %647 {approx = true} : vector<4x1xf32> -> vector<4x1xf32>
    %649 = vector.broadcast %648 : vector<4x1xf32> to vector<4x4xf32>
    %650 = arith.mulf %645, %649 : vector<4x4xf32>
    %651 = vector.extract_strided_slice %621 {offsets = [0, 8], sizes = [4, 8], strides = [1, 1]} : vector<4x32xf32> to vector<4x8xf32>
    %cst_220 = arith.constant dense<0.000000e+00> : vector<4x8xf32>
    %652 = tpu.matmul %650, %651, %cst_220 {dimension_numbers = #tpu.dot_dimension_numbers<[1], [0], [0], [1], [0, 0, 1, 1], [], []>} : vector<4x4xf32>, vector<4x8xf32>, vector<4x8xf32> -> vector<4x8xf32>
    %653 = vector.extract_strided_slice %609 {offsets = [0, 16], sizes = [4, 8], strides = [1, 1]} : vector<4x32xf32> to vector<4x8xf32>
    %654 = vector.extract_strided_slice %622 {offsets = [16, 0], sizes = [8, 4], strides = [1, 1]} : vector<32x4xf32> to vector<8x4xf32>
    %cst_221 = arith.constant dense<0.000000e+00> : vector<4x4xf32>
    %655 = tpu.matmul %653, %654, %cst_221 {dimension_numbers = #tpu.dot_dimension_numbers<[1], [0], [0], [1], [0, 0, 1, 1], [], []>} : vector<4x8xf32>, vector<8x4xf32>, vector<4x4xf32> -> vector<4x4xf32>
    %cst_222 = arith.constant dense<0xFF800000> : vector<4xf32>
    %656 = vector.multi_reduction <maximumf>, %655, %cst_222 [1] : vector<4x4xf32> to vector<4xf32>
    %657 = vector.shape_cast %656 : vector<4xf32> to vector<4x1xf32>
    %658 = vector.broadcast %657 : vector<4x1xf32> to vector<4x4xf32>
    %659 = arith.subf %655, %658 : vector<4x4xf32>
    %660 = math.exp %659 : vector<4x4xf32>
    %cst_223 = arith.constant dense<0.000000e+00> : vector<4xf32>
    %661 = vector.multi_reduction <add>, %660, %cst_223 [1] : vector<4x4xf32> to vector<4xf32>
    %662 = vector.shape_cast %661 : vector<4xf32> to vector<4x1xf32>
    %663 = tpu.reciprocal %662 {approx = true} : vector<4x1xf32> -> vector<4x1xf32>
    %664 = vector.broadcast %663 : vector<4x1xf32> to vector<4x4xf32>
    %665 = arith.mulf %660, %664 : vector<4x4xf32>
    %666 = vector.extract_strided_slice %621 {offsets = [0, 16], sizes = [4, 8], strides = [1, 1]} : vector<4x32xf32> to vector<4x8xf32>
    %cst_224 = arith.constant dense<0.000000e+00> : vector<4x8xf32>
    %667 = tpu.matmul %665, %666, %cst_224 {dimension_numbers = #tpu.dot_dimension_numbers<[1], [0], [0], [1], [0, 0, 1, 1], [], []>} : vector<4x4xf32>, vector<4x8xf32>, vector<4x8xf32> -> vector<4x8xf32>
    %668 = vector.extract_strided_slice %609 {offsets = [0, 24], sizes = [4, 8], strides = [1, 1]} : vector<4x32xf32> to vector<4x8xf32>
    %669 = vector.extract_strided_slice %622 {offsets = [24, 0], sizes = [8, 4], strides = [1, 1]} : vector<32x4xf32> to vector<8x4xf32>
    %cst_225 = arith.constant dense<0.000000e+00> : vector<4x4xf32>
    %670 = tpu.matmul %668, %669, %cst_225 {dimension_numbers = #tpu.dot_dimension_numbers<[1], [0], [0], [1], [0, 0, 1, 1], [], []>} : vector<4x8xf32>, vector<8x4xf32>, vector<4x4xf32> -> vector<4x4xf32>
    %cst_226 = arith.constant dense<0xFF800000> : vector<4xf32>
    %671 = vector.multi_reduction <maximumf>, %670, %cst_226 [1] : vector<4x4xf32> to vector<4xf32>
    %672 = vector.shape_cast %671 : vector<4xf32> to vector<4x1xf32>
    %673 = vector.broadcast %672 : vector<4x1xf32> to vector<4x4xf32>
    %674 = arith.subf %670, %673 : vector<4x4xf32>
    %675 = math.exp %674 : vector<4x4xf32>
    %cst_227 = arith.constant dense<0.000000e+00> : vector<4xf32>
    %676 = vector.multi_reduction <add>, %675, %cst_227 [1] : vector<4x4xf32> to vector<4xf32>
    %677 = vector.shape_cast %676 : vector<4xf32> to vector<4x1xf32>
    %678 = tpu.reciprocal %677 {approx = true} : vector<4x1xf32> -> vector<4x1xf32>
    %679 = vector.broadcast %678 : vector<4x1xf32> to vector<4x4xf32>
    %680 = arith.mulf %675, %679 : vector<4x4xf32>
    %681 = vector.extract_strided_slice %621 {offsets = [0, 24], sizes = [4, 8], strides = [1, 1]} : vector<4x32xf32> to vector<4x8xf32>
    %cst_228 = arith.constant dense<0.000000e+00> : vector<4x8xf32>
    %682 = tpu.matmul %680, %681, %cst_228 {dimension_numbers = #tpu.dot_dimension_numbers<[1], [0], [0], [1], [0, 0, 1, 1], [], []>} : vector<4x4xf32>, vector<4x8xf32>, vector<4x8xf32> -> vector<4x8xf32>
    %683 = tpu.concatenate %637, %652, %667, %682 in 1 : vector<4x8xf32>, vector<4x8xf32>, vector<4x8xf32>, vector<4x8xf32> -> vector<4x32xf32>
    %c7_229 = arith.constant 7 : index
    %c0_230 = arith.constant 0 : index
    %c0_231 = arith.constant 0 : index
    %684 = vector.load %arg4[%c7_229, %c0_230, %c0_231] : memref<12x32x32xf32, #tpu.memory_space<vmem>>, vector<1x32x32xf32>
    %685 = vector.shape_cast %684 : vector<1x32x32xf32> to vector<32x32xf32>
    %cst_232 = arith.constant dense<0.000000e+00> : vector<4x32xf32>
    %686 = tpu.matmul %683, %685, %cst_232 {dimension_numbers = #tpu.dot_dimension_numbers<[1], [0], [0], [1], [0, 0, 1, 1], [], []>} : vector<4x32xf32>, vector<32x32xf32>, vector<4x32xf32> -> vector<4x32xf32>
    %687 = vector.extract_strided_slice %2 {offsets = [12, 0], sizes = [1, 32], strides = [1, 1]} : vector<27x32xf32> to vector<1x32xf32>
    %688 = vector.broadcast %687 : vector<1x32xf32> to vector<4x32xf32>
    %689 = arith.addf %686, %688 : vector<4x32xf32>
    %690 = arith.addf %1, %689 : vector<4x32xf32>
    %cst_233 = arith.constant dense<0.000000e+00> : vector<4xf32>
    %691 = vector.multi_reduction <add>, %690, %cst_233 [1] : vector<4x32xf32> to vector<4xf32>
    %692 = vector.shape_cast %691 : vector<4xf32> to vector<4x1xf32>
    %cst_234 = arith.constant 3.200000e+01 : f32
    %693 = vector.broadcast %cst_234 : f32 to vector<4x1xf32>
    %694 = arith.divf %692, %693 : vector<4x1xf32>
    %695 = vector.broadcast %694 : vector<4x1xf32> to vector<4x32xf32>
    %696 = arith.subf %690, %695 : vector<4x32xf32>
    %697 = arith.mulf %696, %696 : vector<4x32xf32>
    %cst_235 = arith.constant dense<0.000000e+00> : vector<4xf32>
    %698 = vector.multi_reduction <add>, %697, %cst_235 [1] : vector<4x32xf32> to vector<4xf32>
    %699 = vector.shape_cast %698 : vector<4xf32> to vector<4x1xf32>
    %cst_236 = arith.constant 3.200000e+01 : f32
    %700 = vector.broadcast %cst_236 : f32 to vector<4x1xf32>
    %701 = arith.divf %699, %700 : vector<4x1xf32>
    %702 = vector.broadcast %694 : vector<4x1xf32> to vector<4x32xf32>
    %703 = arith.subf %690, %702 : vector<4x32xf32>
    %cst_237 = arith.constant 9.99999974E-6 : f32
    %704 = vector.broadcast %cst_237 : f32 to vector<4x1xf32>
    %705 = arith.addf %701, %704 : vector<4x1xf32>
    %706 = math.rsqrt %705 : vector<4x1xf32>
    %707 = vector.broadcast %706 : vector<4x1xf32> to vector<4x32xf32>
    %708 = arith.mulf %703, %707 : vector<4x32xf32>
    %709 = vector.extract_strided_slice %2 {offsets = [13, 0], sizes = [1, 32], strides = [1, 1]} : vector<27x32xf32> to vector<1x32xf32>
    %710 = vector.broadcast %709 : vector<1x32xf32> to vector<4x32xf32>
    %711 = arith.mulf %708, %710 : vector<4x32xf32>
    %712 = vector.extract_strided_slice %2 {offsets = [14, 0], sizes = [1, 32], strides = [1, 1]} : vector<27x32xf32> to vector<1x32xf32>
    %713 = vector.broadcast %712 : vector<1x32xf32> to vector<4x32xf32>
    %714 = arith.addf %711, %713 : vector<4x32xf32>
    %c8_238 = arith.constant 8 : index
    %c0_239 = arith.constant 0 : index
    %c0_240 = arith.constant 0 : index
    %715 = vector.load %arg4[%c8_238, %c0_239, %c0_240] : memref<12x32x32xf32, #tpu.memory_space<vmem>>, vector<1x32x32xf32>
    %716 = vector.shape_cast %715 : vector<1x32x32xf32> to vector<32x32xf32>
    %cst_241 = arith.constant dense<0.000000e+00> : vector<4x32xf32>
    %717 = tpu.matmul %714, %716, %cst_241 {dimension_numbers = #tpu.dot_dimension_numbers<[1], [0], [0], [1], [0, 0, 1, 1], [], []>} : vector<4x32xf32>, vector<32x32xf32>, vector<4x32xf32> -> vector<4x32xf32>
    %718 = vector.extract_strided_slice %2 {offsets = [15, 0], sizes = [1, 32], strides = [1, 1]} : vector<27x32xf32> to vector<1x32xf32>
    %719 = vector.broadcast %718 : vector<1x32xf32> to vector<4x32xf32>
    %720 = arith.addf %717, %719 : vector<4x32xf32>
    %c9_242 = arith.constant 9 : index
    %c0_243 = arith.constant 0 : index
    %c0_244 = arith.constant 0 : index
    %721 = vector.load %arg4[%c9_242, %c0_243, %c0_244] : memref<12x32x32xf32, #tpu.memory_space<vmem>>, vector<1x32x32xf32>
    %722 = vector.shape_cast %721 : vector<1x32x32xf32> to vector<32x32xf32>
    %cst_245 = arith.constant dense<0.000000e+00> : vector<16x32xf32>
    %723 = tpu.matmul %603, %722, %cst_245 {dimension_numbers = #tpu.dot_dimension_numbers<[1], [0], [0], [1], [0, 0, 1, 1], [], []>} : vector<16x32xf32>, vector<32x32xf32>, vector<16x32xf32> -> vector<16x32xf32>
    %724 = vector.extract_strided_slice %2 {offsets = [16, 0], sizes = [1, 32], strides = [1, 1]} : vector<27x32xf32> to vector<1x32xf32>
    %725 = vector.broadcast %724 : vector<1x32xf32> to vector<16x32xf32>
    %726 = arith.addf %723, %725 : vector<16x32xf32>
    %c10_246 = arith.constant 10 : index
    %c0_247 = arith.constant 0 : index
    %c0_248 = arith.constant 0 : index
    %727 = vector.load %arg4[%c10_246, %c0_247, %c0_248] : memref<12x32x32xf32, #tpu.memory_space<vmem>>, vector<1x32x32xf32>
    %728 = vector.shape_cast %727 : vector<1x32x32xf32> to vector<32x32xf32>
    %cst_249 = arith.constant dense<0.000000e+00> : vector<16x32xf32>
    %729 = tpu.matmul %603, %728, %cst_249 {dimension_numbers = #tpu.dot_dimension_numbers<[1], [0], [0], [1], [0, 0, 1, 1], [], []>} : vector<16x32xf32>, vector<32x32xf32>, vector<16x32xf32> -> vector<16x32xf32>
    %730 = vector.extract_strided_slice %2 {offsets = [17, 0], sizes = [1, 32], strides = [1, 1]} : vector<27x32xf32> to vector<1x32xf32>
    %731 = vector.broadcast %730 : vector<1x32xf32> to vector<16x32xf32>
    %732 = arith.addf %729, %731 : vector<16x32xf32>
    %733 = tpu.transpose %726, [1, 0] : vector<16x32xf32> -> vector<32x16xf32>
    %734 = vector.extract_strided_slice %720 {offsets = [0, 0], sizes = [4, 8], strides = [1, 1]} : vector<4x32xf32> to vector<4x8xf32>
    %735 = vector.extract_strided_slice %733 {offsets = [0, 0], sizes = [8, 16], strides = [1, 1]} : vector<32x16xf32> to vector<8x16xf32>
    %cst_250 = arith.constant dense<0.000000e+00> : vector<4x16xf32>
    %736 = tpu.matmul %734, %735, %cst_250 {dimension_numbers = #tpu.dot_dimension_numbers<[1], [0], [0], [1], [0, 0, 1, 1], [], []>} : vector<4x8xf32>, vector<8x16xf32>, vector<4x16xf32> -> vector<4x16xf32>
    %cst_251 = arith.constant dense<0xFF800000> : vector<4xf32>
    %737 = vector.multi_reduction <maximumf>, %736, %cst_251 [1] : vector<4x16xf32> to vector<4xf32>
    %738 = vector.shape_cast %737 : vector<4xf32> to vector<4x1xf32>
    %739 = vector.broadcast %738 : vector<4x1xf32> to vector<4x16xf32>
    %740 = arith.subf %736, %739 : vector<4x16xf32>
    %741 = math.exp %740 : vector<4x16xf32>
    %cst_252 = arith.constant dense<0.000000e+00> : vector<4xf32>
    %742 = vector.multi_reduction <add>, %741, %cst_252 [1] : vector<4x16xf32> to vector<4xf32>
    %743 = vector.shape_cast %742 : vector<4xf32> to vector<4x1xf32>
    %744 = tpu.reciprocal %743 {approx = true} : vector<4x1xf32> -> vector<4x1xf32>
    %745 = vector.broadcast %744 : vector<4x1xf32> to vector<4x16xf32>
    %746 = arith.mulf %741, %745 : vector<4x16xf32>
    %747 = vector.extract_strided_slice %732 {offsets = [0, 0], sizes = [16, 8], strides = [1, 1]} : vector<16x32xf32> to vector<16x8xf32>
    %cst_253 = arith.constant dense<0.000000e+00> : vector<4x8xf32>
    %748 = tpu.matmul %746, %747, %cst_253 {dimension_numbers = #tpu.dot_dimension_numbers<[1], [0], [0], [1], [0, 0, 1, 1], [], []>} : vector<4x16xf32>, vector<16x8xf32>, vector<4x8xf32> -> vector<4x8xf32>
    %749 = vector.extract_strided_slice %720 {offsets = [0, 8], sizes = [4, 8], strides = [1, 1]} : vector<4x32xf32> to vector<4x8xf32>
    %750 = vector.extract_strided_slice %733 {offsets = [8, 0], sizes = [8, 16], strides = [1, 1]} : vector<32x16xf32> to vector<8x16xf32>
    %cst_254 = arith.constant dense<0.000000e+00> : vector<4x16xf32>
    %751 = tpu.matmul %749, %750, %cst_254 {dimension_numbers = #tpu.dot_dimension_numbers<[1], [0], [0], [1], [0, 0, 1, 1], [], []>} : vector<4x8xf32>, vector<8x16xf32>, vector<4x16xf32> -> vector<4x16xf32>
    %cst_255 = arith.constant dense<0xFF800000> : vector<4xf32>
    %752 = vector.multi_reduction <maximumf>, %751, %cst_255 [1] : vector<4x16xf32> to vector<4xf32>
    %753 = vector.shape_cast %752 : vector<4xf32> to vector<4x1xf32>
    %754 = vector.broadcast %753 : vector<4x1xf32> to vector<4x16xf32>
    %755 = arith.subf %751, %754 : vector<4x16xf32>
    %756 = math.exp %755 : vector<4x16xf32>
    %cst_256 = arith.constant dense<0.000000e+00> : vector<4xf32>
    %757 = vector.multi_reduction <add>, %756, %cst_256 [1] : vector<4x16xf32> to vector<4xf32>
    %758 = vector.shape_cast %757 : vector<4xf32> to vector<4x1xf32>
    %759 = tpu.reciprocal %758 {approx = true} : vector<4x1xf32> -> vector<4x1xf32>
    %760 = vector.broadcast %759 : vector<4x1xf32> to vector<4x16xf32>
    %761 = arith.mulf %756, %760 : vector<4x16xf32>
    %762 = vector.extract_strided_slice %732 {offsets = [0, 8], sizes = [16, 8], strides = [1, 1]} : vector<16x32xf32> to vector<16x8xf32>
    %cst_257 = arith.constant dense<0.000000e+00> : vector<4x8xf32>
    %763 = tpu.matmul %761, %762, %cst_257 {dimension_numbers = #tpu.dot_dimension_numbers<[1], [0], [0], [1], [0, 0, 1, 1], [], []>} : vector<4x16xf32>, vector<16x8xf32>, vector<4x8xf32> -> vector<4x8xf32>
    %764 = vector.extract_strided_slice %720 {offsets = [0, 16], sizes = [4, 8], strides = [1, 1]} : vector<4x32xf32> to vector<4x8xf32>
    %765 = vector.extract_strided_slice %733 {offsets = [16, 0], sizes = [8, 16], strides = [1, 1]} : vector<32x16xf32> to vector<8x16xf32>
    %cst_258 = arith.constant dense<0.000000e+00> : vector<4x16xf32>
    %766 = tpu.matmul %764, %765, %cst_258 {dimension_numbers = #tpu.dot_dimension_numbers<[1], [0], [0], [1], [0, 0, 1, 1], [], []>} : vector<4x8xf32>, vector<8x16xf32>, vector<4x16xf32> -> vector<4x16xf32>
    %cst_259 = arith.constant dense<0xFF800000> : vector<4xf32>
    %767 = vector.multi_reduction <maximumf>, %766, %cst_259 [1] : vector<4x16xf32> to vector<4xf32>
    %768 = vector.shape_cast %767 : vector<4xf32> to vector<4x1xf32>
    %769 = vector.broadcast %768 : vector<4x1xf32> to vector<4x16xf32>
    %770 = arith.subf %766, %769 : vector<4x16xf32>
    %771 = math.exp %770 : vector<4x16xf32>
    %cst_260 = arith.constant dense<0.000000e+00> : vector<4xf32>
    %772 = vector.multi_reduction <add>, %771, %cst_260 [1] : vector<4x16xf32> to vector<4xf32>
    %773 = vector.shape_cast %772 : vector<4xf32> to vector<4x1xf32>
    %774 = tpu.reciprocal %773 {approx = true} : vector<4x1xf32> -> vector<4x1xf32>
    %775 = vector.broadcast %774 : vector<4x1xf32> to vector<4x16xf32>
    %776 = arith.mulf %771, %775 : vector<4x16xf32>
    %777 = vector.extract_strided_slice %732 {offsets = [0, 16], sizes = [16, 8], strides = [1, 1]} : vector<16x32xf32> to vector<16x8xf32>
    %cst_261 = arith.constant dense<0.000000e+00> : vector<4x8xf32>
    %778 = tpu.matmul %776, %777, %cst_261 {dimension_numbers = #tpu.dot_dimension_numbers<[1], [0], [0], [1], [0, 0, 1, 1], [], []>} : vector<4x16xf32>, vector<16x8xf32>, vector<4x8xf32> -> vector<4x8xf32>
    %779 = vector.extract_strided_slice %720 {offsets = [0, 24], sizes = [4, 8], strides = [1, 1]} : vector<4x32xf32> to vector<4x8xf32>
    %780 = vector.extract_strided_slice %733 {offsets = [24, 0], sizes = [8, 16], strides = [1, 1]} : vector<32x16xf32> to vector<8x16xf32>
    %cst_262 = arith.constant dense<0.000000e+00> : vector<4x16xf32>
    %781 = tpu.matmul %779, %780, %cst_262 {dimension_numbers = #tpu.dot_dimension_numbers<[1], [0], [0], [1], [0, 0, 1, 1], [], []>} : vector<4x8xf32>, vector<8x16xf32>, vector<4x16xf32> -> vector<4x16xf32>
    %cst_263 = arith.constant dense<0xFF800000> : vector<4xf32>
    %782 = vector.multi_reduction <maximumf>, %781, %cst_263 [1] : vector<4x16xf32> to vector<4xf32>
    %783 = vector.shape_cast %782 : vector<4xf32> to vector<4x1xf32>
    %784 = vector.broadcast %783 : vector<4x1xf32> to vector<4x16xf32>
    %785 = arith.subf %781, %784 : vector<4x16xf32>
    %786 = math.exp %785 : vector<4x16xf32>
    %cst_264 = arith.constant dense<0.000000e+00> : vector<4xf32>
    %787 = vector.multi_reduction <add>, %786, %cst_264 [1] : vector<4x16xf32> to vector<4xf32>
    %788 = vector.shape_cast %787 : vector<4xf32> to vector<4x1xf32>
    %789 = tpu.reciprocal %788 {approx = true} : vector<4x1xf32> -> vector<4x1xf32>
    %790 = vector.broadcast %789 : vector<4x1xf32> to vector<4x16xf32>
    %791 = arith.mulf %786, %790 : vector<4x16xf32>
    %792 = vector.extract_strided_slice %732 {offsets = [0, 24], sizes = [16, 8], strides = [1, 1]} : vector<16x32xf32> to vector<16x8xf32>
    %cst_265 = arith.constant dense<0.000000e+00> : vector<4x8xf32>
    %793 = tpu.matmul %791, %792, %cst_265 {dimension_numbers = #tpu.dot_dimension_numbers<[1], [0], [0], [1], [0, 0, 1, 1], [], []>} : vector<4x16xf32>, vector<16x8xf32>, vector<4x8xf32> -> vector<4x8xf32>
    %794 = tpu.concatenate %748, %763, %778, %793 in 1 : vector<4x8xf32>, vector<4x8xf32>, vector<4x8xf32>, vector<4x8xf32> -> vector<4x32xf32>
    %c11_266 = arith.constant 11 : index
    %c0_267 = arith.constant 0 : index
    %c0_268 = arith.constant 0 : index
    %795 = vector.load %arg4[%c11_266, %c0_267, %c0_268] : memref<12x32x32xf32, #tpu.memory_space<vmem>>, vector<1x32x32xf32>
    %796 = vector.shape_cast %795 : vector<1x32x32xf32> to vector<32x32xf32>
    %cst_269 = arith.constant dense<0.000000e+00> : vector<4x32xf32>
    %797 = tpu.matmul %794, %796, %cst_269 {dimension_numbers = #tpu.dot_dimension_numbers<[1], [0], [0], [1], [0, 0, 1, 1], [], []>} : vector<4x32xf32>, vector<32x32xf32>, vector<4x32xf32> -> vector<4x32xf32>
    %798 = vector.extract_strided_slice %2 {offsets = [18, 0], sizes = [1, 32], strides = [1, 1]} : vector<27x32xf32> to vector<1x32xf32>
    %799 = vector.broadcast %798 : vector<1x32xf32> to vector<4x32xf32>
    %800 = arith.addf %797, %799 : vector<4x32xf32>
    %801 = arith.addf %714, %800 : vector<4x32xf32>
    %cst_270 = arith.constant dense<0.000000e+00> : vector<4xf32>
    %802 = vector.multi_reduction <add>, %801, %cst_270 [1] : vector<4x32xf32> to vector<4xf32>
    %803 = vector.shape_cast %802 : vector<4xf32> to vector<4x1xf32>
    %cst_271 = arith.constant 3.200000e+01 : f32
    %804 = vector.broadcast %cst_271 : f32 to vector<4x1xf32>
    %805 = arith.divf %803, %804 : vector<4x1xf32>
    %806 = vector.broadcast %805 : vector<4x1xf32> to vector<4x32xf32>
    %807 = arith.subf %801, %806 : vector<4x32xf32>
    %808 = arith.mulf %807, %807 : vector<4x32xf32>
    %cst_272 = arith.constant dense<0.000000e+00> : vector<4xf32>
    %809 = vector.multi_reduction <add>, %808, %cst_272 [1] : vector<4x32xf32> to vector<4xf32>
    %810 = vector.shape_cast %809 : vector<4xf32> to vector<4x1xf32>
    %cst_273 = arith.constant 3.200000e+01 : f32
    %811 = vector.broadcast %cst_273 : f32 to vector<4x1xf32>
    %812 = arith.divf %810, %811 : vector<4x1xf32>
    %813 = vector.broadcast %805 : vector<4x1xf32> to vector<4x32xf32>
    %814 = arith.subf %801, %813 : vector<4x32xf32>
    %cst_274 = arith.constant 9.99999974E-6 : f32
    %815 = vector.broadcast %cst_274 : f32 to vector<4x1xf32>
    %816 = arith.addf %812, %815 : vector<4x1xf32>
    %817 = math.rsqrt %816 : vector<4x1xf32>
    %818 = vector.broadcast %817 : vector<4x1xf32> to vector<4x32xf32>
    %819 = arith.mulf %814, %818 : vector<4x32xf32>
    %820 = vector.extract_strided_slice %2 {offsets = [19, 0], sizes = [1, 32], strides = [1, 1]} : vector<27x32xf32> to vector<1x32xf32>
    %821 = vector.broadcast %820 : vector<1x32xf32> to vector<4x32xf32>
    %822 = arith.mulf %819, %821 : vector<4x32xf32>
    %823 = vector.extract_strided_slice %2 {offsets = [20, 0], sizes = [1, 32], strides = [1, 1]} : vector<27x32xf32> to vector<1x32xf32>
    %824 = vector.broadcast %823 : vector<1x32xf32> to vector<4x32xf32>
    %825 = arith.addf %822, %824 : vector<4x32xf32>
    %c1_275 = arith.constant 1 : index
    %c0_276 = arith.constant 0 : index
    %c0_277 = arith.constant 0 : index
    %826 = vector.load %arg5[%c1_275, %c0_276, %c0_277] : memref<2x32x64xf32, #tpu.memory_space<vmem>>, vector<1x32x64xf32>
    %827 = vector.shape_cast %826 : vector<1x32x64xf32> to vector<32x64xf32>
    %cst_278 = arith.constant dense<0.000000e+00> : vector<4x64xf32>
    %828 = tpu.matmul %825, %827, %cst_278 {dimension_numbers = #tpu.dot_dimension_numbers<[1], [0], [0], [1], [0, 0, 1, 1], [], []>} : vector<4x32xf32>, vector<32x64xf32>, vector<4x64xf32> -> vector<4x64xf32>
    %829 = vector.extract_strided_slice %3 {offsets = [1, 0], sizes = [1, 64], strides = [1, 1]} : vector<2x64xf32> to vector<1x64xf32>
    %830 = vector.broadcast %829 : vector<1x64xf32> to vector<4x64xf32>
    %831 = arith.addf %828, %830 : vector<4x64xf32>
    %cst_279 = arith.constant 0.000000e+00 : f32
    %832 = vector.broadcast %cst_279 : f32 to vector<4x64xf32>
    %833 = arith.maximumf %831, %832 : vector<4x64xf32>
    %c1_280 = arith.constant 1 : index
    %c0_281 = arith.constant 0 : index
    %c0_282 = arith.constant 0 : index
    %834 = vector.load %arg6[%c1_280, %c0_281, %c0_282] : memref<2x64x32xf32, #tpu.memory_space<vmem>>, vector<1x64x32xf32>
    %835 = vector.shape_cast %834 : vector<1x64x32xf32> to vector<64x32xf32>
    %cst_283 = arith.constant dense<0.000000e+00> : vector<4x32xf32>
    %836 = tpu.matmul %833, %835, %cst_283 {dimension_numbers = #tpu.dot_dimension_numbers<[1], [0], [0], [1], [0, 0, 1, 1], [], []>} : vector<4x64xf32>, vector<64x32xf32>, vector<4x32xf32> -> vector<4x32xf32>
    %837 = vector.extract_strided_slice %2 {offsets = [21, 0], sizes = [1, 32], strides = [1, 1]} : vector<27x32xf32> to vector<1x32xf32>
    %838 = vector.broadcast %837 : vector<1x32xf32> to vector<4x32xf32>
    %839 = arith.addf %836, %838 : vector<4x32xf32>
    %840 = arith.addf %825, %839 : vector<4x32xf32>
    %cst_284 = arith.constant dense<0.000000e+00> : vector<4xf32>
    %841 = vector.multi_reduction <add>, %840, %cst_284 [1] : vector<4x32xf32> to vector<4xf32>
    %842 = vector.shape_cast %841 : vector<4xf32> to vector<4x1xf32>
    %cst_285 = arith.constant 3.200000e+01 : f32
    %843 = vector.broadcast %cst_285 : f32 to vector<4x1xf32>
    %844 = arith.divf %842, %843 : vector<4x1xf32>
    %845 = vector.broadcast %844 : vector<4x1xf32> to vector<4x32xf32>
    %846 = arith.subf %840, %845 : vector<4x32xf32>
    %847 = arith.mulf %846, %846 : vector<4x32xf32>
    %cst_286 = arith.constant dense<0.000000e+00> : vector<4xf32>
    %848 = vector.multi_reduction <add>, %847, %cst_286 [1] : vector<4x32xf32> to vector<4xf32>
    %849 = vector.shape_cast %848 : vector<4xf32> to vector<4x1xf32>
    %cst_287 = arith.constant 3.200000e+01 : f32
    %850 = vector.broadcast %cst_287 : f32 to vector<4x1xf32>
    %851 = arith.divf %849, %850 : vector<4x1xf32>
    %852 = vector.broadcast %844 : vector<4x1xf32> to vector<4x32xf32>
    %853 = arith.subf %840, %852 : vector<4x32xf32>
    %cst_288 = arith.constant 9.99999974E-6 : f32
    %854 = vector.broadcast %cst_288 : f32 to vector<4x1xf32>
    %855 = arith.addf %851, %854 : vector<4x1xf32>
    %856 = math.rsqrt %855 : vector<4x1xf32>
    %857 = vector.broadcast %856 : vector<4x1xf32> to vector<4x32xf32>
    %858 = arith.mulf %853, %857 : vector<4x32xf32>
    %859 = vector.extract_strided_slice %2 {offsets = [22, 0], sizes = [1, 32], strides = [1, 1]} : vector<27x32xf32> to vector<1x32xf32>
    %860 = vector.broadcast %859 : vector<1x32xf32> to vector<4x32xf32>
    %861 = arith.mulf %858, %860 : vector<4x32xf32>
    %862 = vector.extract_strided_slice %2 {offsets = [23, 0], sizes = [1, 32], strides = [1, 1]} : vector<27x32xf32> to vector<1x32xf32>
    %863 = vector.broadcast %862 : vector<1x32xf32> to vector<4x32xf32>
    %864 = arith.addf %861, %863 : vector<4x32xf32>
    %cst_289 = arith.constant dense<0.000000e+00> : vector<4xf32>
    %865 = vector.multi_reduction <add>, %864, %cst_289 [1] : vector<4x32xf32> to vector<4xf32>
    %866 = vector.shape_cast %865 : vector<4xf32> to vector<4x1xf32>
    %cst_290 = arith.constant 3.200000e+01 : f32
    %867 = vector.broadcast %cst_290 : f32 to vector<4x1xf32>
    %868 = arith.divf %866, %867 : vector<4x1xf32>
    %869 = vector.broadcast %868 : vector<4x1xf32> to vector<4x32xf32>
    %870 = arith.subf %864, %869 : vector<4x32xf32>
    %871 = arith.mulf %870, %870 : vector<4x32xf32>
    %cst_291 = arith.constant dense<0.000000e+00> : vector<4xf32>
    %872 = vector.multi_reduction <add>, %871, %cst_291 [1] : vector<4x32xf32> to vector<4xf32>
    %873 = vector.shape_cast %872 : vector<4xf32> to vector<4x1xf32>
    %cst_292 = arith.constant 3.200000e+01 : f32
    %874 = vector.broadcast %cst_292 : f32 to vector<4x1xf32>
    %875 = arith.divf %873, %874 : vector<4x1xf32>
    %876 = vector.broadcast %868 : vector<4x1xf32> to vector<4x32xf32>
    %877 = arith.subf %864, %876 : vector<4x32xf32>
    %cst_293 = arith.constant 9.99999974E-6 : f32
    %878 = vector.broadcast %cst_293 : f32 to vector<4x1xf32>
    %879 = arith.addf %875, %878 : vector<4x1xf32>
    %880 = math.rsqrt %879 : vector<4x1xf32>
    %881 = vector.broadcast %880 : vector<4x1xf32> to vector<4x32xf32>
    %882 = arith.mulf %877, %881 : vector<4x32xf32>
    %883 = vector.extract_strided_slice %2 {offsets = [24, 0], sizes = [1, 32], strides = [1, 1]} : vector<27x32xf32> to vector<1x32xf32>
    %884 = vector.broadcast %883 : vector<1x32xf32> to vector<4x32xf32>
    %885 = arith.mulf %882, %884 : vector<4x32xf32>
    %886 = vector.extract_strided_slice %2 {offsets = [25, 0], sizes = [1, 32], strides = [1, 1]} : vector<27x32xf32> to vector<1x32xf32>
    %887 = vector.broadcast %886 : vector<1x32xf32> to vector<4x32xf32>
    %888 = arith.addf %885, %887 : vector<4x32xf32>
    %889 = vector.extract_strided_slice %2 {offsets = [26, 0], sizes = [1, 32], strides = [1, 1]} : vector<27x32xf32> to vector<1x32xf32>
    %cst_294 = arith.constant dense<0.000000e+00> : vector<1x4xf32>
    %890 = tpu.matmul %889, %888, %cst_294 {dimension_numbers = #tpu.dot_dimension_numbers<[1], [1], [0], [0], [0, 0, 1, 0], [], []>} : vector<1x32xf32>, vector<4x32xf32>, vector<1x4xf32> -> vector<1x4xf32>
    %c0_295 = arith.constant 0 : index
    %c0_296 = arith.constant 0 : index
    %891 = vector.load %arg9[%c0_295, %c0_296] : memref<1x1xf32, #tpu.memory_space<vmem>>, vector<1x1xf32>
    %892 = vector.broadcast %891 : vector<1x1xf32> to vector<1x4xf32>
    %893 = arith.addf %890, %892 : vector<1x4xf32>
    %894 = tpu.concatenate %448, %893 in 0 : vector<1x4xf32>, vector<1x4xf32> -> vector<2x4xf32>
    %c0_297 = arith.constant 0 : index
    %c0_298 = arith.constant 0 : index
    %895 = vector.load %arg10[%c0_297, %c0_298] : memref<2x4xf32, #tpu.memory_space<vmem>>, vector<2x4xf32>
    tpu.vector_store %arg10[%c0_297, %c0_298], %894 {strides = array<i32>} : memref<2x4xf32, #tpu.memory_space<vmem>>, vector<2x4xf32>,
    return
  }
  func.func @transform_0(%arg0: i32) -> (i32, i32, i32) {
    %c0_i32 = arith.constant 0 : i32
    %c0_i32_0 = arith.constant 0 : i32
    %c0_i32_1 = arith.constant 0 : i32
    %c0_i32_2 = arith.constant 0 : i32
    return %c0_i32, %c0_i32_0, %c0_i32_1 : i32, i32, i32
  }
  func.func @transform_1(%arg0: i32) -> (i32, i32) {
    %c0_i32 = arith.constant 0 : i32
    %c0_i32_0 = arith.constant 0 : i32
    %c0_i32_1 = arith.constant 0 : i32
    return %c0_i32, %c0_i32_0 : i32, i32
  }
  func.func @transform_2(%arg0: i32) -> (i32, i32) {
    %c0_i32 = arith.constant 0 : i32
    %c0_i32_0 = arith.constant 0 : i32
    %c0_i32_1 = arith.constant 0 : i32
    return %c0_i32, %c0_i32_0 : i32, i32
  }
  func.func @transform_3(%arg0: i32) -> (i32, i32, i32) {
    %c0_i32 = arith.constant 0 : i32
    %c0_i32_0 = arith.constant 0 : i32
    %c0_i32_1 = arith.constant 0 : i32
    %c0_i32_2 = arith.constant 0 : i32
    return %c0_i32, %c0_i32_0, %c0_i32_1 : i32, i32, i32
  }
  func.func @transform_4(%arg0: i32) -> (i32, i32, i32) {
    %c0_i32 = arith.constant 0 : i32
    %c0_i32_0 = arith.constant 0 : i32
    %c0_i32_1 = arith.constant 0 : i32
    %c0_i32_2 = arith.constant 0 : i32
    return %c0_i32, %c0_i32_0, %c0_i32_1 : i32, i32, i32
  }
  func.func @transform_5(%arg0: i32) -> (i32, i32, i32) {
    %c0_i32 = arith.constant 0 : i32
    %c0_i32_0 = arith.constant 0 : i32
    %c0_i32_1 = arith.constant 0 : i32
    %c0_i32_2 = arith.constant 0 : i32
    return %c0_i32, %c0_i32_0, %c0_i32_1 : i32, i32, i32
  }
  func.func @transform_6(%arg0: i32) -> (i32, i32) {
    %c0_i32 = arith.constant 0 : i32
    %c0_i32_0 = arith.constant 0 : i32
    %c0_i32_1 = arith.constant 0 : i32
    return %c0_i32, %c0_i32_0 : i32, i32
  }
  func.func @transform_7(%arg0: i32) -> (i32, i32) {
    %c0_i32 = arith.constant 0 : i32
    %c0_i32_0 = arith.constant 0 : i32
    %c0_i32_1 = arith.constant 0 : i32
    return %c0_i32, %c0_i32_0 : i32, i32
  }
  func.func @transform_8(%arg0: i32) -> (i32, i32) {
    %c0_i32 = arith.constant 0 : i32
    %c0_i32_0 = arith.constant 0 : i32
    %c0_i32_1 = arith.constant 0 : i32
    return %c0_i32, %c0_i32_0 : i32, i32
  }
  func.func @transform_9(%arg0: i32) -> (i32, i32) {
    %c0_i32 = arith.constant 0 : i32
    %c0_i32_0 = arith.constant 0 : i32
    %c0_i32_1 = arith.constant 0 : i32
    return %c0_i32, %c0_i32_0 : i32, i32
  }
}

</mosaic_0001>

<llo_original>
// kernel: trans_dqn_forward.1
$region0: #{trans_dqn_forward.1}
  #allocation0 [shape = 'u32[]', space=smem, size = 0x4, offset = 0x4, fixed_abs, tag = 'smem constant byte address 0x4 - core index']
  #allocation1 [shape = 'u32[72,128]{1,0:T(1,128)}', space=vmem, size = 0x9000, scoped, tag = 'internal scratch']
  #allocation2 [shape = 'f32[1,1]{1,0:T(1,128)S(1)}', space=vmem, size = 0x200, scoped, tag = 'scoped memory for trans_dqn_forward.1']
  %s0 = inlined_call_operand.vmem [shape: f32[2,16,32], index: 0, kind: input, shape index: {}]
  %s1 = inlined_call_operand.vmem [shape: f32[16,32], index: 1, kind: input, shape index: {}]
  %s2 = inlined_call_operand.vmem [shape: f32[4,32], index: 2, kind: input, shape index: {}]
  %s3 = inlined_call_operand.vmem [shape: f32[12,32,32], index: 3, kind: input, shape index: {}]
  %s4 = inlined_call_operand.vmem [shape: f32[2,32,64], index: 4, kind: input, shape index: {}]
  %s5 = inlined_call_operand.vmem [shape: f32[2,64,32], index: 5, kind: input, shape index: {}]
  %s6 = inlined_call_operand.vmem [shape: f32[27,32], index: 6, kind: input, shape index: {}]
  %s7 = inlined_call_operand.vmem [shape: f32[2,64], index: 7, kind: input, shape index: {}]
  %s8 = inlined_call_operand.<no memory space> [shape: f32[1,1], index: 8, kind: input, shape index: {}]
  %s9 = inlined_call_operand.hbm [shape: f32[2,4], index: 9, kind: output, shape index: {}]
  %s10 = sld [smem:[#allocation0]]
  $region46: #{trans_dqn_forward.1} parent=0
    _
  %s12 = ssub.s32 1, %s10
  %s13 = scalar_select 0, %s12, %s10
  %v14 = vstv %s8
  %15 = vst [vmem:[#allocation2] sm:$0x1] %v14
  $region1: #{trans_dqn_forward.1} parent=0
    #allocation3 [shape = 'u8[1024]{0}', space=vmem, size = 0x400, scoped, tag = 'output window, operand 0, single buffered']
    #allocation4 [shape = 's32[1]{0}', space=sflag, size = 0x4, scoped, tag = 'scoped memory for trans_dqn_forward.1']
    %16 = vsyncpa [#allocation4], 0
    // Predicated region
    $region2: #{trans_dqn_forward.1} parent=1 // pred_check
      _
    $region3: #{trans_dqn_forward.1} parent=1 // pred_check_branch
      %18 = sbr.rel (0) target = $region5
    $region4: #{trans_dqn_forward.1} parent=1 // pred_region
      _
    $region5: #{trans_dqn_forward.1} parent=1 // pred_fallthru
      _
    // Predicated region
    $region6: #{trans_dqn_forward.1} parent=1 // pred_check
      _
    $region7: #{trans_dqn_forward.1} parent=1 // pred_check_branch
      %20 = sbr.rel (0) target = $region9
    $region8: #{trans_dqn_forward.1} parent=1 // pred_region
      _
    $region9: #{trans_dqn_forward.1} parent=1 // pred_fallthru
      _
    // Predicated region
    $region10: #{trans_dqn_forward.1} parent=1 // pred_check
      _
    $region11: #{trans_dqn_forward.1} parent=1 // pred_check_branch
      %22 = sbr.rel (0) target = $region13
    $region12: #{trans_dqn_forward.1} parent=1 // pred_region
      _
    $region13: #{trans_dqn_forward.1} parent=1 // pred_fallthru
      _
    // Predicated region
    $region14: #{trans_dqn_forward.1} parent=1 // pred_check
      _
    $region15: #{trans_dqn_forward.1} parent=1 // pred_check_branch
      %24 = sbr.rel (0) target = $region17
    $region16: #{trans_dqn_forward.1} parent=1 // pred_region
      _
    $region17: #{trans_dqn_forward.1} parent=1 // pred_fallthru
      _
    // Predicated region
    $region18: #{trans_dqn_forward.1} parent=1 // pred_check
      _
    $region19: #{trans_dqn_forward.1} parent=1 // pred_check_branch
      %26 = sbr.rel (0) target = $region21
    $region20: #{trans_dqn_forward.1} parent=1 // pred_region
      _
    $region21: #{trans_dqn_forward.1} parent=1 // pred_fallthru
      _
    // Predicated region
    $region22: #{trans_dqn_forward.1} parent=1 // pred_check
      _
    $region23: #{trans_dqn_forward.1} parent=1 // pred_check_branch
      %28 = sbr.rel (0) target = $region25
    $region24: #{trans_dqn_forward.1} parent=1 // pred_region
      _
    $region25: #{trans_dqn_forward.1} parent=1 // pred_fallthru
      _
    // Predicated region
    $region26: #{trans_dqn_forward.1} parent=1 // pred_check
      _
    $region27: #{trans_dqn_forward.1} parent=1 // pred_check_branch
      %30 = sbr.rel (0) target = $region29
    $region28: #{trans_dqn_forward.1} parent=1 // pred_region
      _
    $region29: #{trans_dqn_forward.1} parent=1 // pred_fallthru
      _
    // Predicated region
    $region30: #{trans_dqn_forward.1} parent=1 // pred_check
      _
    $region31: #{trans_dqn_forward.1} parent=1 // pred_check_branch
      %32 = sbr.rel (0) target = $region33
    $region32: #{trans_dqn_forward.1} parent=1 // pred_region
      _
    $region33: #{trans_dqn_forward.1} parent=1 // pred_fallthru
      _
    // Predicated region
    $region34: #{trans_dqn_forward.1} parent=1 // pred_check
      _
    $region35: #{trans_dqn_forward.1} parent=1 // pred_check_branch
      %34 = sbr.rel (0) target = $region37
    $region36: #{trans_dqn_forward.1} parent=1 // pred_region
      _
    $region37: #{trans_dqn_forward.1} parent=1 // pred_fallthru
      _
    %v35 = vld [vmem:[%s1] sm:$0xff]
    %v36 = vld [vmem:[%s1 + $0x8] sm:$0xff]
    %v37 = vld [vmem:[%s2] sm:$0xf]
    %v38 = vld [vmem:[%s6] sm:$0xff]
    %v39 = vld [vmem:[%s6 + $0x8] sm:$0xff]
    %v40 = vld [vmem:[%s6 + $0x10] sm:$0xff]
    %v41 = vld [vmem:[%s6 + $0x18] sm:$0x7]
    %v42 = vld [vmem:[%s7] sm:$0x3]
    %v43 = vld [vmem:[%s0] sm:$0xff]
    %v44 = vld [vmem:[%s0 + $0x8] sm:$0xff]
    %v45 = vmul.f32 %v43, 0.1
    %v46 = vmul.f32 %v44, 0.1
    %v47 = vadd.f32 %v35, %v45
    %v48 = vadd.f32 %v36, %v46
    %v49 = vld [vmem:[%s3] sm:$0xff]
    %v50 = vld [vmem:[%s3 + $0x8] sm:$0xff]
    %v51 = vld [vmem:[%s3 + $0x10] sm:$0xff]
    %v52 = vld [vmem:[%s3 + $0x18] sm:$0xff]
    %v53 = vperm.slane %v38, 0
    %vm54 = vcmask 261120
    %v56 = vsel %vm54, %v47, 0
    %v59 = vsel %vm54, %v48, 0
    %61 = vmatpush.msra.mxu0 0.0
    %62 = vmatpush.msra.mxu0 0.0
    %63 = vmatpush.msra.mxu0 0.0
    %64 = vmatpush.msra.mxu0 0.0
    %65 = vmatpush.msra.mxu0 0.0
    %66 = vmatpush.msra.mxu0 0.0
    %67 = vmatpush.msra.mxu0 0.0
    %68 = vmatpush.msra.mxu0 0.0
    %69 = vmatpush.msra.mxu0 0.0
    %70 = vmatpush.msra.mxu0 0.0
    %71 = vmatpush.msra.mxu0 0.0
    %72 = vmatpush.msra.mxu0 0.0
    %73 = vmatpush.msra.mxu0 %v52
    %74 = vmatpush.msra.mxu0 %v51
    %75 = vmatpush.msra.mxu0 %v50
    %76 = vmatpush.msra.mxu0 %v49
    %77 = vmatmul.f32.gmra.mxu0 %v56
    %v78 = vpop.f32.mrf.mxu0
    %v79 = vadd.f32 %v53, %v78
    %80 = vmatmul.f32.gmra.mxu0 %v59
    %v81 = vpop.f32.mrf.mxu0
    %v82 = vadd.f32 %v53, %v81
    %83 = vdwg.mxu0
    %s84 = scalar_lea.vmem %s3, 32
    %v85 = vld [vmem:[%s84] sm:$0xff]
    %v86 = vld [vmem:[%s84 + $0x8] sm:$0xff]
    %v87 = vld [vmem:[%s84 + $0x10] sm:$0xff]
    %v88 = vld [vmem:[%s84 + $0x18] sm:$0xff]
    %v89 = vperm.slane %v38, 1
    %90 = vmatpush.msra.mxu0 0.0
    %91 = vmatpush.msra.mxu0 0.0
    %92 = vmatpush.msra.mxu0 0.0
    %93 = vmatpush.msra.mxu0 0.0
    %94 = vmatpush.msra.mxu0 0.0
    %95 = vmatpush.msra.mxu0 0.0
    %96 = vmatpush.msra.mxu0 0.0
    %97 = vmatpush.msra.mxu0 0.0
    %98 = vmatpush.msra.mxu0 0.0
    %99 = vmatpush.msra.mxu0 0.0
    %100 = vmatpush.msra.mxu0 0.0
    %101 = vmatpush.msra.mxu0 0.0
    %102 = vmatpush.msra.mxu0 %v88
    %103 = vmatpush.msra.mxu0 %v87
    %104 = vmatpush.msra.mxu0 %v86
    %105 = vmatpush.msra.mxu0 %v85
    %106 = vmatmul.f32.gmra.mxu0 %v56
    %v107 = vpop.f32.mrf.mxu0
    %v108 = vadd.f32 %v89, %v107
    %109 = vmatmul.f32.gmra.mxu0 %v59
    %v110 = vpop.f32.mrf.mxu0
    %v111 = vadd.f32 %v89, %v110
    %112 = vdwg.mxu0
    %s113 = scalar_lea.vmem %s3, 64
    %v114 = vld [vmem:[%s113] sm:$0xff]
    %v115 = vld [vmem:[%s113 + $0x8] sm:$0xff]
    %v116 = vld [vmem:[%s113 + $0x10] sm:$0xff]
    %v117 = vld [vmem:[%s113 + $0x18] sm:$0xff]
    %v118 = vperm.slane %v38, 2
    %119 = vmatpush.msra.mxu0 0.0
    %120 = vmatpush.msra.mxu0 0.0
    %121 = vmatpush.msra.mxu0 0.0
    %122 = vmatpush.msra.mxu0 0.0
    %123 = vmatpush.msra.mxu0 0.0
    %124 = vmatpush.msra.mxu0 0.0
    %125 = vmatpush.msra.mxu0 0.0
    %126 = vmatpush.msra.mxu0 0.0
    %127 = vmatpush.msra.mxu0 0.0
    %128 = vmatpush.msra.mxu0 0.0
    %129 = vmatpush.msra.mxu0 0.0
    %130 = vmatpush.msra.mxu0 0.0
    %131 = vmatpush.msra.mxu0 %v117
    %132 = vmatpush.msra.mxu0 %v116
    %133 = vmatpush.msra.mxu0 %v115
    %134 = vmatpush.msra.mxu0 %v114
    %135 = vmatmul.f32.gmra.mxu0 %v56
    %v136 = vpop.f32.mrf.mxu0
    %v137 = vadd.f32 %v118, %v136
    %138 = vmatmul.f32.gmra.mxu0 %v59
    %v139 = vpop.f32.mrf.mxu0
    %v140 = vadd.f32 %v118, %v139
    %141 = vdwg.mxu0
    %vm142 = vcmask 64512
    %v144 = vsel %vm142, %v79, 0
    %v147 = vsel %vm142, %v82, 0
    %v150 = vsel %vm142, %v108, 0
    %v153 = vsel %vm142, %v111, 0
    %155 = vmatpush.xpose.msra.mxu0 0.0
    %156 = vmatpush.xpose.msra.mxu0 0.0
    %157 = vmatpush.xpose.msra.mxu0 0.0
    %158 = vmatpush.xpose.msra.mxu0 0.0
    %159 = vmatpush.xpose.msra.mxu0 0.0
    %160 = vmatpush.xpose.msra.mxu0 0.0
    %161 = vmatpush.xpose.msra.mxu0 0.0
    %162 = vmatpush.xpose.msra.mxu0 0.0
    %163 = vmatpush.xpose.msra.mxu0 0.0
    %164 = vmatpush.xpose.msra.mxu0 0.0
    %165 = vmatpush.xpose.msra.mxu0 0.0
    %166 = vmatpush.xpose.msra.mxu0 0.0
    %167 = vmatpush.xpose.msra.mxu0 0.0
    %168 = vmatpush.xpose.msra.mxu0 0.0
    %169 = vmatpush.xpose.msra.mxu0 %v153
    %170 = vmatpush.xpose.msra.mxu0 %v150
    %171 = vmatmul.f32.gmra.mxu0 %v144
    %v172 = vpop.f32.mrf.mxu0
    %v173 = vadd.f32 0.0, %v172
    %174 = vmatmul.f32.gmra.mxu0 %v147
    %v175 = vpop.f32.mrf.mxu0
    %v176 = vadd.f32 0.0, %v175
    %177 = vdwg.mxu0
    %vm178 = vcmask 130048
    %v179 = vsel %vm178, %v173, -inf
    %180 = vmax.xlane.f32.xlu0 %v179
    %v181 = vpop.xlane.xlu0 %180
    %v182 = vsel %vm178, %v176, -inf
    %183 = vmax.xlane.f32.xlu0 %v182
    %v184 = vpop.xlane.xlu0 %183
    %v185 = vsub.f32 %v173, %v181
    %v186 = vsub.f32 %v176, %v184
    %v187 = vmul.f32 %v185, 1.442695
    %v188 = vpow.pop %v187
    %v189 = vmul.f32 %v186, 1.442695
    %v190 = vpow.pop %v189
    %v191 = vsel %vm178, %v188, 0.0
    %192 = vadd.xlane.f32.xlu0 %v191
    %v193 = vpop.xlane.xlu0 %192
    %v194 = vsel %vm178, %v190, 0.0
    %195 = vadd.xlane.f32.xlu0 %v194
    %v196 = vpop.xlane.xlu0 %195
    %v197 = vrcp.pop %v193
    %v198 = vrcp.pop %v196
    %v199 = vmul.f32 %v188, %v197
    %v200 = vmul.f32 %v190, %v198
    %v202 = vsel %vm178, %v199, 0
    %v205 = vsel %vm178, %v200, 0
    %207 = vmatpush.msra.mxu0 0.0
    %208 = vmatpush.msra.mxu0 0.0
    %209 = vmatpush.msra.mxu0 0.0
    %210 = vmatpush.msra.mxu0 0.0
    %211 = vmatpush.msra.mxu0 0.0
    %212 = vmatpush.msra.mxu0 0.0
    %213 = vmatpush.msra.mxu0 0.0
    %214 = vmatpush.msra.mxu0 0.0
    %215 = vmatpush.msra.mxu0 0.0
    %216 = vmatpush.msra.mxu0 0.0
    %217 = vmatpush.msra.mxu0 0.0
    %218 = vmatpush.msra.mxu0 0.0
    %219 = vmatpush.msra.mxu0 0.0
    %220 = vmatpush.msra.mxu0 0.0
    %221 = vmatpush.msra.mxu0 %v140
    %222 = vmatpush.msra.mxu0 %v137
    %223 = vmatmul.f32.gmra.mxu0 %v202
    %v224 = vpop.f32.mrf.mxu0
    %v225 = vadd.f32 0.0, %v224
    %226 = vmatmul.f32.gmra.mxu0 %v205
    %v227 = vpop.f32.mrf.mxu0
    %v228 = vadd.f32 0.0, %v227
    %229 = vdwg.mxu0
    %230 = vrot.lane.b32.xlu0 %v79, 120
    %v231 = vpop.permute.xlu0 %230
    %232 = vrot.lane.b32.xlu0 %v82, 120
    %v233 = vpop.permute.xlu0 %232
    %234 = vrot.lane.b32.xlu0 %v108, 120
    %v235 = vpop.permute.xlu0 %234
    %236 = vrot.lane.b32.xlu0 %v111, 120
    %v237 = vpop.permute.xlu0 %236
    %v238 = vsel %vm142, %v231, 0
    %v240 = vsel %vm142, %v233, 0
    %v242 = vsel %vm142, %v235, 0
    %v244 = vsel %vm142, %v237, 0
    %246 = vmatpush.xpose.msra.mxu0 0.0
    %247 = vmatpush.xpose.msra.mxu0 0.0
    %248 = vmatpush.xpose.msra.mxu0 0.0
    %249 = vmatpush.xpose.msra.mxu0 0.0
    %250 = vmatpush.xpose.msra.mxu0 0.0
    %251 = vmatpush.xpose.msra.mxu0 0.0
    %252 = vmatpush.xpose.msra.mxu0 0.0
    %253 = vmatpush.xpose.msra.mxu0 0.0
    %254 = vmatpush.xpose.msra.mxu0 0.0
    %255 = vmatpush.xpose.msra.mxu0 0.0
    %256 = vmatpush.xpose.msra.mxu0 0.0
    %257 = vmatpush.xpose.msra.mxu0 0.0
    %258 = vmatpush.xpose.msra.mxu0 0.0
    %259 = vmatpush.xpose.msra.mxu0 0.0
    %260 = vmatpush.xpose.msra.mxu0 %v244
    %261 = vmatpush.xpose.msra.mxu0 %v242
    %262 = vmatmul.f32.gmra.mxu0 %v238
    %v263 = vpop.f32.mrf.mxu0
    %v264 = vadd.f32 0.0, %v263
    %265 = vmatmul.f32.gmra.mxu0 %v240
    %v266 = vpop.f32.mrf.mxu0
    %v267 = vadd.f32 0.0, %v266
    %268 = vdwg.mxu0
    %v269 = vsel %vm178, %v264, -inf
    %270 = vmax.xlane.f32.xlu0 %v269
    %v271 = vpop.xlane.xlu0 %270
    %v272 = vsel %vm178, %v267, -inf
    %273 = vmax.xlane.f32.xlu0 %v272
    %v274 = vpop.xlane.xlu0 %273
    %v275 = vsub.f32 %v264, %v271
    %v276 = vsub.f32 %v267, %v274
    %v277 = vmul.f32 %v275, 1.442695
    %v278 = vpow.pop %v277
    %v279 = vmul.f32 %v276, 1.442695
    %v280 = vpow.pop %v279
    %v281 = vsel %vm178, %v278, 0.0
    %282 = vadd.xlane.f32.xlu0 %v281
    %v283 = vpop.xlane.xlu0 %282
    %v284 = vsel %vm178, %v280, 0.0
    %285 = vadd.xlane.f32.xlu0 %v284
    %v286 = vpop.xlane.xlu0 %285
    %v287 = vrcp.pop %v283
    %v288 = vrcp.pop %v286
    %v289 = vmul.f32 %v278, %v287
    %v290 = vmul.f32 %v280, %v288
    %293 = vrot.lane.b32.xlu0 %v137, 120
    %v294 = vpop.permute.xlu0 %293
    %295 = vrot.lane.b32.xlu0 %v140, 120
    %v296 = vpop.permute.xlu0 %295
    %v300 = vsel %vm178, %v289, 0
    %v303 = vsel %vm178, %v290, 0
    %305 = vmatpush.msra.mxu0 0.0
    %306 = vmatpush.msra.mxu0 0.0
    %307 = vmatpush.msra.mxu0 0.0
    %308 = vmatpush.msra.mxu0 0.0
    %309 = vmatpush.msra.mxu0 0.0
    %310 = vmatpush.msra.mxu0 0.0
    %311 = vmatpush.msra.mxu0 0.0
    %312 = vmatpush.msra.mxu0 0.0
    %313 = vmatpush.msra.mxu0 0.0
    %314 = vmatpush.msra.mxu0 0.0
    %315 = vmatpush.msra.mxu0 0.0
    %316 = vmatpush.msra.mxu0 0.0
    %317 = vmatpush.msra.mxu0 0.0
    %318 = vmatpush.msra.mxu0 0.0
    %319 = vmatpush.msra.mxu0 %v296
    %320 = vmatpush.msra.mxu0 %v294
    %321 = vmatmul.f32.gmra.mxu0 %v300
    %v322 = vpop.f32.mrf.mxu0
    %v323 = vadd.f32 0.0, %v322
    %324 = vmatmul.f32.gmra.mxu0 %v303
    %v325 = vpop.f32.mrf.mxu0
    %v326 = vadd.f32 0.0, %v325
    %327 = vdwg.mxu0
    %328 = vrot.lane.b32.xlu0 %v79, 112
    %v329 = vpop.permute.xlu0 %328
    %330 = vrot.lane.b32.xlu0 %v82, 112
    %v331 = vpop.permute.xlu0 %330
    %332 = vrot.lane.b32.xlu0 %v108, 112
    %v333 = vpop.permute.xlu0 %332
    %334 = vrot.lane.b32.xlu0 %v111, 112
    %v335 = vpop.permute.xlu0 %334
    %v336 = vsel %vm142, %v329, 0
    %v338 = vsel %vm142, %v331, 0
    %v340 = vsel %vm142, %v333, 0
    %v342 = vsel %vm142, %v335, 0
    %344 = vmatpush.xpose.msra.mxu0 0.0
    %345 = vmatpush.xpose.msra.mxu0 0.0
    %346 = vmatpush.xpose.msra.mxu0 0.0
    %347 = vmatpush.xpose.msra.mxu0 0.0
    %348 = vmatpush.xpose.msra.mxu0 0.0
    %349 = vmatpush.xpose.msra.mxu0 0.0
    %350 = vmatpush.xpose.msra.mxu0 0.0
    %351 = vmatpush.xpose.msra.mxu0 0.0
    %352 = vmatpush.xpose.msra.mxu0 0.0
    %353 = vmatpush.xpose.msra.mxu0 0.0
    %354 = vmatpush.xpose.msra.mxu0 0.0
    %355 = vmatpush.xpose.msra.mxu0 0.0
    %356 = vmatpush.xpose.msra.mxu0 0.0
    %357 = vmatpush.xpose.msra.mxu0 0.0
    %358 = vmatpush.xpose.msra.mxu0 %v342
    %359 = vmatpush.xpose.msra.mxu0 %v340
    %360 = vmatmul.f32.gmra.mxu0 %v336
    %v361 = vpop.f32.mrf.mxu0
    %v362 = vadd.f32 0.0, %v361
    %363 = vmatmul.f32.gmra.mxu0 %v338
    %v364 = vpop.f32.mrf.mxu0
    %v365 = vadd.f32 0.0, %v364
    %366 = vdwg.mxu0
    %v367 = vsel %vm178, %v362, -inf
    %368 = vmax.xlane.f32.xlu0 %v367
    %v369 = vpop.xlane.xlu0 %368
    %v370 = vsel %vm178, %v365, -inf
    %371 = vmax.xlane.f32.xlu0 %v370
    %v372 = vpop.xlane.xlu0 %371
    %v373 = vsub.f32 %v362, %v369
    %v374 = vsub.f32 %v365, %v372
    %v375 = vmul.f32 %v373, 1.442695
    %v376 = vpow.pop %v375
    %v377 = vmul.f32 %v374, 1.442695
    %v378 = vpow.pop %v377
    %v379 = vsel %vm178, %v376, 0.0
    %380 = vadd.xlane.f32.xlu0 %v379
    %v381 = vpop.xlane.xlu0 %380
    %v382 = vsel %vm178, %v378, 0.0
    %383 = vadd.xlane.f32.xlu0 %v382
    %v384 = vpop.xlane.xlu0 %383
    %v385 = vrcp.pop %v381
    %v386 = vrcp.pop %v384
    %v387 = vmul.f32 %v376, %v385
    %v388 = vmul.f32 %v378, %v386
    %389 = vrot.lane.b32.xlu0 %v137, 112
    %v390 = vpop.permute.xlu0 %389
    %391 = vrot.lane.b32.xlu0 %v140, 112
    %v392 = vpop.permute.xlu0 %391
    %v396 = vsel %vm178, %v387, 0
    %v399 = vsel %vm178, %v388, 0
    %401 = vmatpush.msra.mxu0 0.0
    %402 = vmatpush.msra.mxu0 0.0
    %403 = vmatpush.msra.mxu0 0.0
    %404 = vmatpush.msra.mxu0 0.0
    %405 = vmatpush.msra.mxu0 0.0
    %406 = vmatpush.msra.mxu0 0.0
    %407 = vmatpush.msra.mxu0 0.0
    %408 = vmatpush.msra.mxu0 0.0
    %409 = vmatpush.msra.mxu0 0.0
    %410 = vmatpush.msra.mxu0 0.0
    %411 = vmatpush.msra.mxu0 0.0
    %412 = vmatpush.msra.mxu0 0.0
    %413 = vmatpush.msra.mxu0 0.0
    %414 = vmatpush.msra.mxu0 0.0
    %415 = vmatpush.msra.mxu0 %v392
    %416 = vmatpush.msra.mxu0 %v390
    %417 = vmatmul.f32.gmra.mxu0 %v396
    %v418 = vpop.f32.mrf.mxu0
    %v419 = vadd.f32 0.0, %v418
    %420 = vmatmul.f32.gmra.mxu0 %v399
    %v421 = vpop.f32.mrf.mxu0
    %v422 = vadd.f32 0.0, %v421
    %423 = vdwg.mxu0
    %424 = vrot.lane.b32.xlu0 %v79, 104
    %v425 = vpop.permute.xlu0 %424
    %426 = vrot.lane.b32.xlu0 %v82, 104
    %v427 = vpop.permute.xlu0 %426
    %428 = vrot.lane.b32.xlu0 %v108, 104
    %v429 = vpop.permute.xlu0 %428
    %430 = vrot.lane.b32.xlu0 %v111, 104
    %v431 = vpop.permute.xlu0 %430
    %v432 = vsel %vm142, %v425, 0
    %v434 = vsel %vm142, %v427, 0
    %v436 = vsel %vm142, %v429, 0
    %v438 = vsel %vm142, %v431, 0
    %440 = vmatpush.xpose.msra.mxu0 0.0
    %441 = vmatpush.xpose.msra.mxu0 0.0
    %442 = vmatpush.xpose.msra.mxu0 0.0
    %443 = vmatpush.xpose.msra.mxu0 0.0
    %444 = vmatpush.xpose.msra.mxu0 0.0
    %445 = vmatpush.xpose.msra.mxu0 0.0
    %446 = vmatpush.xpose.msra.mxu0 0.0
    %447 = vmatpush.xpose.msra.mxu0 0.0
    %448 = vmatpush.xpose.msra.mxu0 0.0
    %449 = vmatpush.xpose.msra.mxu0 0.0
    %450 = vmatpush.xpose.msra.mxu0 0.0
    %451 = vmatpush.xpose.msra.mxu0 0.0
    %452 = vmatpush.xpose.msra.mxu0 0.0
    %453 = vmatpush.xpose.msra.mxu0 0.0
    %454 = vmatpush.xpose.msra.mxu0 %v438
    %455 = vmatpush.xpose.msra.mxu0 %v436
    %456 = vmatmul.f32.gmra.mxu0 %v432
    %v457 = vpop.f32.mrf.mxu0
    %v458 = vadd.f32 0.0, %v457
    %459 = vmatmul.f32.gmra.mxu0 %v434
    %v460 = vpop.f32.mrf.mxu0
    %v461 = vadd.f32 0.0, %v460
    %462 = vdwg.mxu0
    %v463 = vsel %vm178, %v458, -inf
    %464 = vmax.xlane.f32.xlu0 %v463
    %v465 = vpop.xlane.xlu0 %464
    %v466 = vsel %vm178, %v461, -inf
    %467 = vmax.xlane.f32.xlu0 %v466
    %v468 = vpop.xlane.xlu0 %467
    %v469 = vsub.f32 %v458, %v465
    %v470 = vsub.f32 %v461, %v468
    %v471 = vmul.f32 %v469, 1.442695
    %v472 = vpow.pop %v471
    %v473 = vmul.f32 %v470, 1.442695
    %v474 = vpow.pop %v473
    %v475 = vsel %vm178, %v472, 0.0
    %476 = vadd.xlane.f32.xlu0 %v475
    %v477 = vpop.xlane.xlu0 %476
    %v478 = vsel %vm178, %v474, 0.0
    %479 = vadd.xlane.f32.xlu0 %v478
    %v480 = vpop.xlane.xlu0 %479
    %v481 = vrcp.pop %v477
    %v482 = vrcp.pop %v480
    %v483 = vmul.f32 %v472, %v481
    %v484 = vmul.f32 %v474, %v482
    %485 = vrot.lane.b32.xlu0 %v137, 104
    %v486 = vpop.permute.xlu0 %485
    %487 = vrot.lane.b32.xlu0 %v140, 104
    %v488 = vpop.permute.xlu0 %487
    %v492 = vsel %vm178, %v483, 0
    %v495 = vsel %vm178, %v484, 0
    %497 = vmatpush.msra.mxu0 0.0
    %498 = vmatpush.msra.mxu0 0.0
    %499 = vmatpush.msra.mxu0 0.0
    %500 = vmatpush.msra.mxu0 0.0
    %501 = vmatpush.msra.mxu0 0.0
    %502 = vmatpush.msra.mxu0 0.0
    %503 = vmatpush.msra.mxu0 0.0
    %504 = vmatpush.msra.mxu0 0.0
    %505 = vmatpush.msra.mxu0 0.0
    %506 = vmatpush.msra.mxu0 0.0
    %507 = vmatpush.msra.mxu0 0.0
    %508 = vmatpush.msra.mxu0 0.0
    %509 = vmatpush.msra.mxu0 0.0
    %510 = vmatpush.msra.mxu0 0.0
    %511 = vmatpush.msra.mxu0 %v488
    %512 = vmatpush.msra.mxu0 %v486
    %513 = vmatmul.f32.gmra.mxu0 %v492
    %v514 = vpop.f32.mrf.mxu0
    %v515 = vadd.f32 0.0, %v514
    %516 = vmatmul.f32.gmra.mxu0 %v495
    %v517 = vpop.f32.mrf.mxu0
    %v518 = vadd.f32 0.0, %v517
    %519 = vdwg.mxu0
    %522 = vrot.lane.b32.xlu0 %v323, 8
    %v523 = vpop.permute.xlu0 %522
    %524 = vrot.lane.b32.xlu0 %v326, 8
    %v525 = vpop.permute.xlu0 %524
    %530 = vrot.lane.b32.xlu0 %v419, 16
    %v531 = vpop.permute.xlu0 %530
    %532 = vrot.lane.b32.xlu0 %v422, 16
    %v533 = vpop.permute.xlu0 %532
    %538 = vrot.lane.b32.xlu0 %v515, 24
    %v539 = vpop.permute.xlu0 %538
    %540 = vrot.lane.b32.xlu0 %v518, 24
    %v541 = vpop.permute.xlu0 %540
    %v544 = vsel %vm142, %v225, %v523
    %v545 = vsel %vm142, %v228, %v525
    %v546 = vsel %vm178, %v544, %v531
    %v547 = vsel %vm178, %v545, %v533
    %vm548 = vcmask 195584
    %v549 = vsel %vm548, %v546, %v539
    %v550 = vsel %vm548, %v547, %v541
    %s551 = scalar_lea.vmem %s3, 96
    %v552 = vld [vmem:[%s551] sm:$0xff]
    %v553 = vld [vmem:[%s551 + $0x8] sm:$0xff]
    %v554 = vld [vmem:[%s551 + $0x10] sm:$0xff]
    %v555 = vld [vmem:[%s551 + $0x18] sm:$0xff]
    %v556 = vperm.slane %v38, 3
    %v558 = vsel %vm54, %v549, 0
    %v561 = vsel %vm54, %v550, 0
    %563 = vmatpush.msra.mxu0 0.0
    %564 = vmatpush.msra.mxu0 0.0
    %565 = vmatpush.msra.mxu0 0.0
    %566 = vmatpush.msra.mxu0 0.0
    %567 = vmatpush.msra.mxu0 0.0
    %568 = vmatpush.msra.mxu0 0.0
    %569 = vmatpush.msra.mxu0 0.0
    %570 = vmatpush.msra.mxu0 0.0
    %571 = vmatpush.msra.mxu0 0.0
    %572 = vmatpush.msra.mxu0 0.0
    %573 = vmatpush.msra.mxu0 0.0
    %574 = vmatpush.msra.mxu0 0.0
    %575 = vmatpush.msra.mxu0 %v555
    %576 = vmatpush.msra.mxu0 %v554
    %577 = vmatpush.msra.mxu0 %v553
    %578 = vmatpush.msra.mxu0 %v552
    %579 = vmatmul.f32.gmra.mxu0 %v558
    %v580 = vpop.f32.mrf.mxu0
    %v581 = vadd.f32 %v556, %v580
    %582 = vmatmul.f32.gmra.mxu0 %v561
    %v583 = vpop.f32.mrf.mxu0
    %v584 = vadd.f32 %v556, %v583
    %585 = vdwg.mxu0
    %v586 = vadd.f32 %v47, %v581
    %v587 = vadd.f32 %v48, %v584
    %v588 = vsel %vm54, %v586, 0.0
    %589 = vadd.xlane.f32.xlu0 %v588
    %v590 = vpop.xlane.xlu0 %589
    %v591 = vsel %vm54, %v587, 0.0
    %592 = vadd.xlane.f32.xlu0 %v591
    %v593 = vpop.xlane.xlu0 %592
    %v594 = vrcp.pop 32.0
    %v595 = vmul.f32 32.0, %v594
    %v596 = vsub.f32 1.0, %v595
    %v597 = vmul.f32 %v594, %v596
    %v598 = vadd.f32 %v594, %v597
    %vm599 = vweird.f32 %v594
    %v600 = vsel %vm599, %v594, %v598
    %v601 = vmul.f32 %v590, %v600
    %v602 = vmul.f32 %v593, %v600
    %v603 = vsub.f32 %v586, %v601
    %v604 = vsub.f32 %v587, %v602
    %v605 = vmul.f32 %v603, %v603
    %v606 = vmul.f32 %v604, %v604
    %v607 = vsel %vm54, %v605, 0.0
    %608 = vadd.xlane.f32.xlu0 %v607
    %v609 = vpop.xlane.xlu0 %608
    %v610 = vsel %vm54, %v606, 0.0
    %611 = vadd.xlane.f32.xlu0 %v610
    %v612 = vpop.xlane.xlu0 %611
    %v613 = vmul.f32 %v609, %v600
    %v614 = vmul.f32 %v612, %v600
    %v615 = vadd.f32 %v613, 1e-05
    %v616 = vadd.f32 %v614, 1e-05
    %v617 = vrsqrt.pop %v615
    %v618 = vmul.f32 %v617, %v615
    %v619 = vmul.f32 %v618, %v617
    %v620 = vmul.f32 0.5, %v619
    %v621 = vsub.f32 1.5, %v620
    %v622 = vmul.f32 %v617, %v621
    %vm623 = vweird.f32 %v615
    %vm624 = vweird.f32 %v617
    %vm625 = vmor %vm623, %vm624
    %v626 = vsel %vm625, %v617, %v622
    %v627 = vrsqrt.pop %v616
    %v628 = vmul.f32 %v627, %v616
    %v629 = vmul.f32 %v628, %v627
    %v630 = vmul.f32 0.5, %v629
    %v631 = vsub.f32 1.5, %v630
    %v632 = vmul.f32 %v627, %v631
    %vm633 = vweird.f32 %v616
    %vm634 = vweird.f32 %v627
    %vm635 = vmor %vm633, %vm634
    %v636 = vsel %vm635, %v627, %v632
    %v637 = vmul.f32 %v603, %v626
    %v638 = vmul.f32 %v604, %v636
    %v639 = vperm.slane %v38, 4
    %v640 = vmul.f32 %v637, %v639
    %v641 = vmul.f32 %v638, %v639
    %v642 = vperm.slane %v38, 5
    %v643 = vadd.f32 %v640, %v642
    %v644 = vadd.f32 %v641, %v642
    %v645 = vld [vmem:[%s4] sm:$0xff]
    %v646 = vld [vmem:[%s4 + $0x8] sm:$0xff]
    %v647 = vld [vmem:[%s4 + $0x10] sm:$0xff]
    %v648 = vld [vmem:[%s4 + $0x18] sm:$0xff]
    %v649 = vperm.slane %v42, 0
    %v651 = vsel %vm54, %v643, 0
    %v654 = vsel %vm54, %v644, 0
    %656 = vmatpush.msra.mxu0 0.0
    %657 = vmatpush.msra.mxu0 0.0
    %658 = vmatpush.msra.mxu0 0.0
    %659 = vmatpush.msra.mxu0 0.0
    %660 = vmatpush.msra.mxu0 0.0
    %661 = vmatpush.msra.mxu0 0.0
    %662 = vmatpush.msra.mxu0 0.0
    %663 = vmatpush.msra.mxu0 0.0
    %664 = vmatpush.msra.mxu0 0.0
    %665 = vmatpush.msra.mxu0 0.0
    %666 = vmatpush.msra.mxu0 0.0
    %667 = vmatpush.msra.mxu0 0.0
    %668 = vmatpush.msra.mxu0 %v648
    %669 = vmatpush.msra.mxu0 %v647
    %670 = vmatpush.msra.mxu0 %v646
    %671 = vmatpush.msra.mxu0 %v645
    %672 = vmatmul.f32.gmra.mxu0 %v651
    %v673 = vpop.f32.mrf.mxu0
    %v674 = vadd.f32 %v649, %v673
    %675 = vmatmul.f32.gmra.mxu0 %v654
    %v676 = vpop.f32.mrf.mxu0
    %v677 = vadd.f32 %v649, %v676
    %678 = vdwg.mxu0
    %v679 = vmax.f32 %v674, 0.0
    %v680 = vmax.f32 %v677, 0.0
    %v681 = vld [vmem:[%s5] sm:$0xff]
    %v682 = vld [vmem:[%s5 + $0x8] sm:$0xff]
    %v683 = vld [vmem:[%s5 + $0x10] sm:$0xff]
    %v684 = vld [vmem:[%s5 + $0x18] sm:$0xff]
    %v685 = vld [vmem:[%s5 + $0x20] sm:$0xff]
    %v686 = vld [vmem:[%s5 + $0x28] sm:$0xff]
    %v687 = vld [vmem:[%s5 + $0x30] sm:$0xff]
    %v688 = vld [vmem:[%s5 + $0x38] sm:$0xff]
    %v689 = vperm.slane %v38, 6
    %vm690 = vcmask 523264
    %v692 = vsel %vm690, %v679, 0
    %v695 = vsel %vm690, %v680, 0
    %697 = vmatpush.msra.mxu0 0.0
    %698 = vmatpush.msra.mxu0 0.0
    %699 = vmatpush.msra.mxu0 0.0
    %700 = vmatpush.msra.mxu0 0.0
    %701 = vmatpush.msra.mxu0 0.0
    %702 = vmatpush.msra.mxu0 0.0
    %703 = vmatpush.msra.mxu0 0.0
    %704 = vmatpush.msra.mxu0 0.0
    %705 = vmatpush.msra.mxu0 %v688
    %706 = vmatpush.msra.mxu0 %v687
    %707 = vmatpush.msra.mxu0 %v686
    %708 = vmatpush.msra.mxu0 %v685
    %709 = vmatpush.msra.mxu0 %v684
    %710 = vmatpush.msra.mxu0 %v683
    %711 = vmatpush.msra.mxu0 %v682
    %712 = vmatpush.msra.mxu0 %v681
    %713 = vmatmul.f32.gmra.mxu0 %v692
    %v714 = vpop.f32.mrf.mxu0
    %v715 = vadd.f32 %v689, %v714
    %716 = vmatmul.f32.gmra.mxu0 %v695
    %v717 = vpop.f32.mrf.mxu0
    %v718 = vadd.f32 %v689, %v717
    %719 = vdwg.mxu0
    %v720 = vadd.f32 %v643, %v715
    %v721 = vadd.f32 %v644, %v718
    %v722 = vsel %vm54, %v720, 0.0
    %723 = vadd.xlane.f32.xlu0 %v722
    %v724 = vpop.xlane.xlu0 %723
    %v725 = vsel %vm54, %v721, 0.0
    %726 = vadd.xlane.f32.xlu0 %v725
    %v727 = vpop.xlane.xlu0 %726
    %v728 = vmul.f32 %v724, %v600
    %v729 = vmul.f32 %v727, %v600
    %v730 = vsub.f32 %v720, %v728
    %v731 = vsub.f32 %v721, %v729
    %v732 = vmul.f32 %v730, %v730
    %v733 = vmul.f32 %v731, %v731
    %v734 = vsel %vm54, %v732, 0.0
    %735 = vadd.xlane.f32.xlu0 %v734
    %v736 = vpop.xlane.xlu0 %735
    %v737 = vsel %vm54, %v733, 0.0
    %738 = vadd.xlane.f32.xlu0 %v737
    %v739 = vpop.xlane.xlu0 %738
    %v740 = vmul.f32 %v736, %v600
    %v741 = vmul.f32 %v739, %v600
    %v742 = vadd.f32 %v740, 1e-05
    %v743 = vadd.f32 %v741, 1e-05
    %v744 = vrsqrt.pop %v742
    %v745 = vmul.f32 %v744, %v742
    %v746 = vmul.f32 %v745, %v744
    %v747 = vmul.f32 0.5, %v746
    %v748 = vsub.f32 1.5, %v747
    %v749 = vmul.f32 %v744, %v748
    %vm750 = vweird.f32 %v742
    %vm751 = vweird.f32 %v744
    %vm752 = vmor %vm750, %vm751
    %v753 = vsel %vm752, %v744, %v749
    %v754 = vrsqrt.pop %v743
    %v755 = vmul.f32 %v754, %v743
    %v756 = vmul.f32 %v755, %v754
    %v757 = vmul.f32 0.5, %v756
    %v758 = vsub.f32 1.5, %v757
    %v759 = vmul.f32 %v754, %v758
    %vm760 = vweird.f32 %v743
    %vm761 = vweird.f32 %v754
    %vm762 = vmor %vm760, %vm761
    %v763 = vsel %vm762, %v754, %v759
    %v764 = vmul.f32 %v730, %v753
    %v765 = vmul.f32 %v731, %v763
    %v766 = vperm.slane %v38, 7
    %v767 = vmul.f32 %v764, %v766
    %v768 = vmul.f32 %v765, %v766
    %v769 = vperm.slane %v39, 0
    %v770 = vadd.f32 %v767, %v769
    %v771 = vadd.f32 %v768, %v769
    %s772 = scalar_lea.vmem %s3, 128
    %v773 = vld [vmem:[%s772] sm:$0xff]
    %v774 = vld [vmem:[%s772 + $0x8] sm:$0xff]
    %v775 = vld [vmem:[%s772 + $0x10] sm:$0xff]
    %v776 = vld [vmem:[%s772 + $0x18] sm:$0xff]
    %v777 = vperm.slane %v39, 1
    %v779 = vsel %vm54, %v37, 0
    %781 = vmatpush.msra.mxu0 0.0
    %782 = vmatpush.msra.mxu0 0.0
    %783 = vmatpush.msra.mxu0 0.0
    %784 = vmatpush.msra.mxu0 0.0
    %785 = vmatpush.msra.mxu0 0.0
    %786 = vmatpush.msra.mxu0 0.0
    %787 = vmatpush.msra.mxu0 0.0
    %788 = vmatpush.msra.mxu0 0.0
    %789 = vmatpush.msra.mxu0 0.0
    %790 = vmatpush.msra.mxu0 0.0
    %791 = vmatpush.msra.mxu0 0.0
    %792 = vmatpush.msra.mxu0 0.0
    %793 = vmatpush.msra.mxu0 %v776
    %794 = vmatpush.msra.mxu0 %v775
    %795 = vmatpush.msra.mxu0 %v774
    %796 = vmatpush.msra.mxu0 %v773
    %797 = vmatmul.f32.gmra.mxu0 %v779
    %v798 = vpop.f32.mrf.mxu0
    %v799 = vadd.f32 %v777, %v798
    %800 = vdwg.mxu0
    %s801 = scalar_lea.vmem %s3, 160
    %v802 = vld [vmem:[%s801] sm:$0xff]
    %v803 = vld [vmem:[%s801 + $0x8] sm:$0xff]
    %v804 = vld [vmem:[%s801 + $0x10] sm:$0xff]
    %v805 = vld [vmem:[%s801 + $0x18] sm:$0xff]
    %v806 = vperm.slane %v39, 2
    %807 = vmatpush.msra.mxu0 0.0
    %808 = vmatpush.msra.mxu0 0.0
    %809 = vmatpush.msra.mxu0 0.0
    %810 = vmatpush.msra.mxu0 0.0
    %811 = vmatpush.msra.mxu0 0.0
    %812 = vmatpush.msra.mxu0 0.0
    %813 = vmatpush.msra.mxu0 0.0
    %814 = vmatpush.msra.mxu0 0.0
    %815 = vmatpush.msra.mxu0 0.0
    %816 = vmatpush.msra.mxu0 0.0
    %817 = vmatpush.msra.mxu0 0.0
    %818 = vmatpush.msra.mxu0 0.0
    %819 = vmatpush.msra.mxu0 %v805
    %820 = vmatpush.msra.mxu0 %v804
    %821 = vmatpush.msra.mxu0 %v803
    %822 = vmatpush.msra.mxu0 %v802
    %823 = vmatmul.f32.gmra.mxu0 %v779
    %v824 = vpop.f32.mrf.mxu0
    %v825 = vadd.f32 %v806, %v824
    %826 = vdwg.mxu0
    %s827 = scalar_lea.vmem %s3, 192
    %v828 = vld [vmem:[%s827] sm:$0xff]
    %v829 = vld [vmem:[%s827 + $0x8] sm:$0xff]
    %v830 = vld [vmem:[%s827 + $0x10] sm:$0xff]
    %v831 = vld [vmem:[%s827 + $0x18] sm:$0xff]
    %v832 = vperm.slane %v39, 3
    %833 = vmatpush.msra.mxu0 0.0
    %834 = vmatpush.msra.mxu0 0.0
    %835 = vmatpush.msra.mxu0 0.0
    %836 = vmatpush.msra.mxu0 0.0
    %837 = vmatpush.msra.mxu0 0.0
    %838 = vmatpush.msra.mxu0 0.0
    %839 = vmatpush.msra.mxu0 0.0
    %840 = vmatpush.msra.mxu0 0.0
    %841 = vmatpush.msra.mxu0 0.0
    %842 = vmatpush.msra.mxu0 0.0
    %843 = vmatpush.msra.mxu0 0.0
    %844 = vmatpush.msra.mxu0 0.0
    %845 = vmatpush.msra.mxu0 %v831
    %846 = vmatpush.msra.mxu0 %v830
    %847 = vmatpush.msra.mxu0 %v829
    %848 = vmatpush.msra.mxu0 %v828
    %849 = vmatmul.f32.gmra.mxu0 %v779
    %v850 = vpop.f32.mrf.mxu0
    %v851 = vadd.f32 %v832, %v850
    %852 = vdwg.mxu0
    %v854 = vsel %vm142, %v799, 0
    %v857 = vsel %vm142, %v825, 0
    %859 = vmatpush.xpose.msra.mxu0 0.0
    %860 = vmatpush.xpose.msra.mxu0 0.0
    %861 = vmatpush.xpose.msra.mxu0 0.0
    %862 = vmatpush.xpose.msra.mxu0 0.0
    %863 = vmatpush.xpose.msra.mxu0 0.0
    %864 = vmatpush.xpose.msra.mxu0 0.0
    %865 = vmatpush.xpose.msra.mxu0 0.0
    %866 = vmatpush.xpose.msra.mxu0 0.0
    %867 = vmatpush.xpose.msra.mxu0 0.0
    %868 = vmatpush.xpose.msra.mxu0 0.0
    %869 = vmatpush.xpose.msra.mxu0 0.0
    %870 = vmatpush.xpose.msra.mxu0 0.0
    %871 = vmatpush.xpose.msra.mxu0 0.0
    %872 = vmatpush.xpose.msra.mxu0 0.0
    %873 = vmatpush.xpose.msra.mxu0 0.0
    %874 = vmatpush.xpose.msra.mxu0 %v857
    %875 = vmatmul.f32.gmra.mxu0 %v854
    %v876 = vpop.f32.mrf.mxu0
    %v877 = vadd.f32 0.0, %v876
    %878 = vdwg.mxu0
    %vm879 = vcmask 27648
    %v880 = vsel %vm879, %v877, -inf
    %881 = vmax.xlane.f32.xlu0 %v880
    %v882 = vpop.xlane.xlu0 %881
    %v883 = vsub.f32 %v877, %v882
    %v884 = vmul.f32 %v883, 1.442695
    %v885 = vpow.pop %v884
    %v886 = vsel %vm879, %v885, 0.0
    %887 = vadd.xlane.f32.xlu0 %v886
    %v888 = vpop.xlane.xlu0 %887
    %v889 = vrcp.pop %v888
    %v890 = vmul.f32 %v885, %v889
    %vm891 = vcmask 31744
    %v893 = vsel %vm891, %v890, 0
    %vm895 = vcmask 1043456
    %v897 = vsel %vm895, %v851, 0
    %899 = vmatpush.msra.mxu0 0.0
    %900 = vmatpush.msra.mxu0 0.0
    %901 = vmatpush.msra.mxu0 0.0
    %902 = vmatpush.msra.mxu0 0.0
    %903 = vmatpush.msra.mxu0 0.0
    %904 = vmatpush.msra.mxu0 0.0
    %905 = vmatpush.msra.mxu0 0.0
    %906 = vmatpush.msra.mxu0 0.0
    %907 = vmatpush.msra.mxu0 0.0
    %908 = vmatpush.msra.mxu0 0.0
    %909 = vmatpush.msra.mxu0 0.0
    %910 = vmatpush.msra.mxu0 0.0
    %911 = vmatpush.msra.mxu0 0.0
    %912 = vmatpush.msra.mxu0 0.0
    %913 = vmatpush.msra.mxu0 0.0
    %914 = vmatpush.msra.mxu0 %v897
    %915 = vmatmul.f32.gmra.mxu0 %v893
    %v916 = vpop.f32.mrf.mxu0
    %v917 = vadd.f32 0.0, %v916
    %918 = vdwg.mxu0
    %919 = vrot.lane.b32.xlu0 %v799, 120
    %v920 = vpop.permute.xlu0 %919
    %921 = vrot.lane.b32.xlu0 %v825, 120
    %v922 = vpop.permute.xlu0 %921
    %v923 = vsel %vm142, %v920, 0
    %v925 = vsel %vm142, %v922, 0
    %927 = vmatpush.xpose.msra.mxu0 0.0
    %928 = vmatpush.xpose.msra.mxu0 0.0
    %929 = vmatpush.xpose.msra.mxu0 0.0
    %930 = vmatpush.xpose.msra.mxu0 0.0
    %931 = vmatpush.xpose.msra.mxu0 0.0
    %932 = vmatpush.xpose.msra.mxu0 0.0
    %933 = vmatpush.xpose.msra.mxu0 0.0
    %934 = vmatpush.xpose.msra.mxu0 0.0
    %935 = vmatpush.xpose.msra.mxu0 0.0
    %936 = vmatpush.xpose.msra.mxu0 0.0
    %937 = vmatpush.xpose.msra.mxu0 0.0
    %938 = vmatpush.xpose.msra.mxu0 0.0
    %939 = vmatpush.xpose.msra.mxu0 0.0
    %940 = vmatpush.xpose.msra.mxu0 0.0
    %941 = vmatpush.xpose.msra.mxu0 0.0
    %942 = vmatpush.xpose.msra.mxu0 %v925
    %943 = vmatmul.f32.gmra.mxu0 %v923
    %v944 = vpop.f32.mrf.mxu0
    %v945 = vadd.f32 0.0, %v944
    %946 = vdwg.mxu0
    %v947 = vsel %vm879, %v945, -inf
    %948 = vmax.xlane.f32.xlu0 %v947
    %v949 = vpop.xlane.xlu0 %948
    %v950 = vsub.f32 %v945, %v949
    %v951 = vmul.f32 %v950, 1.442695
    %v952 = vpow.pop %v951
    %v953 = vsel %vm879, %v952, 0.0
    %954 = vadd.xlane.f32.xlu0 %v953
    %v955 = vpop.xlane.xlu0 %954
    %v956 = vrcp.pop %v955
    %v957 = vmul.f32 %v952, %v956
    %958 = vrot.lane.b32.xlu0 %v851, 120
    %v959 = vpop.permute.xlu0 %958
    %v961 = vsel %vm891, %v957, 0
    %v963 = vsel %vm895, %v959, 0
    %965 = vmatpush.msra.mxu0 0.0
    %966 = vmatpush.msra.mxu0 0.0
    %967 = vmatpush.msra.mxu0 0.0
    %968 = vmatpush.msra.mxu0 0.0
    %969 = vmatpush.msra.mxu0 0.0
    %970 = vmatpush.msra.mxu0 0.0
    %971 = vmatpush.msra.mxu0 0.0
    %972 = vmatpush.msra.mxu0 0.0
    %973 = vmatpush.msra.mxu0 0.0
    %974 = vmatpush.msra.mxu0 0.0
    %975 = vmatpush.msra.mxu0 0.0
    %976 = vmatpush.msra.mxu0 0.0
    %977 = vmatpush.msra.mxu0 0.0
    %978 = vmatpush.msra.mxu0 0.0
    %979 = vmatpush.msra.mxu0 0.0
    %980 = vmatpush.msra.mxu0 %v963
    %981 = vmatmul.f32.gmra.mxu0 %v961
    %v982 = vpop.f32.mrf.mxu0
    %v983 = vadd.f32 0.0, %v982
    %984 = vdwg.mxu0
    %985 = vrot.lane.b32.xlu0 %v799, 112
    %v986 = vpop.permute.xlu0 %985
    %987 = vrot.lane.b32.xlu0 %v825, 112
    %v988 = vpop.permute.xlu0 %987
    %v989 = vsel %vm142, %v986, 0
    %v991 = vsel %vm142, %v988, 0
    %993 = vmatpush.xpose.msra.mxu0 0.0
    %994 = vmatpush.xpose.msra.mxu0 0.0
    %995 = vmatpush.xpose.msra.mxu0 0.0
    %996 = vmatpush.xpose.msra.mxu0 0.0
    %997 = vmatpush.xpose.msra.mxu0 0.0
    %998 = vmatpush.xpose.msra.mxu0 0.0
    %999 = vmatpush.xpose.msra.mxu0 0.0
    %1000 = vmatpush.xpose.msra.mxu0 0.0
    %1001 = vmatpush.xpose.msra.mxu0 0.0
    %1002 = vmatpush.xpose.msra.mxu0 0.0
    %1003 = vmatpush.xpose.msra.mxu0 0.0
    %1004 = vmatpush.xpose.msra.mxu0 0.0
    %1005 = vmatpush.xpose.msra.mxu0 0.0
    %1006 = vmatpush.xpose.msra.mxu0 0.0
    %1007 = vmatpush.xpose.msra.mxu0 0.0
    %1008 = vmatpush.xpose.msra.mxu0 %v991
    %1009 = vmatmul.f32.gmra.mxu0 %v989
    %v1010 = vpop.f32.mrf.mxu0
    %v1011 = vadd.f32 0.0, %v1010
    %1012 = vdwg.mxu0
    %v1013 = vsel %vm879, %v1011, -inf
    %1014 = vmax.xlane.f32.xlu0 %v1013
    %v1015 = vpop.xlane.xlu0 %1014
    %v1016 = vsub.f32 %v1011, %v1015
    %v1017 = vmul.f32 %v1016, 1.442695
    %v1018 = vpow.pop %v1017
    %v1019 = vsel %vm879, %v1018, 0.0
    %1020 = vadd.xlane.f32.xlu0 %v1019
    %v1021 = vpop.xlane.xlu0 %1020
    %v1022 = vrcp.pop %v1021
    %v1023 = vmul.f32 %v1018, %v1022
    %1024 = vrot.lane.b32.xlu0 %v851, 112
    %v1025 = vpop.permute.xlu0 %1024
    %v1027 = vsel %vm891, %v1023, 0
    %v1029 = vsel %vm895, %v1025, 0
    %1031 = vmatpush.msra.mxu0 0.0
    %1032 = vmatpush.msra.mxu0 0.0
    %1033 = vmatpush.msra.mxu0 0.0
    %1034 = vmatpush.msra.mxu0 0.0
    %1035 = vmatpush.msra.mxu0 0.0
    %1036 = vmatpush.msra.mxu0 0.0
    %1037 = vmatpush.msra.mxu0 0.0
    %1038 = vmatpush.msra.mxu0 0.0
    %1039 = vmatpush.msra.mxu0 0.0
    %1040 = vmatpush.msra.mxu0 0.0
    %1041 = vmatpush.msra.mxu0 0.0
    %1042 = vmatpush.msra.mxu0 0.0
    %1043 = vmatpush.msra.mxu0 0.0
    %1044 = vmatpush.msra.mxu0 0.0
    %1045 = vmatpush.msra.mxu0 0.0
    %1046 = vmatpush.msra.mxu0 %v1029
    %1047 = vmatmul.f32.gmra.mxu0 %v1027
    %v1048 = vpop.f32.mrf.mxu0
    %v1049 = vadd.f32 0.0, %v1048
    %1050 = vdwg.mxu0
    %1051 = vrot.lane.b32.xlu0 %v799, 104
    %v1052 = vpop.permute.xlu0 %1051
    %1053 = vrot.lane.b32.xlu0 %v825, 104
    %v1054 = vpop.permute.xlu0 %1053
    %v1055 = vsel %vm142, %v1052, 0
    %v1057 = vsel %vm142, %v1054, 0
    %1059 = vmatpush.xpose.msra.mxu0 0.0
    %1060 = vmatpush.xpose.msra.mxu0 0.0
    %1061 = vmatpush.xpose.msra.mxu0 0.0
    %1062 = vmatpush.xpose.msra.mxu0 0.0
    %1063 = vmatpush.xpose.msra.mxu0 0.0
    %1064 = vmatpush.xpose.msra.mxu0 0.0
    %1065 = vmatpush.xpose.msra.mxu0 0.0
    %1066 = vmatpush.xpose.msra.mxu0 0.0
    %1067 = vmatpush.xpose.msra.mxu0 0.0
    %1068 = vmatpush.xpose.msra.mxu0 0.0
    %1069 = vmatpush.xpose.msra.mxu0 0.0
    %1070 = vmatpush.xpose.msra.mxu0 0.0
    %1071 = vmatpush.xpose.msra.mxu0 0.0
    %1072 = vmatpush.xpose.msra.mxu0 0.0
    %1073 = vmatpush.xpose.msra.mxu0 0.0
    %1074 = vmatpush.xpose.msra.mxu0 %v1057
    %1075 = vmatmul.f32.gmra.mxu0 %v1055
    %v1076 = vpop.f32.mrf.mxu0
    %v1077 = vadd.f32 0.0, %v1076
    %1078 = vdwg.mxu0
    %v1079 = vsel %vm879, %v1077, -inf
    %1080 = vmax.xlane.f32.xlu0 %v1079
    %v1081 = vpop.xlane.xlu0 %1080
    %v1082 = vsub.f32 %v1077, %v1081
    %v1083 = vmul.f32 %v1082, 1.442695
    %v1084 = vpow.pop %v1083
    %v1085 = vsel %vm879, %v1084, 0.0
    %1086 = vadd.xlane.f32.xlu0 %v1085
    %v1087 = vpop.xlane.xlu0 %1086
    %v1088 = vrcp.pop %v1087
    %v1089 = vmul.f32 %v1084, %v1088
    %1090 = vrot.lane.b32.xlu0 %v851, 104
    %v1091 = vpop.permute.xlu0 %1090
    %v1093 = vsel %vm891, %v1089, 0
    %v1095 = vsel %vm895, %v1091, 0
    %1097 = vmatpush.msra.mxu0 0.0
    %1098 = vmatpush.msra.mxu0 0.0
    %1099 = vmatpush.msra.mxu0 0.0
    %1100 = vmatpush.msra.mxu0 0.0
    %1101 = vmatpush.msra.mxu0 0.0
    %1102 = vmatpush.msra.mxu0 0.0
    %1103 = vmatpush.msra.mxu0 0.0
    %1104 = vmatpush.msra.mxu0 0.0
    %1105 = vmatpush.msra.mxu0 0.0
    %1106 = vmatpush.msra.mxu0 0.0
    %1107 = vmatpush.msra.mxu0 0.0
    %1108 = vmatpush.msra.mxu0 0.0
    %1109 = vmatpush.msra.mxu0 0.0
    %1110 = vmatpush.msra.mxu0 0.0
    %1111 = vmatpush.msra.mxu0 0.0
    %1112 = vmatpush.msra.mxu0 %v1095
    %1113 = vmatmul.f32.gmra.mxu0 %v1093
    %v1114 = vpop.f32.mrf.mxu0
    %v1115 = vadd.f32 0.0, %v1114
    %1116 = vdwg.mxu0
    %1118 = vrot.lane.b32.xlu0 %v983, 8
    %v1119 = vpop.permute.xlu0 %1118
    %1122 = vrot.lane.b32.xlu0 %v1049, 16
    %v1123 = vpop.permute.xlu0 %1122
    %1126 = vrot.lane.b32.xlu0 %v1115, 24
    %v1127 = vpop.permute.xlu0 %1126
    %v1129 = vsel %vm142, %v917, %v1119
    %v1130 = vsel %vm178, %v1129, %v1123
    %v1131 = vsel %vm548, %v1130, %v1127
    %s1132 = scalar_lea.vmem %s3, 224
    %v1133 = vld [vmem:[%s1132] sm:$0xff]
    %v1134 = vld [vmem:[%s1132 + $0x8] sm:$0xff]
    %v1135 = vld [vmem:[%s1132 + $0x10] sm:$0xff]
    %v1136 = vld [vmem:[%s1132 + $0x18] sm:$0xff]
    %v1137 = vperm.slane %v39, 4
    %v1139 = vsel %vm54, %v1131, 0
    %1141 = vmatpush.msra.mxu0 0.0
    %1142 = vmatpush.msra.mxu0 0.0
    %1143 = vmatpush.msra.mxu0 0.0
    %1144 = vmatpush.msra.mxu0 0.0
    %1145 = vmatpush.msra.mxu0 0.0
    %1146 = vmatpush.msra.mxu0 0.0
    %1147 = vmatpush.msra.mxu0 0.0
    %1148 = vmatpush.msra.mxu0 0.0
    %1149 = vmatpush.msra.mxu0 0.0
    %1150 = vmatpush.msra.mxu0 0.0
    %1151 = vmatpush.msra.mxu0 0.0
    %1152 = vmatpush.msra.mxu0 0.0
    %1153 = vmatpush.msra.mxu0 %v1136
    %1154 = vmatpush.msra.mxu0 %v1135
    %1155 = vmatpush.msra.mxu0 %v1134
    %1156 = vmatpush.msra.mxu0 %v1133
    %1157 = vmatmul.f32.gmra.mxu0 %v1139
    %v1158 = vpop.f32.mrf.mxu0
    %v1159 = vadd.f32 %v1137, %v1158
    %1160 = vdwg.mxu0
    %v1161 = vadd.f32 %v37, %v1159
    %vm1162 = vcmask 257024
    %v1163 = vsel %vm1162, %v1161, 0.0
    %1164 = vadd.xlane.f32.xlu0 %v1163
    %v1165 = vpop.xlane.xlu0 %1164
    %v1166 = vmul.f32 %v1165, %v600
    %v1167 = vsub.f32 %v1161, %v1166
    %v1168 = vmul.f32 %v1167, %v1167
    %v1169 = vsel %vm1162, %v1168, 0.0
    %1170 = vadd.xlane.f32.xlu0 %v1169
    %v1171 = vpop.xlane.xlu0 %1170
    %v1172 = vmul.f32 %v1171, %v600
    %v1173 = vadd.f32 %v1172, 1e-05
    %v1174 = vrsqrt.pop %v1173
    %v1175 = vmul.f32 %v1174, %v1173
    %v1176 = vmul.f32 %v1175, %v1174
    %v1177 = vmul.f32 0.5, %v1176
    %v1178 = vsub.f32 1.5, %v1177
    %v1179 = vmul.f32 %v1174, %v1178
    %vm1180 = vweird.f32 %v1173
    %vm1181 = vweird.f32 %v1174
    %vm1182 = vmor %vm1180, %vm1181
    %v1183 = vsel %vm1182, %v1174, %v1179
    %v1184 = vmul.f32 %v1167, %v1183
    %v1185 = vperm.slane %v39, 5
    %v1186 = vmul.f32 %v1184, %v1185
    %v1187 = vperm.slane %v39, 6
    %v1188 = vadd.f32 %v1186, %v1187
    %s1189 = scalar_lea.vmem %s3, 256
    %v1190 = vld [vmem:[%s1189] sm:$0xff]
    %v1191 = vld [vmem:[%s1189 + $0x8] sm:$0xff]
    %v1192 = vld [vmem:[%s1189 + $0x10] sm:$0xff]
    %v1193 = vld [vmem:[%s1189 + $0x18] sm:$0xff]
    %v1194 = vperm.slane %v39, 7
    %v1196 = vsel %vm54, %v1188, 0
    %1198 = vmatpush.msra.mxu0 0.0
    %1199 = vmatpush.msra.mxu0 0.0
    %1200 = vmatpush.msra.mxu0 0.0
    %1201 = vmatpush.msra.mxu0 0.0
    %1202 = vmatpush.msra.mxu0 0.0
    %1203 = vmatpush.msra.mxu0 0.0
    %1204 = vmatpush.msra.mxu0 0.0
    %1205 = vmatpush.msra.mxu0 0.0
    %1206 = vmatpush.msra.mxu0 0.0
    %1207 = vmatpush.msra.mxu0 0.0
    %1208 = vmatpush.msra.mxu0 0.0
    %1209 = vmatpush.msra.mxu0 0.0
    %1210 = vmatpush.msra.mxu0 %v1193
    %1211 = vmatpush.msra.mxu0 %v1192
    %1212 = vmatpush.msra.mxu0 %v1191
    %1213 = vmatpush.msra.mxu0 %v1190
    %1214 = vmatmul.f32.gmra.mxu0 %v1196
    %v1215 = vpop.f32.mrf.mxu0
    %v1216 = vadd.f32 %v1194, %v1215
    %1217 = vdwg.mxu0
    %s1218 = scalar_lea.vmem %s3, 288
    %v1219 = vld [vmem:[%s1218] sm:$0xff]
    %v1220 = vld [vmem:[%s1218 + $0x8] sm:$0xff]
    %v1221 = vld [vmem:[%s1218 + $0x10] sm:$0xff]
    %v1222 = vld [vmem:[%s1218 + $0x18] sm:$0xff]
    %v1223 = vperm.slane %v40, 0
    %v1225 = vsel %vm54, %v770, 0
    %v1228 = vsel %vm54, %v771, 0
    %1230 = vmatpush.msra.mxu0 0.0
    %1231 = vmatpush.msra.mxu0 0.0
    %1232 = vmatpush.msra.mxu0 0.0
    %1233 = vmatpush.msra.mxu0 0.0
    %1234 = vmatpush.msra.mxu0 0.0
    %1235 = vmatpush.msra.mxu0 0.0
    %1236 = vmatpush.msra.mxu0 0.0
    %1237 = vmatpush.msra.mxu0 0.0
    %1238 = vmatpush.msra.mxu0 0.0
    %1239 = vmatpush.msra.mxu0 0.0
    %1240 = vmatpush.msra.mxu0 0.0
    %1241 = vmatpush.msra.mxu0 0.0
    %1242 = vmatpush.msra.mxu0 %v1222
    %1243 = vmatpush.msra.mxu0 %v1221
    %1244 = vmatpush.msra.mxu0 %v1220
    %1245 = vmatpush.msra.mxu0 %v1219
    %1246 = vmatmul.f32.gmra.mxu0 %v1225
    %v1247 = vpop.f32.mrf.mxu0
    %v1248 = vadd.f32 %v1223, %v1247
    %1249 = vmatmul.f32.gmra.mxu0 %v1228
    %v1250 = vpop.f32.mrf.mxu0
    %v1251 = vadd.f32 %v1223, %v1250
    %1252 = vdwg.mxu0
    %s1253 = scalar_lea.vmem %s3, 320
    %v1254 = vld [vmem:[%s1253] sm:$0xff]
    %v1255 = vld [vmem:[%s1253 + $0x8] sm:$0xff]
    %v1256 = vld [vmem:[%s1253 + $0x10] sm:$0xff]
    %v1257 = vld [vmem:[%s1253 + $0x18] sm:$0xff]
    %v1258 = vperm.slane %v40, 1
    %1259 = vmatpush.msra.mxu0 0.0
    %1260 = vmatpush.msra.mxu0 0.0
    %1261 = vmatpush.msra.mxu0 0.0
    %1262 = vmatpush.msra.mxu0 0.0
    %1263 = vmatpush.msra.mxu0 0.0
    %1264 = vmatpush.msra.mxu0 0.0
    %1265 = vmatpush.msra.mxu0 0.0
    %1266 = vmatpush.msra.mxu0 0.0
    %1267 = vmatpush.msra.mxu0 0.0
    %1268 = vmatpush.msra.mxu0 0.0
    %1269 = vmatpush.msra.mxu0 0.0
    %1270 = vmatpush.msra.mxu0 0.0
    %1271 = vmatpush.msra.mxu0 %v1257
    %1272 = vmatpush.msra.mxu0 %v1256
    %1273 = vmatpush.msra.mxu0 %v1255
    %1274 = vmatpush.msra.mxu0 %v1254
    %1275 = vmatmul.f32.gmra.mxu0 %v1225
    %v1276 = vpop.f32.mrf.mxu0
    %v1277 = vadd.f32 %v1258, %v1276
    %1278 = vmatmul.f32.gmra.mxu0 %v1228
    %v1279 = vpop.f32.mrf.mxu0
    %v1280 = vadd.f32 %v1258, %v1279
    %1281 = vdwg.mxu0
    %v1283 = vsel %vm142, %v1216, 0
    %v1286 = vsel %vm142, %v1248, 0
    %v1289 = vsel %vm142, %v1251, 0
    %1291 = vmatpush.xpose.msra.mxu0 0.0
    %1292 = vmatpush.xpose.msra.mxu0 0.0
    %1293 = vmatpush.xpose.msra.mxu0 0.0
    %1294 = vmatpush.xpose.msra.mxu0 0.0
    %1295 = vmatpush.xpose.msra.mxu0 0.0
    %1296 = vmatpush.xpose.msra.mxu0 0.0
    %1297 = vmatpush.xpose.msra.mxu0 0.0
    %1298 = vmatpush.xpose.msra.mxu0 0.0
    %1299 = vmatpush.xpose.msra.mxu0 0.0
    %1300 = vmatpush.xpose.msra.mxu0 0.0
    %1301 = vmatpush.xpose.msra.mxu0 0.0
    %1302 = vmatpush.xpose.msra.mxu0 0.0
    %1303 = vmatpush.xpose.msra.mxu0 0.0
    %1304 = vmatpush.xpose.msra.mxu0 0.0
    %1305 = vmatpush.xpose.msra.mxu0 %v1289
    %1306 = vmatpush.xpose.msra.mxu0 %v1286
    %1307 = vmatmul.f32.gmra.mxu0 %v1283
    %v1308 = vpop.f32.mrf.mxu0
    %v1309 = vadd.f32 0.0, %v1308
    %1310 = vdwg.mxu0
    %vm1311 = vcmask 125952
    %v1312 = vsel %vm1311, %v1309, -inf
    %1313 = vmax.xlane.f32.xlu0 %v1312
    %v1314 = vpop.xlane.xlu0 %1313
    %v1315 = vsub.f32 %v1309, %v1314
    %v1316 = vmul.f32 %v1315, 1.442695
    %v1317 = vpow.pop %v1316
    %v1318 = vsel %vm1311, %v1317, 0.0
    %1319 = vadd.xlane.f32.xlu0 %v1318
    %v1320 = vpop.xlane.xlu0 %1319
    %v1321 = vrcp.pop %v1320
    %v1322 = vmul.f32 %v1317, %v1321
    %v1324 = vsel %vm178, %v1322, 0
    %1326 = vmatpush.msra.mxu0 0.0
    %1327 = vmatpush.msra.mxu0 0.0
    %1328 = vmatpush.msra.mxu0 0.0
    %1329 = vmatpush.msra.mxu0 0.0
    %1330 = vmatpush.msra.mxu0 0.0
    %1331 = vmatpush.msra.mxu0 0.0
    %1332 = vmatpush.msra.mxu0 0.0
    %1333 = vmatpush.msra.mxu0 0.0
    %1334 = vmatpush.msra.mxu0 0.0
    %1335 = vmatpush.msra.mxu0 0.0
    %1336 = vmatpush.msra.mxu0 0.0
    %1337 = vmatpush.msra.mxu0 0.0
    %1338 = vmatpush.msra.mxu0 0.0
    %1339 = vmatpush.msra.mxu0 0.0
    %1340 = vmatpush.msra.mxu0 %v1280
    %1341 = vmatpush.msra.mxu0 %v1277
    %1342 = vmatmul.f32.gmra.mxu0 %v1324
    %v1343 = vpop.f32.mrf.mxu0
    %v1344 = vadd.f32 0.0, %v1343
    %1345 = vdwg.mxu0
    %1346 = vrot.lane.b32.xlu0 %v1216, 120
    %v1347 = vpop.permute.xlu0 %1346
    %1348 = vrot.lane.b32.xlu0 %v1248, 120
    %v1349 = vpop.permute.xlu0 %1348
    %1350 = vrot.lane.b32.xlu0 %v1251, 120
    %v1351 = vpop.permute.xlu0 %1350
    %v1352 = vsel %vm142, %v1347, 0
    %v1354 = vsel %vm142, %v1349, 0
    %v1356 = vsel %vm142, %v1351, 0
    %1358 = vmatpush.xpose.msra.mxu0 0.0
    %1359 = vmatpush.xpose.msra.mxu0 0.0
    %1360 = vmatpush.xpose.msra.mxu0 0.0
    %1361 = vmatpush.xpose.msra.mxu0 0.0
    %1362 = vmatpush.xpose.msra.mxu0 0.0
    %1363 = vmatpush.xpose.msra.mxu0 0.0
    %1364 = vmatpush.xpose.msra.mxu0 0.0
    %1365 = vmatpush.xpose.msra.mxu0 0.0
    %1366 = vmatpush.xpose.msra.mxu0 0.0
    %1367 = vmatpush.xpose.msra.mxu0 0.0
    %1368 = vmatpush.xpose.msra.mxu0 0.0
    %1369 = vmatpush.xpose.msra.mxu0 0.0
    %1370 = vmatpush.xpose.msra.mxu0 0.0
    %1371 = vmatpush.xpose.msra.mxu0 0.0
    %1372 = vmatpush.xpose.msra.mxu0 %v1356
    %1373 = vmatpush.xpose.msra.mxu0 %v1354
    %1374 = vmatmul.f32.gmra.mxu0 %v1352
    %v1375 = vpop.f32.mrf.mxu0
    %v1376 = vadd.f32 0.0, %v1375
    %1377 = vdwg.mxu0
    %v1378 = vsel %vm1311, %v1376, -inf
    %1379 = vmax.xlane.f32.xlu0 %v1378
    %v1380 = vpop.xlane.xlu0 %1379
    %v1381 = vsub.f32 %v1376, %v1380
    %v1382 = vmul.f32 %v1381, 1.442695
    %v1383 = vpow.pop %v1382
    %v1384 = vsel %vm1311, %v1383, 0.0
    %1385 = vadd.xlane.f32.xlu0 %v1384
    %v1386 = vpop.xlane.xlu0 %1385
    %v1387 = vrcp.pop %v1386
    %v1388 = vmul.f32 %v1383, %v1387
    %1391 = vrot.lane.b32.xlu0 %v1277, 120
    %v1392 = vpop.permute.xlu0 %1391
    %1393 = vrot.lane.b32.xlu0 %v1280, 120
    %v1394 = vpop.permute.xlu0 %1393
    %v1398 = vsel %vm178, %v1388, 0
    %1400 = vmatpush.msra.mxu0 0.0
    %1401 = vmatpush.msra.mxu0 0.0
    %1402 = vmatpush.msra.mxu0 0.0
    %1403 = vmatpush.msra.mxu0 0.0
    %1404 = vmatpush.msra.mxu0 0.0
    %1405 = vmatpush.msra.mxu0 0.0
    %1406 = vmatpush.msra.mxu0 0.0
    %1407 = vmatpush.msra.mxu0 0.0
    %1408 = vmatpush.msra.mxu0 0.0
    %1409 = vmatpush.msra.mxu0 0.0
    %1410 = vmatpush.msra.mxu0 0.0
    %1411 = vmatpush.msra.mxu0 0.0
    %1412 = vmatpush.msra.mxu0 0.0
    %1413 = vmatpush.msra.mxu0 0.0
    %1414 = vmatpush.msra.mxu0 %v1394
    %1415 = vmatpush.msra.mxu0 %v1392
    %1416 = vmatmul.f32.gmra.mxu0 %v1398
    %v1417 = vpop.f32.mrf.mxu0
    %v1418 = vadd.f32 0.0, %v1417
    %1419 = vdwg.mxu0
    %1420 = vrot.lane.b32.xlu0 %v1216, 112
    %v1421 = vpop.permute.xlu0 %1420
    %1422 = vrot.lane.b32.xlu0 %v1248, 112
    %v1423 = vpop.permute.xlu0 %1422
    %1424 = vrot.lane.b32.xlu0 %v1251, 112
    %v1425 = vpop.permute.xlu0 %1424
    %v1426 = vsel %vm142, %v1421, 0
    %v1428 = vsel %vm142, %v1423, 0
    %v1430 = vsel %vm142, %v1425, 0
    %1432 = vmatpush.xpose.msra.mxu0 0.0
    %1433 = vmatpush.xpose.msra.mxu0 0.0
    %1434 = vmatpush.xpose.msra.mxu0 0.0
    %1435 = vmatpush.xpose.msra.mxu0 0.0
    %1436 = vmatpush.xpose.msra.mxu0 0.0
    %1437 = vmatpush.xpose.msra.mxu0 0.0
    %1438 = vmatpush.xpose.msra.mxu0 0.0
    %1439 = vmatpush.xpose.msra.mxu0 0.0
    %1440 = vmatpush.xpose.msra.mxu0 0.0
    %1441 = vmatpush.xpose.msra.mxu0 0.0
    %1442 = vmatpush.xpose.msra.mxu0 0.0
    %1443 = vmatpush.xpose.msra.mxu0 0.0
    %1444 = vmatpush.xpose.msra.mxu0 0.0
    %1445 = vmatpush.xpose.msra.mxu0 0.0
    %1446 = vmatpush.xpose.msra.mxu0 %v1430
    %1447 = vmatpush.xpose.msra.mxu0 %v1428
    %1448 = vmatmul.f32.gmra.mxu0 %v1426
    %v1449 = vpop.f32.mrf.mxu0
    %v1450 = vadd.f32 0.0, %v1449
    %1451 = vdwg.mxu0
    %v1452 = vsel %vm1311, %v1450, -inf
    %1453 = vmax.xlane.f32.xlu0 %v1452
    %v1454 = vpop.xlane.xlu0 %1453
    %v1455 = vsub.f32 %v1450, %v1454
    %v1456 = vmul.f32 %v1455, 1.442695
    %v1457 = vpow.pop %v1456
    %v1458 = vsel %vm1311, %v1457, 0.0
    %1459 = vadd.xlane.f32.xlu0 %v1458
    %v1460 = vpop.xlane.xlu0 %1459
    %v1461 = vrcp.pop %v1460
    %v1462 = vmul.f32 %v1457, %v1461
    %1463 = vrot.lane.b32.xlu0 %v1277, 112
    %v1464 = vpop.permute.xlu0 %1463
    %1465 = vrot.lane.b32.xlu0 %v1280, 112
    %v1466 = vpop.permute.xlu0 %1465
    %v1470 = vsel %vm178, %v1462, 0
    %1472 = vmatpush.msra.mxu0 0.0
    %1473 = vmatpush.msra.mxu0 0.0
    %1474 = vmatpush.msra.mxu0 0.0
    %1475 = vmatpush.msra.mxu0 0.0
    %1476 = vmatpush.msra.mxu0 0.0
    %1477 = vmatpush.msra.mxu0 0.0
    %1478 = vmatpush.msra.mxu0 0.0
    %1479 = vmatpush.msra.mxu0 0.0
    %1480 = vmatpush.msra.mxu0 0.0
    %1481 = vmatpush.msra.mxu0 0.0
    %1482 = vmatpush.msra.mxu0 0.0
    %1483 = vmatpush.msra.mxu0 0.0
    %1484 = vmatpush.msra.mxu0 0.0
    %1485 = vmatpush.msra.mxu0 0.0
    %1486 = vmatpush.msra.mxu0 %v1466
    %1487 = vmatpush.msra.mxu0 %v1464
    %1488 = vmatmul.f32.gmra.mxu0 %v1470
    %v1489 = vpop.f32.mrf.mxu0
    %v1490 = vadd.f32 0.0, %v1489
    %1491 = vdwg.mxu0
    %1492 = vrot.lane.b32.xlu0 %v1216, 104
    %v1493 = vpop.permute.xlu0 %1492
    %1494 = vrot.lane.b32.xlu0 %v1248, 104
    %v1495 = vpop.permute.xlu0 %1494
    %1496 = vrot.lane.b32.xlu0 %v1251, 104
    %v1497 = vpop.permute.xlu0 %1496
    %v1498 = vsel %vm142, %v1493, 0
    %v1500 = vsel %vm142, %v1495, 0
    %v1502 = vsel %vm142, %v1497, 0
    %1504 = vmatpush.xpose.msra.mxu0 0.0
    %1505 = vmatpush.xpose.msra.mxu0 0.0
    %1506 = vmatpush.xpose.msra.mxu0 0.0
    %1507 = vmatpush.xpose.msra.mxu0 0.0
    %1508 = vmatpush.xpose.msra.mxu0 0.0
    %1509 = vmatpush.xpose.msra.mxu0 0.0
    %1510 = vmatpush.xpose.msra.mxu0 0.0
    %1511 = vmatpush.xpose.msra.mxu0 0.0
    %1512 = vmatpush.xpose.msra.mxu0 0.0
    %1513 = vmatpush.xpose.msra.mxu0 0.0
    %1514 = vmatpush.xpose.msra.mxu0 0.0
    %1515 = vmatpush.xpose.msra.mxu0 0.0
    %1516 = vmatpush.xpose.msra.mxu0 0.0
    %1517 = vmatpush.xpose.msra.mxu0 0.0
    %1518 = vmatpush.xpose.msra.mxu0 %v1502
    %1519 = vmatpush.xpose.msra.mxu0 %v1500
    %1520 = vmatmul.f32.gmra.mxu0 %v1498
    %v1521 = vpop.f32.mrf.mxu0
    %v1522 = vadd.f32 0.0, %v1521
    %1523 = vdwg.mxu0
    %v1524 = vsel %vm1311, %v1522, -inf
    %1525 = vmax.xlane.f32.xlu0 %v1524
    %v1526 = vpop.xlane.xlu0 %1525
    %v1527 = vsub.f32 %v1522, %v1526
    %v1528 = vmul.f32 %v1527, 1.442695
    %v1529 = vpow.pop %v1528
    %v1530 = vsel %vm1311, %v1529, 0.0
    %1531 = vadd.xlane.f32.xlu0 %v1530
    %v1532 = vpop.xlane.xlu0 %1531
    %v1533 = vrcp.pop %v1532
    %v1534 = vmul.f32 %v1529, %v1533
    %1535 = vrot.lane.b32.xlu0 %v1277, 104
    %v1536 = vpop.permute.xlu0 %1535
    %1537 = vrot.lane.b32.xlu0 %v1280, 104
    %v1538 = vpop.permute.xlu0 %1537
    %v1542 = vsel %vm178, %v1534, 0
    %1544 = vmatpush.msra.mxu0 0.0
    %1545 = vmatpush.msra.mxu0 0.0
    %1546 = vmatpush.msra.mxu0 0.0
    %1547 = vmatpush.msra.mxu0 0.0
    %1548 = vmatpush.msra.mxu0 0.0
    %1549 = vmatpush.msra.mxu0 0.0
    %1550 = vmatpush.msra.mxu0 0.0
    %1551 = vmatpush.msra.mxu0 0.0
    %1552 = vmatpush.msra.mxu0 0.0
    %1553 = vmatpush.msra.mxu0 0.0
    %1554 = vmatpush.msra.mxu0 0.0
    %1555 = vmatpush.msra.mxu0 0.0
    %1556 = vmatpush.msra.mxu0 0.0
    %1557 = vmatpush.msra.mxu0 0.0
    %1558 = vmatpush.msra.mxu0 %v1538
    %1559 = vmatpush.msra.mxu0 %v1536
    %1560 = vmatmul.f32.gmra.mxu0 %v1542
    %v1561 = vpop.f32.mrf.mxu0
    %v1562 = vadd.f32 0.0, %v1561
    %1563 = vdwg.mxu0
    %1565 = vrot.lane.b32.xlu0 %v1418, 8
    %v1566 = vpop.permute.xlu0 %1565
    %1569 = vrot.lane.b32.xlu0 %v1490, 16
    %v1570 = vpop.permute.xlu0 %1569
    %1573 = vrot.lane.b32.xlu0 %v1562, 24
    %v1574 = vpop.permute.xlu0 %1573
    %v1576 = vsel %vm142, %v1344, %v1566
    %v1577 = vsel %vm178, %v1576, %v1570
    %v1578 = vsel %vm548, %v1577, %v1574
    %s1579 = scalar_lea.vmem %s3, 352
    %v1580 = vld [vmem:[%s1579] sm:$0xff]
    %v1581 = vld [vmem:[%s1579 + $0x8] sm:$0xff]
    %v1582 = vld [vmem:[%s1579 + $0x10] sm:$0xff]
    %v1583 = vld [vmem:[%s1579 + $0x18] sm:$0xff]
    %v1584 = vperm.slane %v40, 2
    %v1586 = vsel %vm54, %v1578, 0
    %1588 = vmatpush.msra.mxu0 0.0
    %1589 = vmatpush.msra.mxu0 0.0
    %1590 = vmatpush.msra.mxu0 0.0
    %1591 = vmatpush.msra.mxu0 0.0
    %1592 = vmatpush.msra.mxu0 0.0
    %1593 = vmatpush.msra.mxu0 0.0
    %1594 = vmatpush.msra.mxu0 0.0
    %1595 = vmatpush.msra.mxu0 0.0
    %1596 = vmatpush.msra.mxu0 0.0
    %1597 = vmatpush.msra.mxu0 0.0
    %1598 = vmatpush.msra.mxu0 0.0
    %1599 = vmatpush.msra.mxu0 0.0
    %1600 = vmatpush.msra.mxu0 %v1583
    %1601 = vmatpush.msra.mxu0 %v1582
    %1602 = vmatpush.msra.mxu0 %v1581
    %1603 = vmatpush.msra.mxu0 %v1580
    %1604 = vmatmul.f32.gmra.mxu0 %v1586
    %v1605 = vpop.f32.mrf.mxu0
    %v1606 = vadd.f32 %v1584, %v1605
    %1607 = vdwg.mxu0
    %v1608 = vadd.f32 %v1188, %v1606
    %v1609 = vsel %vm1162, %v1608, 0.0
    %1610 = vadd.xlane.f32.xlu0 %v1609
    %v1611 = vpop.xlane.xlu0 %1610
    %v1612 = vmul.f32 %v1611, %v600
    %v1613 = vsub.f32 %v1608, %v1612
    %v1614 = vmul.f32 %v1613, %v1613
    %v1615 = vsel %vm1162, %v1614, 0.0
    %1616 = vadd.xlane.f32.xlu0 %v1615
    %v1617 = vpop.xlane.xlu0 %1616
    %v1618 = vmul.f32 %v1617, %v600
    %v1619 = vadd.f32 %v1618, 1e-05
    %v1620 = vrsqrt.pop %v1619
    %v1621 = vmul.f32 %v1620, %v1619
    %v1622 = vmul.f32 %v1621, %v1620
    %v1623 = vmul.f32 0.5, %v1622
    %v1624 = vsub.f32 1.5, %v1623
    %v1625 = vmul.f32 %v1620, %v1624
    %vm1626 = vweird.f32 %v1619
    %vm1627 = vweird.f32 %v1620
    %vm1628 = vmor %vm1626, %vm1627
    %v1629 = vsel %vm1628, %v1620, %v1625
    %v1630 = vmul.f32 %v1613, %v1629
    %v1631 = vperm.slane %v40, 3
    %v1632 = vmul.f32 %v1630, %v1631
    %v1633 = vperm.slane %v40, 4
    %v1634 = vadd.f32 %v1632, %v1633
    %s1635 = scalar_lea.vmem %s4, 32
    %v1636 = vld [vmem:[%s1635] sm:$0xff]
    %v1637 = vld [vmem:[%s1635 + $0x8] sm:$0xff]
    %v1638 = vld [vmem:[%s1635 + $0x10] sm:$0xff]
    %v1639 = vld [vmem:[%s1635 + $0x18] sm:$0xff]
    %v1640 = vperm.slane %v42, 1
    %v1642 = vsel %vm54, %v1634, 0
    %1644 = vmatpush.msra.mxu0 0.0
    %1645 = vmatpush.msra.mxu0 0.0
    %1646 = vmatpush.msra.mxu0 0.0
    %1647 = vmatpush.msra.mxu0 0.0
    %1648 = vmatpush.msra.mxu0 0.0
    %1649 = vmatpush.msra.mxu0 0.0
    %1650 = vmatpush.msra.mxu0 0.0
    %1651 = vmatpush.msra.mxu0 0.0
    %1652 = vmatpush.msra.mxu0 0.0
    %1653 = vmatpush.msra.mxu0 0.0
    %1654 = vmatpush.msra.mxu0 0.0
    %1655 = vmatpush.msra.mxu0 0.0
    %1656 = vmatpush.msra.mxu0 %v1639
    %1657 = vmatpush.msra.mxu0 %v1638
    %1658 = vmatpush.msra.mxu0 %v1637
    %1659 = vmatpush.msra.mxu0 %v1636
    %1660 = vmatmul.f32.gmra.mxu0 %v1642
    %v1661 = vpop.f32.mrf.mxu0
    %v1662 = vadd.f32 %v1640, %v1661
    %1663 = vdwg.mxu0
    %v1664 = vmax.f32 %v1662, 0.0
    %s1665 = scalar_lea.vmem %s5, 64
    %v1666 = vld [vmem:[%s1665] sm:$0xff]
    %v1667 = vld [vmem:[%s1665 + $0x8] sm:$0xff]
    %v1668 = vld [vmem:[%s1665 + $0x10] sm:$0xff]
    %v1669 = vld [vmem:[%s1665 + $0x18] sm:$0xff]
    %v1670 = vld [vmem:[%s1665 + $0x20] sm:$0xff]
    %v1671 = vld [vmem:[%s1665 + $0x28] sm:$0xff]
    %v1672 = vld [vmem:[%s1665 + $0x30] sm:$0xff]
    %v1673 = vld [vmem:[%s1665 + $0x38] sm:$0xff]
    %v1674 = vperm.slane %v40, 5
    %v1676 = vsel %vm690, %v1664, 0
    %1678 = vmatpush.msra.mxu0 0.0
    %1679 = vmatpush.msra.mxu0 0.0
    %1680 = vmatpush.msra.mxu0 0.0
    %1681 = vmatpush.msra.mxu0 0.0
    %1682 = vmatpush.msra.mxu0 0.0
    %1683 = vmatpush.msra.mxu0 0.0
    %1684 = vmatpush.msra.mxu0 0.0
    %1685 = vmatpush.msra.mxu0 0.0
    %1686 = vmatpush.msra.mxu0 %v1673
    %1687 = vmatpush.msra.mxu0 %v1672
    %1688 = vmatpush.msra.mxu0 %v1671
    %1689 = vmatpush.msra.mxu0 %v1670
    %1690 = vmatpush.msra.mxu0 %v1669
    %1691 = vmatpush.msra.mxu0 %v1668
    %1692 = vmatpush.msra.mxu0 %v1667
    %1693 = vmatpush.msra.mxu0 %v1666
    %1694 = vmatmul.f32.gmra.mxu0 %v1676
    %v1695 = vpop.f32.mrf.mxu0
    %v1696 = vadd.f32 %v1674, %v1695
    %1697 = vdwg.mxu0
    %v1698 = vadd.f32 %v1634, %v1696
    %v1699 = vsel %vm1162, %v1698, 0.0
    %1700 = vadd.xlane.f32.xlu0 %v1699
    %v1701 = vpop.xlane.xlu0 %1700
    %v1702 = vmul.f32 %v1701, %v600
    %v1703 = vsub.f32 %v1698, %v1702
    %v1704 = vmul.f32 %v1703, %v1703
    %v1705 = vsel %vm1162, %v1704, 0.0
    %1706 = vadd.xlane.f32.xlu0 %v1705
    %v1707 = vpop.xlane.xlu0 %1706
    %v1708 = vmul.f32 %v1707, %v600
    %v1709 = vadd.f32 %v1708, 1e-05
    %v1710 = vrsqrt.pop %v1709
    %v1711 = vmul.f32 %v1710, %v1709
    %v1712 = vmul.f32 %v1711, %v1710
    %v1713 = vmul.f32 0.5, %v1712
    %v1714 = vsub.f32 1.5, %v1713
    %v1715 = vmul.f32 %v1710, %v1714
    %vm1716 = vweird.f32 %v1709
    %vm1717 = vweird.f32 %v1710
    %vm1718 = vmor %vm1716, %vm1717
    %v1719 = vsel %vm1718, %v1710, %v1715
    %v1720 = vmul.f32 %v1703, %v1719
    %v1721 = vperm.slane %v40, 6
    %v1722 = vmul.f32 %v1720, %v1721
    %v1723 = vperm.slane %v40, 7
    %v1724 = vadd.f32 %v1722, %v1723
    %v1725 = vsel %vm1162, %v1724, 0.0
    %1726 = vadd.xlane.f32.xlu0 %v1725
    %v1727 = vpop.xlane.xlu0 %1726
    %v1728 = vmul.f32 %v1727, %v600
    %v1729 = vsub.f32 %v1724, %v1728
    %v1730 = vmul.f32 %v1729, %v1729
    %v1731 = vsel %vm1162, %v1730, 0.0
    %1732 = vadd.xlane.f32.xlu0 %v1731
    %v1733 = vpop.xlane.xlu0 %1732
    %v1734 = vmul.f32 %v1733, %v600
    %v1735 = vadd.f32 %v1734, 1e-05
    %v1736 = vrsqrt.pop %v1735
    %v1737 = vmul.f32 %v1736, %v1735
    %v1738 = vmul.f32 %v1737, %v1736
    %v1739 = vmul.f32 0.5, %v1738
    %v1740 = vsub.f32 1.5, %v1739
    %v1741 = vmul.f32 %v1736, %v1740
    %vm1742 = vweird.f32 %v1735
    %vm1743 = vweird.f32 %v1736
    %vm1744 = vmor %vm1742, %vm1743
    %v1745 = vsel %vm1744, %v1736, %v1741
    %v1746 = vmul.f32 %v1729, %v1745
    %v1747 = vperm.slane %v41, 0
    %v1748 = vmul.f32 %v1746, %v1747
    %v1749 = vperm.slane %v41, 1
    %v1750 = vadd.f32 %v1748, %v1749
    %v1751 = vld [vmem:[#allocation2] sm:$0x1]
    %1753 = vset.pattern.permute.xlu0 0
    %1754 = vperm.xlu0 %1753, %v1751
    %v1755 = vpop.permute.xlu0 %1754
    %v1757 = vperm.slane %v1755, 0
    %v1759 = vrot.slane %v41, 2
    %v1760 = vsel %vm54, %v1759, 0
    %v1763 = vsel %vm54, %v1750, 0
    %1765 = vmatpush.xpose.msra.mxu0 0.0
    %1766 = vmatpush.xpose.msra.mxu0 0.0
    %1767 = vmatpush.xpose.msra.mxu0 0.0
    %1768 = vmatpush.xpose.msra.mxu0 0.0
    %1769 = vmatpush.xpose.msra.mxu0 0.0
    %1770 = vmatpush.xpose.msra.mxu0 0.0
    %1771 = vmatpush.xpose.msra.mxu0 0.0
    %1772 = vmatpush.xpose.msra.mxu0 0.0
    %1773 = vmatpush.xpose.msra.mxu0 0.0
    %1774 = vmatpush.xpose.msra.mxu0 0.0
    %1775 = vmatpush.xpose.msra.mxu0 0.0
    %1776 = vmatpush.xpose.msra.mxu0 0.0
    %1777 = vmatpush.xpose.msra.mxu0 0.0
    %1778 = vmatpush.xpose.msra.mxu0 0.0
    %1779 = vmatpush.xpose.msra.mxu0 0.0
    %1780 = vmatpush.xpose.msra.mxu0 %v1763
    %1781 = vmatmul.f32.gmra.mxu0 %v1760
    %v1782 = vpop.f32.mrf.mxu0
    %v1783 = vadd.f32 %v1757, %v1782
    %1784 = vdwg.mxu0
    %s1785 = scalar_lea.vmem %s0, 16
    %v1786 = vld [vmem:[%s1785] sm:$0xff]
    %v1787 = vld [vmem:[%s1785 + $0x8] sm:$0xff]
    %v1788 = vmul.f32 %v1786, 0.1
    %v1789 = vmul.f32 %v1787, 0.1
    %v1790 = vadd.f32 %v35, %v1788
    %v1791 = vadd.f32 %v36, %v1789
    %v1793 = vsel %vm54, %v1790, 0
    %v1796 = vsel %vm54, %v1791, 0
    %1798 = vmatpush.msra.mxu0 0.0
    %1799 = vmatpush.msra.mxu0 0.0
    %1800 = vmatpush.msra.mxu0 0.0
    %1801 = vmatpush.msra.mxu0 0.0
    %1802 = vmatpush.msra.mxu0 0.0
    %1803 = vmatpush.msra.mxu0 0.0
    %1804 = vmatpush.msra.mxu0 0.0
    %1805 = vmatpush.msra.mxu0 0.0
    %1806 = vmatpush.msra.mxu0 0.0
    %1807 = vmatpush.msra.mxu0 0.0
    %1808 = vmatpush.msra.mxu0 0.0
    %1809 = vmatpush.msra.mxu0 0.0
    %1810 = vmatpush.msra.mxu0 %v52
    %1811 = vmatpush.msra.mxu0 %v51
    %1812 = vmatpush.msra.mxu0 %v50
    %1813 = vmatpush.msra.mxu0 %v49
    %1814 = vmatmul.f32.gmra.mxu0 %v1793
    %v1815 = vpop.f32.mrf.mxu0
    %v1816 = vadd.f32 %v53, %v1815
    %1817 = vmatmul.f32.gmra.mxu0 %v1796
    %v1818 = vpop.f32.mrf.mxu0
    %v1819 = vadd.f32 %v53, %v1818
    %1820 = vdwg.mxu0
    %1821 = vmatpush.msra.mxu0 0.0
    %1822 = vmatpush.msra.mxu0 0.0
    %1823 = vmatpush.msra.mxu0 0.0
    %1824 = vmatpush.msra.mxu0 0.0
    %1825 = vmatpush.msra.mxu0 0.0
    %1826 = vmatpush.msra.mxu0 0.0
    %1827 = vmatpush.msra.mxu0 0.0
    %1828 = vmatpush.msra.mxu0 0.0
    %1829 = vmatpush.msra.mxu0 0.0
    %1830 = vmatpush.msra.mxu0 0.0
    %1831 = vmatpush.msra.mxu0 0.0
    %1832 = vmatpush.msra.mxu0 0.0
    %1833 = vmatpush.msra.mxu0 %v88
    %1834 = vmatpush.msra.mxu0 %v87
    %1835 = vmatpush.msra.mxu0 %v86
    %1836 = vmatpush.msra.mxu0 %v85
    %1837 = vmatmul.f32.gmra.mxu0 %v1793
    %v1838 = vpop.f32.mrf.mxu0
    %v1839 = vadd.f32 %v89, %v1838
    %1840 = vmatmul.f32.gmra.mxu0 %v1796
    %v1841 = vpop.f32.mrf.mxu0
    %v1842 = vadd.f32 %v89, %v1841
    %1843 = vdwg.mxu0
    %1844 = vmatpush.msra.mxu0 0.0
    %1845 = vmatpush.msra.mxu0 0.0
    %1846 = vmatpush.msra.mxu0 0.0
    %1847 = vmatpush.msra.mxu0 0.0
    %1848 = vmatpush.msra.mxu0 0.0
    %1849 = vmatpush.msra.mxu0 0.0
    %1850 = vmatpush.msra.mxu0 0.0
    %1851 = vmatpush.msra.mxu0 0.0
    %1852 = vmatpush.msra.mxu0 0.0
    %1853 = vmatpush.msra.mxu0 0.0
    %1854 = vmatpush.msra.mxu0 0.0
    %1855 = vmatpush.msra.mxu0 0.0
    %1856 = vmatpush.msra.mxu0 %v117
    %1857 = vmatpush.msra.mxu0 %v116
    %1858 = vmatpush.msra.mxu0 %v115
    %1859 = vmatpush.msra.mxu0 %v114
    %1860 = vmatmul.f32.gmra.mxu0 %v1793
    %v1861 = vpop.f32.mrf.mxu0
    %v1862 = vadd.f32 %v118, %v1861
    %1863 = vmatmul.f32.gmra.mxu0 %v1796
    %v1864 = vpop.f32.mrf.mxu0
    %v1865 = vadd.f32 %v118, %v1864
    %1866 = vdwg.mxu0
    %v1868 = vsel %vm142, %v1816, 0
    %v1871 = vsel %vm142, %v1819, 0
    %v1874 = vsel %vm142, %v1839, 0
    %v1877 = vsel %vm142, %v1842, 0
    %1879 = vmatpush.xpose.msra.mxu0 0.0
    %1880 = vmatpush.xpose.msra.mxu0 0.0
    %1881 = vmatpush.xpose.msra.mxu0 0.0
    %1882 = vmatpush.xpose.msra.mxu0 0.0
    %1883 = vmatpush.xpose.msra.mxu0 0.0
    %1884 = vmatpush.xpose.msra.mxu0 0.0
    %1885 = vmatpush.xpose.msra.mxu0 0.0
    %1886 = vmatpush.xpose.msra.mxu0 0.0
    %1887 = vmatpush.xpose.msra.mxu0 0.0
    %1888 = vmatpush.xpose.msra.mxu0 0.0
    %1889 = vmatpush.xpose.msra.mxu0 0.0
    %1890 = vmatpush.xpose.msra.mxu0 0.0
    %1891 = vmatpush.xpose.msra.mxu0 0.0
    %1892 = vmatpush.xpose.msra.mxu0 0.0
    %1893 = vmatpush.xpose.msra.mxu0 %v1877
    %1894 = vmatpush.xpose.msra.mxu0 %v1874
    %1895 = vmatmul.f32.gmra.mxu0 %v1868
    %v1896 = vpop.f32.mrf.mxu0
    %v1897 = vadd.f32 0.0, %v1896
    %1898 = vmatmul.f32.gmra.mxu0 %v1871
    %v1899 = vpop.f32.mrf.mxu0
    %v1900 = vadd.f32 0.0, %v1899
    %1901 = vdwg.mxu0
    %v1902 = vsel %vm178, %v1897, -inf
    %1903 = vmax.xlane.f32.xlu0 %v1902
    %v1904 = vpop.xlane.xlu0 %1903
    %v1905 = vsel %vm178, %v1900, -inf
    %1906 = vmax.xlane.f32.xlu0 %v1905
    %v1907 = vpop.xlane.xlu0 %1906
    %v1908 = vsub.f32 %v1897, %v1904
    %v1909 = vsub.f32 %v1900, %v1907
    %v1910 = vmul.f32 %v1908, 1.442695
    %v1911 = vpow.pop %v1910
    %v1912 = vmul.f32 %v1909, 1.442695
    %v1913 = vpow.pop %v1912
    %v1914 = vsel %vm178, %v1911, 0.0
    %1915 = vadd.xlane.f32.xlu0 %v1914
    %v1916 = vpop.xlane.xlu0 %1915
    %v1917 = vsel %vm178, %v1913, 0.0
    %1918 = vadd.xlane.f32.xlu0 %v1917
    %v1919 = vpop.xlane.xlu0 %1918
    %v1920 = vrcp.pop %v1916
    %v1921 = vrcp.pop %v1919
    %v1922 = vmul.f32 %v1911, %v1920
    %v1923 = vmul.f32 %v1913, %v1921
    %v1925 = vsel %vm178, %v1922, 0
    %v1928 = vsel %vm178, %v1923, 0
    %1930 = vmatpush.msra.mxu0 0.0
    %1931 = vmatpush.msra.mxu0 0.0
    %1932 = vmatpush.msra.mxu0 0.0
    %1933 = vmatpush.msra.mxu0 0.0
    %1934 = vmatpush.msra.mxu0 0.0
    %1935 = vmatpush.msra.mxu0 0.0
    %1936 = vmatpush.msra.mxu0 0.0
    %1937 = vmatpush.msra.mxu0 0.0
    %1938 = vmatpush.msra.mxu0 0.0
    %1939 = vmatpush.msra.mxu0 0.0
    %1940 = vmatpush.msra.mxu0 0.0
    %1941 = vmatpush.msra.mxu0 0.0
    %1942 = vmatpush.msra.mxu0 0.0
    %1943 = vmatpush.msra.mxu0 0.0
    %1944 = vmatpush.msra.mxu0 %v1865
    %1945 = vmatpush.msra.mxu0 %v1862
    %1946 = vmatmul.f32.gmra.mxu0 %v1925
    %v1947 = vpop.f32.mrf.mxu0
    %v1948 = vadd.f32 0.0, %v1947
    %1949 = vmatmul.f32.gmra.mxu0 %v1928
    %v1950 = vpop.f32.mrf.mxu0
    %v1951 = vadd.f32 0.0, %v1950
    %1952 = vdwg.mxu0
    %1953 = vrot.lane.b32.xlu0 %v1816, 120
    %v1954 = vpop.permute.xlu0 %1953
    %1955 = vrot.lane.b32.xlu0 %v1819, 120
    %v1956 = vpop.permute.xlu0 %1955
    %1957 = vrot.lane.b32.xlu0 %v1839, 120
    %v1958 = vpop.permute.xlu0 %1957
    %1959 = vrot.lane.b32.xlu0 %v1842, 120
    %v1960 = vpop.permute.xlu0 %1959
    %v1961 = vsel %vm142, %v1954, 0
    %v1963 = vsel %vm142, %v1956, 0
    %v1965 = vsel %vm142, %v1958, 0
    %v1967 = vsel %vm142, %v1960, 0
    %1969 = vmatpush.xpose.msra.mxu0 0.0
    %1970 = vmatpush.xpose.msra.mxu0 0.0
    %1971 = vmatpush.xpose.msra.mxu0 0.0
    %1972 = vmatpush.xpose.msra.mxu0 0.0
    %1973 = vmatpush.xpose.msra.mxu0 0.0
    %1974 = vmatpush.xpose.msra.mxu0 0.0
    %1975 = vmatpush.xpose.msra.mxu0 0.0
    %1976 = vmatpush.xpose.msra.mxu0 0.0
    %1977 = vmatpush.xpose.msra.mxu0 0.0
    %1978 = vmatpush.xpose.msra.mxu0 0.0
    %1979 = vmatpush.xpose.msra.mxu0 0.0
    %1980 = vmatpush.xpose.msra.mxu0 0.0
    %1981 = vmatpush.xpose.msra.mxu0 0.0
    %1982 = vmatpush.xpose.msra.mxu0 0.0
    %1983 = vmatpush.xpose.msra.mxu0 %v1967
    %1984 = vmatpush.xpose.msra.mxu0 %v1965
    %1985 = vmatmul.f32.gmra.mxu0 %v1961
    %v1986 = vpop.f32.mrf.mxu0
    %v1987 = vadd.f32 0.0, %v1986
    %1988 = vmatmul.f32.gmra.mxu0 %v1963
    %v1989 = vpop.f32.mrf.mxu0
    %v1990 = vadd.f32 0.0, %v1989
    %1991 = vdwg.mxu0
    %v1992 = vsel %vm178, %v1987, -inf
    %1993 = vmax.xlane.f32.xlu0 %v1992
    %v1994 = vpop.xlane.xlu0 %1993
    %v1995 = vsel %vm178, %v1990, -inf
    %1996 = vmax.xlane.f32.xlu0 %v1995
    %v1997 = vpop.xlane.xlu0 %1996
    %v1998 = vsub.f32 %v1987, %v1994
    %v1999 = vsub.f32 %v1990, %v1997
    %v2000 = vmul.f32 %v1998, 1.442695
    %v2001 = vpow.pop %v2000
    %v2002 = vmul.f32 %v1999, 1.442695
    %v2003 = vpow.pop %v2002
    %v2004 = vsel %vm178, %v2001, 0.0
    %2005 = vadd.xlane.f32.xlu0 %v2004
    %v2006 = vpop.xlane.xlu0 %2005
    %v2007 = vsel %vm178, %v2003, 0.0
    %2008 = vadd.xlane.f32.xlu0 %v2007
    %v2009 = vpop.xlane.xlu0 %2008
    %v2010 = vrcp.pop %v2006
    %v2011 = vrcp.pop %v2009
    %v2012 = vmul.f32 %v2001, %v2010
    %v2013 = vmul.f32 %v2003, %v2011
    %2016 = vrot.lane.b32.xlu0 %v1862, 120
    %v2017 = vpop.permute.xlu0 %2016
    %2018 = vrot.lane.b32.xlu0 %v1865, 120
    %v2019 = vpop.permute.xlu0 %2018
    %v2023 = vsel %vm178, %v2012, 0
    %v2026 = vsel %vm178, %v2013, 0
    %2028 = vmatpush.msra.mxu0 0.0
    %2029 = vmatpush.msra.mxu0 0.0
    %2030 = vmatpush.msra.mxu0 0.0
    %2031 = vmatpush.msra.mxu0 0.0
    %2032 = vmatpush.msra.mxu0 0.0
    %2033 = vmatpush.msra.mxu0 0.0
    %2034 = vmatpush.msra.mxu0 0.0
    %2035 = vmatpush.msra.mxu0 0.0
    %2036 = vmatpush.msra.mxu0 0.0
    %2037 = vmatpush.msra.mxu0 0.0
    %2038 = vmatpush.msra.mxu0 0.0
    %2039 = vmatpush.msra.mxu0 0.0
    %2040 = vmatpush.msra.mxu0 0.0
    %2041 = vmatpush.msra.mxu0 0.0
    %2042 = vmatpush.msra.mxu0 %v2019
    %2043 = vmatpush.msra.mxu0 %v2017
    %2044 = vmatmul.f32.gmra.mxu0 %v2023
    %v2045 = vpop.f32.mrf.mxu0
    %v2046 = vadd.f32 0.0, %v2045
    %2047 = vmatmul.f32.gmra.mxu0 %v2026
    %v2048 = vpop.f32.mrf.mxu0
    %v2049 = vadd.f32 0.0, %v2048
    %2050 = vdwg.mxu0
    %2051 = vrot.lane.b32.xlu0 %v1816, 112
    %v2052 = vpop.permute.xlu0 %2051
    %2053 = vrot.lane.b32.xlu0 %v1819, 112
    %v2054 = vpop.permute.xlu0 %2053
    %2055 = vrot.lane.b32.xlu0 %v1839, 112
    %v2056 = vpop.permute.xlu0 %2055
    %2057 = vrot.lane.b32.xlu0 %v1842, 112
    %v2058 = vpop.permute.xlu0 %2057
    %v2059 = vsel %vm142, %v2052, 0
    %v2061 = vsel %vm142, %v2054, 0
    %v2063 = vsel %vm142, %v2056, 0
    %v2065 = vsel %vm142, %v2058, 0
    %2067 = vmatpush.xpose.msra.mxu0 0.0
    %2068 = vmatpush.xpose.msra.mxu0 0.0
    %2069 = vmatpush.xpose.msra.mxu0 0.0
    %2070 = vmatpush.xpose.msra.mxu0 0.0
    %2071 = vmatpush.xpose.msra.mxu0 0.0
    %2072 = vmatpush.xpose.msra.mxu0 0.0
    %2073 = vmatpush.xpose.msra.mxu0 0.0
    %2074 = vmatpush.xpose.msra.mxu0 0.0
    %2075 = vmatpush.xpose.msra.mxu0 0.0
    %2076 = vmatpush.xpose.msra.mxu0 0.0
    %2077 = vmatpush.xpose.msra.mxu0 0.0
    %2078 = vmatpush.xpose.msra.mxu0 0.0
    %2079 = vmatpush.xpose.msra.mxu0 0.0
    %2080 = vmatpush.xpose.msra.mxu0 0.0
    %2081 = vmatpush.xpose.msra.mxu0 %v2065
    %2082 = vmatpush.xpose.msra.mxu0 %v2063
    %2083 = vmatmul.f32.gmra.mxu0 %v2059
    %v2084 = vpop.f32.mrf.mxu0
    %v2085 = vadd.f32 0.0, %v2084
    %2086 = vmatmul.f32.gmra.mxu0 %v2061
    %v2087 = vpop.f32.mrf.mxu0
    %v2088 = vadd.f32 0.0, %v2087
    %2089 = vdwg.mxu0
    %v2090 = vsel %vm178, %v2085, -inf
    %2091 = vmax.xlane.f32.xlu0 %v2090
    %v2092 = vpop.xlane.xlu0 %2091
    %v2093 = vsel %vm178, %v2088, -inf
    %2094 = vmax.xlane.f32.xlu0 %v2093
    %v2095 = vpop.xlane.xlu0 %2094
    %v2096 = vsub.f32 %v2085, %v2092
    %v2097 = vsub.f32 %v2088, %v2095
    %v2098 = vmul.f32 %v2096, 1.442695
    %v2099 = vpow.pop %v2098
    %v2100 = vmul.f32 %v2097, 1.442695
    %v2101 = vpow.pop %v2100
    %v2102 = vsel %vm178, %v2099, 0.0
    %2103 = vadd.xlane.f32.xlu0 %v2102
    %v2104 = vpop.xlane.xlu0 %2103
    %v2105 = vsel %vm178, %v2101, 0.0
    %2106 = vadd.xlane.f32.xlu0 %v2105
    %v2107 = vpop.xlane.xlu0 %2106
    %v2108 = vrcp.pop %v2104
    %v2109 = vrcp.pop %v2107
    %v2110 = vmul.f32 %v2099, %v2108
    %v2111 = vmul.f32 %v2101, %v2109
    %2112 = vrot.lane.b32.xlu0 %v1862, 112
    %v2113 = vpop.permute.xlu0 %2112
    %2114 = vrot.lane.b32.xlu0 %v1865, 112
    %v2115 = vpop.permute.xlu0 %2114
    %v2119 = vsel %vm178, %v2110, 0
    %v2122 = vsel %vm178, %v2111, 0
    %2124 = vmatpush.msra.mxu0 0.0
    %2125 = vmatpush.msra.mxu0 0.0
    %2126 = vmatpush.msra.mxu0 0.0
    %2127 = vmatpush.msra.mxu0 0.0
    %2128 = vmatpush.msra.mxu0 0.0
    %2129 = vmatpush.msra.mxu0 0.0
    %2130 = vmatpush.msra.mxu0 0.0
    %2131 = vmatpush.msra.mxu0 0.0
    %2132 = vmatpush.msra.mxu0 0.0
    %2133 = vmatpush.msra.mxu0 0.0
    %2134 = vmatpush.msra.mxu0 0.0
    %2135 = vmatpush.msra.mxu0 0.0
    %2136 = vmatpush.msra.mxu0 0.0
    %2137 = vmatpush.msra.mxu0 0.0
    %2138 = vmatpush.msra.mxu0 %v2115
    %2139 = vmatpush.msra.mxu0 %v2113
    %2140 = vmatmul.f32.gmra.mxu0 %v2119
    %v2141 = vpop.f32.mrf.mxu0
    %v2142 = vadd.f32 0.0, %v2141
    %2143 = vmatmul.f32.gmra.mxu0 %v2122
    %v2144 = vpop.f32.mrf.mxu0
    %v2145 = vadd.f32 0.0, %v2144
    %2146 = vdwg.mxu0
    %2147 = vrot.lane.b32.xlu0 %v1816, 104
    %v2148 = vpop.permute.xlu0 %2147
    %2149 = vrot.lane.b32.xlu0 %v1819, 104
    %v2150 = vpop.permute.xlu0 %2149
    %2151 = vrot.lane.b32.xlu0 %v1839, 104
    %v2152 = vpop.permute.xlu0 %2151
    %2153 = vrot.lane.b32.xlu0 %v1842, 104
    %v2154 = vpop.permute.xlu0 %2153
    %v2155 = vsel %vm142, %v2148, 0
    %v2157 = vsel %vm142, %v2150, 0
    %v2159 = vsel %vm142, %v2152, 0
    %v2161 = vsel %vm142, %v2154, 0
    %2163 = vmatpush.xpose.msra.mxu0 0.0
    %2164 = vmatpush.xpose.msra.mxu0 0.0
    %2165 = vmatpush.xpose.msra.mxu0 0.0
    %2166 = vmatpush.xpose.msra.mxu0 0.0
    %2167 = vmatpush.xpose.msra.mxu0 0.0
    %2168 = vmatpush.xpose.msra.mxu0 0.0
    %2169 = vmatpush.xpose.msra.mxu0 0.0
    %2170 = vmatpush.xpose.msra.mxu0 0.0
    %2171 = vmatpush.xpose.msra.mxu0 0.0
    %2172 = vmatpush.xpose.msra.mxu0 0.0
    %2173 = vmatpush.xpose.msra.mxu0 0.0
    %2174 = vmatpush.xpose.msra.mxu0 0.0
    %2175 = vmatpush.xpose.msra.mxu0 0.0
    %2176 = vmatpush.xpose.msra.mxu0 0.0
    %2177 = vmatpush.xpose.msra.mxu0 %v2161
    %2178 = vmatpush.xpose.msra.mxu0 %v2159
    %2179 = vmatmul.f32.gmra.mxu0 %v2155
    %v2180 = vpop.f32.mrf.mxu0
    %v2181 = vadd.f32 0.0, %v2180
    %2182 = vmatmul.f32.gmra.mxu0 %v2157
    %v2183 = vpop.f32.mrf.mxu0
    %v2184 = vadd.f32 0.0, %v2183
    %2185 = vdwg.mxu0
    %v2186 = vsel %vm178, %v2181, -inf
    %2187 = vmax.xlane.f32.xlu0 %v2186
    %v2188 = vpop.xlane.xlu0 %2187
    %v2189 = vsel %vm178, %v2184, -inf
    %2190 = vmax.xlane.f32.xlu0 %v2189
    %v2191 = vpop.xlane.xlu0 %2190
    %v2192 = vsub.f32 %v2181, %v2188
    %v2193 = vsub.f32 %v2184, %v2191
    %v2194 = vmul.f32 %v2192, 1.442695
    %v2195 = vpow.pop %v2194
    %v2196 = vmul.f32 %v2193, 1.442695
    %v2197 = vpow.pop %v2196
    %v2198 = vsel %vm178, %v2195, 0.0
    %2199 = vadd.xlane.f32.xlu0 %v2198
    %v2200 = vpop.xlane.xlu0 %2199
    %v2201 = vsel %vm178, %v2197, 0.0
    %2202 = vadd.xlane.f32.xlu0 %v2201
    %v2203 = vpop.xlane.xlu0 %2202
    %v2204 = vrcp.pop %v2200
    %v2205 = vrcp.pop %v2203
    %v2206 = vmul.f32 %v2195, %v2204
    %v2207 = vmul.f32 %v2197, %v2205
    %2208 = vrot.lane.b32.xlu0 %v1862, 104
    %v2209 = vpop.permute.xlu0 %2208
    %2210 = vrot.lane.b32.xlu0 %v1865, 104
    %v2211 = vpop.permute.xlu0 %2210
    %v2215 = vsel %vm178, %v2206, 0
    %v2218 = vsel %vm178, %v2207, 0
    %2220 = vmatpush.msra.mxu0 0.0
    %2221 = vmatpush.msra.mxu0 0.0
    %2222 = vmatpush.msra.mxu0 0.0
    %2223 = vmatpush.msra.mxu0 0.0
    %2224 = vmatpush.msra.mxu0 0.0
    %2225 = vmatpush.msra.mxu0 0.0
    %2226 = vmatpush.msra.mxu0 0.0
    %2227 = vmatpush.msra.mxu0 0.0
    %2228 = vmatpush.msra.mxu0 0.0
    %2229 = vmatpush.msra.mxu0 0.0
    %2230 = vmatpush.msra.mxu0 0.0
    %2231 = vmatpush.msra.mxu0 0.0
    %2232 = vmatpush.msra.mxu0 0.0
    %2233 = vmatpush.msra.mxu0 0.0
    %2234 = vmatpush.msra.mxu0 %v2211
    %2235 = vmatpush.msra.mxu0 %v2209
    %2236 = vmatmul.f32.gmra.mxu0 %v2215
    %v2237 = vpop.f32.mrf.mxu0
    %v2238 = vadd.f32 0.0, %v2237
    %2239 = vmatmul.f32.gmra.mxu0 %v2218
    %v2240 = vpop.f32.mrf.mxu0
    %v2241 = vadd.f32 0.0, %v2240
    %2242 = vdwg.mxu0
    %2245 = vrot.lane.b32.xlu0 %v2046, 8
    %v2246 = vpop.permute.xlu0 %2245
    %2247 = vrot.lane.b32.xlu0 %v2049, 8
    %v2248 = vpop.permute.xlu0 %2247
    %2253 = vrot.lane.b32.xlu0 %v2142, 16
    %v2254 = vpop.permute.xlu0 %2253
    %2255 = vrot.lane.b32.xlu0 %v2145, 16
    %v2256 = vpop.permute.xlu0 %2255
    %2261 = vrot.lane.b32.xlu0 %v2238, 24
    %v2262 = vpop.permute.xlu0 %2261
    %2263 = vrot.lane.b32.xlu0 %v2241, 24
    %v2264 = vpop.permute.xlu0 %2263
    %v2267 = vsel %vm142, %v1948, %v2246
    %v2268 = vsel %vm142, %v1951, %v2248
    %v2269 = vsel %vm178, %v2267, %v2254
    %v2270 = vsel %vm178, %v2268, %v2256
    %v2271 = vsel %vm548, %v2269, %v2262
    %v2272 = vsel %vm548, %v2270, %v2264
    %v2274 = vsel %vm54, %v2271, 0
    %v2277 = vsel %vm54, %v2272, 0
    %2279 = vmatpush.msra.mxu0 0.0
    %2280 = vmatpush.msra.mxu0 0.0
    %2281 = vmatpush.msra.mxu0 0.0
    %2282 = vmatpush.msra.mxu0 0.0
    %2283 = vmatpush.msra.mxu0 0.0
    %2284 = vmatpush.msra.mxu0 0.0
    %2285 = vmatpush.msra.mxu0 0.0
    %2286 = vmatpush.msra.mxu0 0.0
    %2287 = vmatpush.msra.mxu0 0.0
    %2288 = vmatpush.msra.mxu0 0.0
    %2289 = vmatpush.msra.mxu0 0.0
    %2290 = vmatpush.msra.mxu0 0.0
    %2291 = vmatpush.msra.mxu0 %v555
    %2292 = vmatpush.msra.mxu0 %v554
    %2293 = vmatpush.msra.mxu0 %v553
    %2294 = vmatpush.msra.mxu0 %v552
    %2295 = vmatmul.f32.gmra.mxu0 %v2274
    %v2296 = vpop.f32.mrf.mxu0
    %v2297 = vadd.f32 %v556, %v2296
    %2298 = vmatmul.f32.gmra.mxu0 %v2277
    %v2299 = vpop.f32.mrf.mxu0
    %v2300 = vadd.f32 %v556, %v2299
    %2301 = vdwg.mxu0
    %v2302 = vadd.f32 %v1790, %v2297
    %v2303 = vadd.f32 %v1791, %v2300
    %v2304 = vsel %vm54, %v2302, 0.0
    %2305 = vadd.xlane.f32.xlu0 %v2304
    %v2306 = vpop.xlane.xlu0 %2305
    %v2307 = vsel %vm54, %v2303, 0.0
    %2308 = vadd.xlane.f32.xlu0 %v2307
    %v2309 = vpop.xlane.xlu0 %2308
    %v2310 = vmul.f32 %v2306, %v600
    %v2311 = vmul.f32 %v2309, %v600
    %v2312 = vsub.f32 %v2302, %v2310
    %v2313 = vsub.f32 %v2303, %v2311
    %v2314 = vmul.f32 %v2312, %v2312
    %v2315 = vmul.f32 %v2313, %v2313
    %v2316 = vsel %vm54, %v2314, 0.0
    %2317 = vadd.xlane.f32.xlu0 %v2316
    %v2318 = vpop.xlane.xlu0 %2317
    %v2319 = vsel %vm54, %v2315, 0.0
    %2320 = vadd.xlane.f32.xlu0 %v2319
    %v2321 = vpop.xlane.xlu0 %2320
    %v2322 = vmul.f32 %v2318, %v600
    %v2323 = vmul.f32 %v2321, %v600
    %v2324 = vadd.f32 %v2322, 1e-05
    %v2325 = vadd.f32 %v2323, 1e-05
    %v2326 = vrsqrt.pop %v2324
    %v2327 = vmul.f32 %v2326, %v2324
    %v2328 = vmul.f32 %v2327, %v2326
    %v2329 = vmul.f32 0.5, %v2328
    %v2330 = vsub.f32 1.5, %v2329
    %v2331 = vmul.f32 %v2326, %v2330
    %vm2332 = vweird.f32 %v2324
    %vm2333 = vweird.f32 %v2326
    %vm2334 = vmor %vm2332, %vm2333
    %v2335 = vsel %vm2334, %v2326, %v2331
    %v2336 = vrsqrt.pop %v2325
    %v2337 = vmul.f32 %v2336, %v2325
    %v2338 = vmul.f32 %v2337, %v2336
    %v2339 = vmul.f32 0.5, %v2338
    %v2340 = vsub.f32 1.5, %v2339
    %v2341 = vmul.f32 %v2336, %v2340
    %vm2342 = vweird.f32 %v2325
    %vm2343 = vweird.f32 %v2336
    %vm2344 = vmor %vm2342, %vm2343
    %v2345 = vsel %vm2344, %v2336, %v2341
    %v2346 = vmul.f32 %v2312, %v2335
    %v2347 = vmul.f32 %v2313, %v2345
    %v2348 = vmul.f32 %v2346, %v639
    %v2349 = vmul.f32 %v2347, %v639
    %v2350 = vadd.f32 %v2348, %v642
    %v2351 = vadd.f32 %v2349, %v642
    %v2353 = vsel %vm54, %v2350, 0
    %v2356 = vsel %vm54, %v2351, 0
    %2358 = vmatpush.msra.mxu0 0.0
    %2359 = vmatpush.msra.mxu0 0.0
    %2360 = vmatpush.msra.mxu0 0.0
    %2361 = vmatpush.msra.mxu0 0.0
    %2362 = vmatpush.msra.mxu0 0.0
    %2363 = vmatpush.msra.mxu0 0.0
    %2364 = vmatpush.msra.mxu0 0.0
    %2365 = vmatpush.msra.mxu0 0.0
    %2366 = vmatpush.msra.mxu0 0.0
    %2367 = vmatpush.msra.mxu0 0.0
    %2368 = vmatpush.msra.mxu0 0.0
    %2369 = vmatpush.msra.mxu0 0.0
    %2370 = vmatpush.msra.mxu0 %v648
    %2371 = vmatpush.msra.mxu0 %v647
    %2372 = vmatpush.msra.mxu0 %v646
    %2373 = vmatpush.msra.mxu0 %v645
    %2374 = vmatmul.f32.gmra.mxu0 %v2353
    %v2375 = vpop.f32.mrf.mxu0
    %v2376 = vadd.f32 %v649, %v2375
    %2377 = vmatmul.f32.gmra.mxu0 %v2356
    %v2378 = vpop.f32.mrf.mxu0
    %v2379 = vadd.f32 %v649, %v2378
    %2380 = vdwg.mxu0
    %v2381 = vmax.f32 %v2376, 0.0
    %v2382 = vmax.f32 %v2379, 0.0
    %v2384 = vsel %vm690, %v2381, 0
    %v2387 = vsel %vm690, %v2382, 0
    %2389 = vmatpush.msra.mxu0 0.0
    %2390 = vmatpush.msra.mxu0 0.0
    %2391 = vmatpush.msra.mxu0 0.0
    %2392 = vmatpush.msra.mxu0 0.0
    %2393 = vmatpush.msra.mxu0 0.0
    %2394 = vmatpush.msra.mxu0 0.0
    %2395 = vmatpush.msra.mxu0 0.0
    %2396 = vmatpush.msra.mxu0 0.0
    %2397 = vmatpush.msra.mxu0 %v688
    %2398 = vmatpush.msra.mxu0 %v687
    %2399 = vmatpush.msra.mxu0 %v686
    %2400 = vmatpush.msra.mxu0 %v685
    %2401 = vmatpush.msra.mxu0 %v684
    %2402 = vmatpush.msra.mxu0 %v683
    %2403 = vmatpush.msra.mxu0 %v682
    %2404 = vmatpush.msra.mxu0 %v681
    %2405 = vmatmul.f32.gmra.mxu0 %v2384
    %v2406 = vpop.f32.mrf.mxu0
    %v2407 = vadd.f32 %v689, %v2406
    %2408 = vmatmul.f32.gmra.mxu0 %v2387
    %v2409 = vpop.f32.mrf.mxu0
    %v2410 = vadd.f32 %v689, %v2409
    %2411 = vdwg.mxu0
    %v2412 = vadd.f32 %v2350, %v2407
    %v2413 = vadd.f32 %v2351, %v2410
    %v2414 = vsel %vm54, %v2412, 0.0
    %2415 = vadd.xlane.f32.xlu0 %v2414
    %v2416 = vpop.xlane.xlu0 %2415
    %v2417 = vsel %vm54, %v2413, 0.0
    %2418 = vadd.xlane.f32.xlu0 %v2417
    %v2419 = vpop.xlane.xlu0 %2418
    %v2420 = vmul.f32 %v2416, %v600
    %v2421 = vmul.f32 %v2419, %v600
    %v2422 = vsub.f32 %v2412, %v2420
    %v2423 = vsub.f32 %v2413, %v2421
    %v2424 = vmul.f32 %v2422, %v2422
    %v2425 = vmul.f32 %v2423, %v2423
    %v2426 = vsel %vm54, %v2424, 0.0
    %2427 = vadd.xlane.f32.xlu0 %v2426
    %v2428 = vpop.xlane.xlu0 %2427
    %v2429 = vsel %vm54, %v2425, 0.0
    %2430 = vadd.xlane.f32.xlu0 %v2429
    %v2431 = vpop.xlane.xlu0 %2430
    %v2432 = vmul.f32 %v2428, %v600
    %v2433 = vmul.f32 %v2431, %v600
    %v2434 = vadd.f32 %v2432, 1e-05
    %v2435 = vadd.f32 %v2433, 1e-05
    %v2436 = vrsqrt.pop %v2434
    %v2437 = vmul.f32 %v2436, %v2434
    %v2438 = vmul.f32 %v2437, %v2436
    %v2439 = vmul.f32 0.5, %v2438
    %v2440 = vsub.f32 1.5, %v2439
    %v2441 = vmul.f32 %v2436, %v2440
    %vm2442 = vweird.f32 %v2434
    %vm2443 = vweird.f32 %v2436
    %vm2444 = vmor %vm2442, %vm2443
    %v2445 = vsel %vm2444, %v2436, %v2441
    %v2446 = vrsqrt.pop %v2435
    %v2447 = vmul.f32 %v2446, %v2435
    %v2448 = vmul.f32 %v2447, %v2446
    %v2449 = vmul.f32 0.5, %v2448
    %v2450 = vsub.f32 1.5, %v2449
    %v2451 = vmul.f32 %v2446, %v2450
    %vm2452 = vweird.f32 %v2435
    %vm2453 = vweird.f32 %v2446
    %vm2454 = vmor %vm2452, %vm2453
    %v2455 = vsel %vm2454, %v2446, %v2451
    %v2456 = vmul.f32 %v2422, %v2445
    %v2457 = vmul.f32 %v2423, %v2455
    %v2458 = vmul.f32 %v2456, %v766
    %v2459 = vmul.f32 %v2457, %v766
    %v2460 = vadd.f32 %v2458, %v769
    %v2461 = vadd.f32 %v2459, %v769
    %v2463 = vsel %vm54, %v2460, 0
    %v2466 = vsel %vm54, %v2461, 0
    %2468 = vmatpush.msra.mxu0 0.0
    %2469 = vmatpush.msra.mxu0 0.0
    %2470 = vmatpush.msra.mxu0 0.0
    %2471 = vmatpush.msra.mxu0 0.0
    %2472 = vmatpush.msra.mxu0 0.0
    %2473 = vmatpush.msra.mxu0 0.0
    %2474 = vmatpush.msra.mxu0 0.0
    %2475 = vmatpush.msra.mxu0 0.0
    %2476 = vmatpush.msra.mxu0 0.0
    %2477 = vmatpush.msra.mxu0 0.0
    %2478 = vmatpush.msra.mxu0 0.0
    %2479 = vmatpush.msra.mxu0 0.0
    %2480 = vmatpush.msra.mxu0 %v1222
    %2481 = vmatpush.msra.mxu0 %v1221
    %2482 = vmatpush.msra.mxu0 %v1220
    %2483 = vmatpush.msra.mxu0 %v1219
    %2484 = vmatmul.f32.gmra.mxu0 %v2463
    %v2485 = vpop.f32.mrf.mxu0
    %v2486 = vadd.f32 %v1223, %v2485
    %2487 = vmatmul.f32.gmra.mxu0 %v2466
    %v2488 = vpop.f32.mrf.mxu0
    %v2489 = vadd.f32 %v1223, %v2488
    %2490 = vdwg.mxu0
    %2491 = vmatpush.msra.mxu0 0.0
    %2492 = vmatpush.msra.mxu0 0.0
    %2493 = vmatpush.msra.mxu0 0.0
    %2494 = vmatpush.msra.mxu0 0.0
    %2495 = vmatpush.msra.mxu0 0.0
    %2496 = vmatpush.msra.mxu0 0.0
    %2497 = vmatpush.msra.mxu0 0.0
    %2498 = vmatpush.msra.mxu0 0.0
    %2499 = vmatpush.msra.mxu0 0.0
    %2500 = vmatpush.msra.mxu0 0.0
    %2501 = vmatpush.msra.mxu0 0.0
    %2502 = vmatpush.msra.mxu0 0.0
    %2503 = vmatpush.msra.mxu0 %v1257
    %2504 = vmatpush.msra.mxu0 %v1256
    %2505 = vmatpush.msra.mxu0 %v1255
    %2506 = vmatpush.msra.mxu0 %v1254
    %2507 = vmatmul.f32.gmra.mxu0 %v2463
    %v2508 = vpop.f32.mrf.mxu0
    %v2509 = vadd.f32 %v1258, %v2508
    %2510 = vmatmul.f32.gmra.mxu0 %v2466
    %v2511 = vpop.f32.mrf.mxu0
    %v2512 = vadd.f32 %v1258, %v2511
    %2513 = vdwg.mxu0
    %v2515 = vsel %vm142, %v2486, 0
    %v2518 = vsel %vm142, %v2489, 0
    %2520 = vmatpush.xpose.msra.mxu0 0.0
    %2521 = vmatpush.xpose.msra.mxu0 0.0
    %2522 = vmatpush.xpose.msra.mxu0 0.0
    %2523 = vmatpush.xpose.msra.mxu0 0.0
    %2524 = vmatpush.xpose.msra.mxu0 0.0
    %2525 = vmatpush.xpose.msra.mxu0 0.0
    %2526 = vmatpush.xpose.msra.mxu0 0.0
    %2527 = vmatpush.xpose.msra.mxu0 0.0
    %2528 = vmatpush.xpose.msra.mxu0 0.0
    %2529 = vmatpush.xpose.msra.mxu0 0.0
    %2530 = vmatpush.xpose.msra.mxu0 0.0
    %2531 = vmatpush.xpose.msra.mxu0 0.0
    %2532 = vmatpush.xpose.msra.mxu0 0.0
    %2533 = vmatpush.xpose.msra.mxu0 0.0
    %2534 = vmatpush.xpose.msra.mxu0 %v2518
    %2535 = vmatpush.xpose.msra.mxu0 %v2515
    %2536 = vmatmul.f32.gmra.mxu0 %v1283
    %v2537 = vpop.f32.mrf.mxu0
    %v2538 = vadd.f32 0.0, %v2537
    %2539 = vdwg.mxu0
    %v2540 = vsel %vm1311, %v2538, -inf
    %2541 = vmax.xlane.f32.xlu0 %v2540
    %v2542 = vpop.xlane.xlu0 %2541
    %v2543 = vsub.f32 %v2538, %v2542
    %v2544 = vmul.f32 %v2543, 1.442695
    %v2545 = vpow.pop %v2544
    %v2546 = vsel %vm1311, %v2545, 0.0
    %2547 = vadd.xlane.f32.xlu0 %v2546
    %v2548 = vpop.xlane.xlu0 %2547
    %v2549 = vrcp.pop %v2548
    %v2550 = vmul.f32 %v2545, %v2549
    %v2552 = vsel %vm178, %v2550, 0
    %2554 = vmatpush.msra.mxu0 0.0
    %2555 = vmatpush.msra.mxu0 0.0
    %2556 = vmatpush.msra.mxu0 0.0
    %2557 = vmatpush.msra.mxu0 0.0
    %2558 = vmatpush.msra.mxu0 0.0
    %2559 = vmatpush.msra.mxu0 0.0
    %2560 = vmatpush.msra.mxu0 0.0
    %2561 = vmatpush.msra.mxu0 0.0
    %2562 = vmatpush.msra.mxu0 0.0
    %2563 = vmatpush.msra.mxu0 0.0
    %2564 = vmatpush.msra.mxu0 0.0
    %2565 = vmatpush.msra.mxu0 0.0
    %2566 = vmatpush.msra.mxu0 0.0
    %2567 = vmatpush.msra.mxu0 0.0
    %2568 = vmatpush.msra.mxu0 %v2512
    %2569 = vmatpush.msra.mxu0 %v2509
    %2570 = vmatmul.f32.gmra.mxu0 %v2552
    %v2571 = vpop.f32.mrf.mxu0
    %v2572 = vadd.f32 0.0, %v2571
    %2573 = vdwg.mxu0
    %2574 = vrot.lane.b32.xlu0 %v2486, 120
    %v2575 = vpop.permute.xlu0 %2574
    %2576 = vrot.lane.b32.xlu0 %v2489, 120
    %v2577 = vpop.permute.xlu0 %2576
    %v2578 = vsel %vm142, %v2575, 0
    %v2580 = vsel %vm142, %v2577, 0
    %2582 = vmatpush.xpose.msra.mxu0 0.0
    %2583 = vmatpush.xpose.msra.mxu0 0.0
    %2584 = vmatpush.xpose.msra.mxu0 0.0
    %2585 = vmatpush.xpose.msra.mxu0 0.0
    %2586 = vmatpush.xpose.msra.mxu0 0.0
    %2587 = vmatpush.xpose.msra.mxu0 0.0
    %2588 = vmatpush.xpose.msra.mxu0 0.0
    %2589 = vmatpush.xpose.msra.mxu0 0.0
    %2590 = vmatpush.xpose.msra.mxu0 0.0
    %2591 = vmatpush.xpose.msra.mxu0 0.0
    %2592 = vmatpush.xpose.msra.mxu0 0.0
    %2593 = vmatpush.xpose.msra.mxu0 0.0
    %2594 = vmatpush.xpose.msra.mxu0 0.0
    %2595 = vmatpush.xpose.msra.mxu0 0.0
    %2596 = vmatpush.xpose.msra.mxu0 %v2580
    %2597 = vmatpush.xpose.msra.mxu0 %v2578
    %2598 = vmatmul.f32.gmra.mxu0 %v1352
    %v2599 = vpop.f32.mrf.mxu0
    %v2600 = vadd.f32 0.0, %v2599
    %2601 = vdwg.mxu0
    %v2602 = vsel %vm1311, %v2600, -inf
    %2603 = vmax.xlane.f32.xlu0 %v2602
    %v2604 = vpop.xlane.xlu0 %2603
    %v2605 = vsub.f32 %v2600, %v2604
    %v2606 = vmul.f32 %v2605, 1.442695
    %v2607 = vpow.pop %v2606
    %v2608 = vsel %vm1311, %v2607, 0.0
    %2609 = vadd.xlane.f32.xlu0 %v2608
    %v2610 = vpop.xlane.xlu0 %2609
    %v2611 = vrcp.pop %v2610
    %v2612 = vmul.f32 %v2607, %v2611
    %2615 = vrot.lane.b32.xlu0 %v2509, 120
    %v2616 = vpop.permute.xlu0 %2615
    %2617 = vrot.lane.b32.xlu0 %v2512, 120
    %v2618 = vpop.permute.xlu0 %2617
    %v2622 = vsel %vm178, %v2612, 0
    %2624 = vmatpush.msra.mxu0 0.0
    %2625 = vmatpush.msra.mxu0 0.0
    %2626 = vmatpush.msra.mxu0 0.0
    %2627 = vmatpush.msra.mxu0 0.0
    %2628 = vmatpush.msra.mxu0 0.0
    %2629 = vmatpush.msra.mxu0 0.0
    %2630 = vmatpush.msra.mxu0 0.0
    %2631 = vmatpush.msra.mxu0 0.0
    %2632 = vmatpush.msra.mxu0 0.0
    %2633 = vmatpush.msra.mxu0 0.0
    %2634 = vmatpush.msra.mxu0 0.0
    %2635 = vmatpush.msra.mxu0 0.0
    %2636 = vmatpush.msra.mxu0 0.0
    %2637 = vmatpush.msra.mxu0 0.0
    %2638 = vmatpush.msra.mxu0 %v2618
    %2639 = vmatpush.msra.mxu0 %v2616
    %2640 = vmatmul.f32.gmra.mxu0 %v2622
    %v2641 = vpop.f32.mrf.mxu0
    %v2642 = vadd.f32 0.0, %v2641
    %2643 = vdwg.mxu0
    %2644 = vrot.lane.b32.xlu0 %v2486, 112
    %v2645 = vpop.permute.xlu0 %2644
    %2646 = vrot.lane.b32.xlu0 %v2489, 112
    %v2647 = vpop.permute.xlu0 %2646
    %v2648 = vsel %vm142, %v2645, 0
    %v2650 = vsel %vm142, %v2647, 0
    %2652 = vmatpush.xpose.msra.mxu0 0.0
    %2653 = vmatpush.xpose.msra.mxu0 0.0
    %2654 = vmatpush.xpose.msra.mxu0 0.0
    %2655 = vmatpush.xpose.msra.mxu0 0.0
    %2656 = vmatpush.xpose.msra.mxu0 0.0
    %2657 = vmatpush.xpose.msra.mxu0 0.0
    %2658 = vmatpush.xpose.msra.mxu0 0.0
    %2659 = vmatpush.xpose.msra.mxu0 0.0
    %2660 = vmatpush.xpose.msra.mxu0 0.0
    %2661 = vmatpush.xpose.msra.mxu0 0.0
    %2662 = vmatpush.xpose.msra.mxu0 0.0
    %2663 = vmatpush.xpose.msra.mxu0 0.0
    %2664 = vmatpush.xpose.msra.mxu0 0.0
    %2665 = vmatpush.xpose.msra.mxu0 0.0
    %2666 = vmatpush.xpose.msra.mxu0 %v2650
    %2667 = vmatpush.xpose.msra.mxu0 %v2648
    %2668 = vmatmul.f32.gmra.mxu0 %v1426
    %v2669 = vpop.f32.mrf.mxu0
    %v2670 = vadd.f32 0.0, %v2669
    %2671 = vdwg.mxu0
    %v2672 = vsel %vm1311, %v2670, -inf
    %2673 = vmax.xlane.f32.xlu0 %v2672
    %v2674 = vpop.xlane.xlu0 %2673
    %v2675 = vsub.f32 %v2670, %v2674
    %v2676 = vmul.f32 %v2675, 1.442695
    %v2677 = vpow.pop %v2676
    %v2678 = vsel %vm1311, %v2677, 0.0
    %2679 = vadd.xlane.f32.xlu0 %v2678
    %v2680 = vpop.xlane.xlu0 %2679
    %v2681 = vrcp.pop %v2680
    %v2682 = vmul.f32 %v2677, %v2681
    %2683 = vrot.lane.b32.xlu0 %v2509, 112
    %v2684 = vpop.permute.xlu0 %2683
    %2685 = vrot.lane.b32.xlu0 %v2512, 112
    %v2686 = vpop.permute.xlu0 %2685
    %v2690 = vsel %vm178, %v2682, 0
    %2692 = vmatpush.msra.mxu0 0.0
    %2693 = vmatpush.msra.mxu0 0.0
    %2694 = vmatpush.msra.mxu0 0.0
    %2695 = vmatpush.msra.mxu0 0.0
    %2696 = vmatpush.msra.mxu0 0.0
    %2697 = vmatpush.msra.mxu0 0.0
    %2698 = vmatpush.msra.mxu0 0.0
    %2699 = vmatpush.msra.mxu0 0.0
    %2700 = vmatpush.msra.mxu0 0.0
    %2701 = vmatpush.msra.mxu0 0.0
    %2702 = vmatpush.msra.mxu0 0.0
    %2703 = vmatpush.msra.mxu0 0.0
    %2704 = vmatpush.msra.mxu0 0.0
    %2705 = vmatpush.msra.mxu0 0.0
    %2706 = vmatpush.msra.mxu0 %v2686
    %2707 = vmatpush.msra.mxu0 %v2684
    %2708 = vmatmul.f32.gmra.mxu0 %v2690
    %v2709 = vpop.f32.mrf.mxu0
    %v2710 = vadd.f32 0.0, %v2709
    %2711 = vdwg.mxu0
    %2712 = vrot.lane.b32.xlu0 %v2486, 104
    %v2713 = vpop.permute.xlu0 %2712
    %2714 = vrot.lane.b32.xlu0 %v2489, 104
    %v2715 = vpop.permute.xlu0 %2714
    %v2716 = vsel %vm142, %v2713, 0
    %v2718 = vsel %vm142, %v2715, 0
    %2720 = vmatpush.xpose.msra.mxu0 0.0
    %2721 = vmatpush.xpose.msra.mxu0 0.0
    %2722 = vmatpush.xpose.msra.mxu0 0.0
    %2723 = vmatpush.xpose.msra.mxu0 0.0
    %2724 = vmatpush.xpose.msra.mxu0 0.0
    %2725 = vmatpush.xpose.msra.mxu0 0.0
    %2726 = vmatpush.xpose.msra.mxu0 0.0
    %2727 = vmatpush.xpose.msra.mxu0 0.0
    %2728 = vmatpush.xpose.msra.mxu0 0.0
    %2729 = vmatpush.xpose.msra.mxu0 0.0
    %2730 = vmatpush.xpose.msra.mxu0 0.0
    %2731 = vmatpush.xpose.msra.mxu0 0.0
    %2732 = vmatpush.xpose.msra.mxu0 0.0
    %2733 = vmatpush.xpose.msra.mxu0 0.0
    %2734 = vmatpush.xpose.msra.mxu0 %v2718
    %2735 = vmatpush.xpose.msra.mxu0 %v2716
    %2736 = vmatmul.f32.gmra.mxu0 %v1498
    %v2737 = vpop.f32.mrf.mxu0
    %v2738 = vadd.f32 0.0, %v2737
    %2739 = vdwg.mxu0
    %v2740 = vsel %vm1311, %v2738, -inf
    %2741 = vmax.xlane.f32.xlu0 %v2740
    %v2742 = vpop.xlane.xlu0 %2741
    %v2743 = vsub.f32 %v2738, %v2742
    %v2744 = vmul.f32 %v2743, 1.442695
    %v2745 = vpow.pop %v2744
    %v2746 = vsel %vm1311, %v2745, 0.0
    %2747 = vadd.xlane.f32.xlu0 %v2746
    %v2748 = vpop.xlane.xlu0 %2747
    %v2749 = vrcp.pop %v2748
    %v2750 = vmul.f32 %v2745, %v2749
    %2751 = vrot.lane.b32.xlu0 %v2509, 104
    %v2752 = vpop.permute.xlu0 %2751
    %2753 = vrot.lane.b32.xlu0 %v2512, 104
    %v2754 = vpop.permute.xlu0 %2753
    %v2758 = vsel %vm178, %v2750, 0
    %2760 = vmatpush.msra.mxu0 0.0
    %2761 = vmatpush.msra.mxu0 0.0
    %2762 = vmatpush.msra.mxu0 0.0
    %2763 = vmatpush.msra.mxu0 0.0
    %2764 = vmatpush.msra.mxu0 0.0
    %2765 = vmatpush.msra.mxu0 0.0
    %2766 = vmatpush.msra.mxu0 0.0
    %2767 = vmatpush.msra.mxu0 0.0
    %2768 = vmatpush.msra.mxu0 0.0
    %2769 = vmatpush.msra.mxu0 0.0
    %2770 = vmatpush.msra.mxu0 0.0
    %2771 = vmatpush.msra.mxu0 0.0
    %2772 = vmatpush.msra.mxu0 0.0
    %2773 = vmatpush.msra.mxu0 0.0
    %2774 = vmatpush.msra.mxu0 %v2754
    %2775 = vmatpush.msra.mxu0 %v2752
    %2776 = vmatmul.f32.gmra.mxu0 %v2758
    %v2777 = vpop.f32.mrf.mxu0
    %v2778 = vadd.f32 0.0, %v2777
    %2779 = vdwg.mxu0
    %2781 = vrot.lane.b32.xlu0 %v2642, 8
    %v2782 = vpop.permute.xlu0 %2781
    %2785 = vrot.lane.b32.xlu0 %v2710, 16
    %v2786 = vpop.permute.xlu0 %2785
    %2789 = vrot.lane.b32.xlu0 %v2778, 24
    %v2790 = vpop.permute.xlu0 %2789
    %v2792 = vsel %vm142, %v2572, %v2782
    %v2793 = vsel %vm178, %v2792, %v2786
    %v2794 = vsel %vm548, %v2793, %v2790
    %v2796 = vsel %vm54, %v2794, 0
    %2798 = vmatpush.msra.mxu0 0.0
    %2799 = vmatpush.msra.mxu0 0.0
    %2800 = vmatpush.msra.mxu0 0.0
    %2801 = vmatpush.msra.mxu0 0.0
    %2802 = vmatpush.msra.mxu0 0.0
    %2803 = vmatpush.msra.mxu0 0.0
    %2804 = vmatpush.msra.mxu0 0.0
    %2805 = vmatpush.msra.mxu0 0.0
    %2806 = vmatpush.msra.mxu0 0.0
    %2807 = vmatpush.msra.mxu0 0.0
    %2808 = vmatpush.msra.mxu0 0.0
    %2809 = vmatpush.msra.mxu0 0.0
    %2810 = vmatpush.msra.mxu0 %v1583
    %2811 = vmatpush.msra.mxu0 %v1582
    %2812 = vmatpush.msra.mxu0 %v1581
    %2813 = vmatpush.msra.mxu0 %v1580
    %2814 = vmatmul.f32.gmra.mxu0 %v2796
    %v2815 = vpop.f32.mrf.mxu0
    %v2816 = vadd.f32 %v1584, %v2815
    %2817 = vdwg.mxu0
    %v2818 = vadd.f32 %v1188, %v2816
    %v2819 = vsel %vm1162, %v2818, 0.0
    %2820 = vadd.xlane.f32.xlu0 %v2819
    %v2821 = vpop.xlane.xlu0 %2820
    %v2822 = vmul.f32 %v2821, %v600
    %v2823 = vsub.f32 %v2818, %v2822
    %v2824 = vmul.f32 %v2823, %v2823
    %v2825 = vsel %vm1162, %v2824, 0.0
    %2826 = vadd.xlane.f32.xlu0 %v2825
    %v2827 = vpop.xlane.xlu0 %2826
    %v2828 = vmul.f32 %v2827, %v600
    %v2829 = vadd.f32 %v2828, 1e-05
    %v2830 = vrsqrt.pop %v2829
    %v2831 = vmul.f32 %v2830, %v2829
    %v2832 = vmul.f32 %v2831, %v2830
    %v2833 = vmul.f32 0.5, %v2832
    %v2834 = vsub.f32 1.5, %v2833
    %v2835 = vmul.f32 %v2830, %v2834
    %vm2836 = vweird.f32 %v2829
    %vm2837 = vweird.f32 %v2830
    %vm2838 = vmor %vm2836, %vm2837
    %v2839 = vsel %vm2838, %v2830, %v2835
    %v2840 = vmul.f32 %v2823, %v2839
    %v2841 = vmul.f32 %v2840, %v1631
    %v2842 = vadd.f32 %v2841, %v1633
    %v2844 = vsel %vm54, %v2842, 0
    %2846 = vmatpush.msra.mxu0 0.0
    %2847 = vmatpush.msra.mxu0 0.0
    %2848 = vmatpush.msra.mxu0 0.0
    %2849 = vmatpush.msra.mxu0 0.0
    %2850 = vmatpush.msra.mxu0 0.0
    %2851 = vmatpush.msra.mxu0 0.0
    %2852 = vmatpush.msra.mxu0 0.0
    %2853 = vmatpush.msra.mxu0 0.0
    %2854 = vmatpush.msra.mxu0 0.0
    %2855 = vmatpush.msra.mxu0 0.0
    %2856 = vmatpush.msra.mxu0 0.0
    %2857 = vmatpush.msra.mxu0 0.0
    %2858 = vmatpush.msra.mxu0 %v1639
    %2859 = vmatpush.msra.mxu0 %v1638
    %2860 = vmatpush.msra.mxu0 %v1637
    %2861 = vmatpush.msra.mxu0 %v1636
    %2862 = vmatmul.f32.gmra.mxu0 %v2844
    %v2863 = vpop.f32.mrf.mxu0
    %v2864 = vadd.f32 %v1640, %v2863
    %2865 = vdwg.mxu0
    %v2866 = vmax.f32 %v2864, 0.0
    %v2868 = vsel %vm690, %v2866, 0
    %2870 = vmatpush.msra.mxu0 0.0
    %2871 = vmatpush.msra.mxu0 0.0
    %2872 = vmatpush.msra.mxu0 0.0
    %2873 = vmatpush.msra.mxu0 0.0
    %2874 = vmatpush.msra.mxu0 0.0
    %2875 = vmatpush.msra.mxu0 0.0
    %2876 = vmatpush.msra.mxu0 0.0
    %2877 = vmatpush.msra.mxu0 0.0
    %2878 = vmatpush.msra.mxu0 %v1673
    %2879 = vmatpush.msra.mxu0 %v1672
    %2880 = vmatpush.msra.mxu0 %v1671
    %2881 = vmatpush.msra.mxu0 %v1670
    %2882 = vmatpush.msra.mxu0 %v1669
    %2883 = vmatpush.msra.mxu0 %v1668
    %2884 = vmatpush.msra.mxu0 %v1667
    %2885 = vmatpush.msra.mxu0 %v1666
    %2886 = vmatmul.f32.gmra.mxu0 %v2868
    %v2887 = vpop.f32.mrf.mxu0
    %v2888 = vadd.f32 %v1674, %v2887
    %2889 = vdwg.mxu0
    %v2890 = vadd.f32 %v2842, %v2888
    %v2891 = vsel %vm1162, %v2890, 0.0
    %2892 = vadd.xlane.f32.xlu0 %v2891
    %v2893 = vpop.xlane.xlu0 %2892
    %v2894 = vmul.f32 %v2893, %v600
    %v2895 = vsub.f32 %v2890, %v2894
    %v2896 = vmul.f32 %v2895, %v2895
    %v2897 = vsel %vm1162, %v2896, 0.0
    %2898 = vadd.xlane.f32.xlu0 %v2897
    %v2899 = vpop.xlane.xlu0 %2898
    %v2900 = vmul.f32 %v2899, %v600
    %v2901 = vadd.f32 %v2900, 1e-05
    %v2902 = vrsqrt.pop %v2901
    %v2903 = vmul.f32 %v2902, %v2901
    %v2904 = vmul.f32 %v2903, %v2902
    %v2905 = vmul.f32 0.5, %v2904
    %v2906 = vsub.f32 1.5, %v2905
    %v2907 = vmul.f32 %v2902, %v2906
    %vm2908 = vweird.f32 %v2901
    %vm2909 = vweird.f32 %v2902
    %vm2910 = vmor %vm2908, %vm2909
    %v2911 = vsel %vm2910, %v2902, %v2907
    %v2912 = vmul.f32 %v2895, %v2911
    %v2913 = vmul.f32 %v2912, %v1721
    %v2914 = vadd.f32 %v2913, %v1723
    %v2915 = vsel %vm1162, %v2914, 0.0
    %2916 = vadd.xlane.f32.xlu0 %v2915
    %v2917 = vpop.xlane.xlu0 %2916
    %v2918 = vmul.f32 %v2917, %v600
    %v2919 = vsub.f32 %v2914, %v2918
    %v2920 = vmul.f32 %v2919, %v2919
    %v2921 = vsel %vm1162, %v2920, 0.0
    %2922 = vadd.xlane.f32.xlu0 %v2921
    %v2923 = vpop.xlane.xlu0 %2922
    %v2924 = vmul.f32 %v2923, %v600
    %v2925 = vadd.f32 %v2924, 1e-05
    %v2926 = vrsqrt.pop %v2925
    %v2927 = vmul.f32 %v2926, %v2925
    %v2928 = vmul.f32 %v2927, %v2926
    %v2929 = vmul.f32 0.5, %v2928
    %v2930 = vsub.f32 1.5, %v2929
    %v2931 = vmul.f32 %v2926, %v2930
    %vm2932 = vweird.f32 %v2925
    %vm2933 = vweird.f32 %v2926
    %vm2934 = vmor %vm2932, %vm2933
    %v2935 = vsel %vm2934, %v2926, %v2931
    %v2936 = vmul.f32 %v2919, %v2935
    %v2937 = vmul.f32 %v2936, %v1747
    %v2938 = vadd.f32 %v2937, %v1749
    %v2940 = vsel %vm54, %v2938, 0
    %2942 = vmatpush.xpose.msra.mxu0 0.0
    %2943 = vmatpush.xpose.msra.mxu0 0.0
    %2944 = vmatpush.xpose.msra.mxu0 0.0
    %2945 = vmatpush.xpose.msra.mxu0 0.0
    %2946 = vmatpush.xpose.msra.mxu0 0.0
    %2947 = vmatpush.xpose.msra.mxu0 0.0
    %2948 = vmatpush.xpose.msra.mxu0 0.0
    %2949 = vmatpush.xpose.msra.mxu0 0.0
    %2950 = vmatpush.xpose.msra.mxu0 0.0
    %2951 = vmatpush.xpose.msra.mxu0 0.0
    %2952 = vmatpush.xpose.msra.mxu0 0.0
    %2953 = vmatpush.xpose.msra.mxu0 0.0
    %2954 = vmatpush.xpose.msra.mxu0 0.0
    %2955 = vmatpush.xpose.msra.mxu0 0.0
    %2956 = vmatpush.xpose.msra.mxu0 0.0
    %2957 = vmatpush.xpose.msra.mxu0 %v2940
    %2958 = vmatmul.f32.gmra.mxu0 %v1760
    %v2959 = vpop.f32.mrf.mxu0
    %v2960 = vadd.f32 %v1757, %v2959
    %2961 = vdwg.mxu0
    %v2963 = vrot.slane %v2960, 7
    %vm2965 = vcmask 1040384
    %v2966 = vsel %vm2965, %v1783, %v2963
    %vm2967 = vcmask 25600
    %2968 = vst.msk [vmem:[#allocation3] sm:$0x3] %vm2967, %v2966
    // Predicated region
    $region38: #{trans_dqn_forward.1} parent=1 // pred_check
      _
    $region39: #{trans_dqn_forward.1} parent=1 // pred_check_branch
      %2970 = sbr.rel (0) target = $region41
    $region40: #{trans_dqn_forward.1} parent=1 // pred_region
      %2972 = vsyncadd [#allocation4], 0
      %s2974 = sshll.u32 [#allocation3], 4
      %s2975 = int_to_ptr.vmem [resolvable:$true] %s2974
      %s2976 = sshll.u32 %s9, 4
      %s2977 = int_to_ptr.hbm [resolvable:$true] %s2976
      %2979 = dma.vmem_to_hbm [thread:$0]  %s2975, 32, %s2977, [#allocation4]
    $region41: #{trans_dqn_forward.1} parent=1 // pred_fallthru
      _
    // Predicated region
    $region42: #{trans_dqn_forward.1} parent=1 // pred_check
      _
    $region43: #{trans_dqn_forward.1} parent=1 // pred_check_branch
      %2981 = sbr.rel (0) target = $region45
    $region44: #{trans_dqn_forward.1} parent=1 // pred_region
      %2983 = dma.done [#allocation4], 32
    $region45: #{trans_dqn_forward.1} parent=1 // pred_fallthru
      _
    %2984 = vsyncpa [#allocation4], 1

</llo_original>
